<compile_context>
chip_gen: v7x
topology: tpu7x:2x2x1
jax: 0.10.0
libtpu: 0.0.40
codegen_flags: <defaults>
</compile_context>

<pallas_src>
import functools

import jax
import jax.numpy as jnp
from jax.experimental import pallas as pl
from jax.experimental.pallas import tpu as pltpu


# --------------------------------------------------------------------------
# HardQuantizeConv weight quantization (value path): integer codes + scale.
# --------------------------------------------------------------------------
def quantize_weight_codes(w_oihw, num_bits, clip_val=2.0):
    """Returns (centered_codes, sf) with quantized weight == (sf/nq)*centered."""
    nb = 2.0 ** num_bits - 1.0
    gamma = nb / 2.0 ** (num_bits - 1)
    sf = gamma * jnp.mean(jnp.abs(w_oihw), axis=(1, 2, 3), keepdims=True)  # (O,1,1,1)
    half = clip_val / 2.0
    nq = nb / clip_val
    scaled = w_oihw / sf
    clipped = jnp.clip(scaled, -half, half)
    codes = jnp.round((clipped + half) * nq)          # integers 0..2^b-1
    centered = codes - nq * half                      # half-integers, |.| <= nb/2
    return centered, sf.reshape(-1)


# --------------------------------------------------------------------------
# Pallas kernel: whole bottleneck fused, single invocation.
# --------------------------------------------------------------------------
def _bottleneck_kernel(s_ref, x_ref, w1_ref, w2_ref, w3_ref,
                       b11_ref, a1_ref, b12_ref, al1_ref, g1_ref, bt1_ref,
                       b21_ref, a2_ref, b22_ref, al2_ref, g2_ref, bt2_ref,
                       b31_ref, a3_ref, b32_ref, al3_ref, g3_ref, bt3_ref,
                       b01_ref, a0_ref, b02_ref,
                       o_ref, *, n_bit, img_h, img_w):
    thd_pos = float(2 ** n_bit - 1)
    bn_eps = 1e-5
    nh = x_ref.shape[0]                   # N*H packed rows (true pixels only)
    inv_count = 1.0 / float(nh * img_w)   # BN reduction count = N*H*W

    def prelu(h, a):
        return jnp.where(h > 0, h, a * h)

    def quant_codes(h, inv_s):
        # LSQ forward (all_positive): round(clip(h/s, 0, thd_pos)).  Emit the
        # integer codes in bf16 (exact) so conv matmuls run on bf16 MXU
        # operands; the step size s is folded into the post-matmul/BN scale.
        return jnp.clip(jnp.round(h * inv_s), 0.0, thd_pos).astype(jnp.bfloat16)

    def gather_mat(c):
        # (W*c, c) 0/1 matrix summing packed (x, channel) lanes per channel.
        li = jax.lax.broadcasted_iota(jnp.int32, (img_w * c, c), 0)
        ci = jax.lax.broadcasted_iota(jnp.int32, (img_w * c, c), 1)
        return (li % c == ci).astype(jnp.float32)

    def expand_mat(c):
        # (c, W*c) 0/1 matrix broadcasting per-channel values to packed lanes.
        ci = jax.lax.broadcasted_iota(jnp.int32, (c, img_w * c), 0)
        li = jax.lax.broadcasted_iota(jnp.int32, (c, img_w * c), 1)
        return (li % c == ci).astype(jnp.float32)

    def bn_fold(acc, alpha, gamma, beta, g_mat, e_mat):
        # acc = raw integer-code matmul accumulator; true conv output is
        # alpha*acc per out-channel.  Training-mode BN with one-pass batch
        # stats, folded with alpha into a single scale/shift FMA on the slab.
        sum_l = jnp.sum(acc, axis=0, keepdims=True)
        ssq_l = jnp.sum(acc * acc, axis=0, keepdims=True)
        sum_c = jnp.dot(sum_l, g_mat, preferred_element_type=jnp.float32)
        ssq_c = jnp.dot(ssq_l, g_mat, preferred_element_type=jnp.float32)
        mean_c = sum_c * inv_count
        var_c = ssq_c * inv_count - mean_c * mean_c
        scale_c = alpha * gamma * jax.lax.rsqrt(alpha * alpha * var_c + bn_eps)
        shift_c = beta - mean_c * scale_c
        scale_p = jnp.dot(scale_c, e_mat, preferred_element_type=jnp.float32)
        shift_p = jnp.dot(shift_c, e_mat, preferred_element_type=jnp.float32)
        return acc * scale_p + shift_p

    c_mid = g1_ref.shape[-1]     # width
    c_out = g3_ref.shape[-1]     # planes * expansion
    g_w = gather_mat(c_mid)
    e_w = expand_mat(c_mid)
    g_e = gather_mat(c_out)
    e_e = expand_mat(c_out)

    x = x_ref[...]

    # ---- stage 1: bias11 -> prelu1 -> bias12 -> quan1 -> conv1 (1x1) -> bn1
    h = prelu(x + b11_ref[...], a1_ref[...]) + b12_ref[...]
    c1 = quant_codes(h, s_ref[0])
    acc1 = jnp.dot(c1, w1_ref[...], preferred_element_type=jnp.float32)
    y1 = bn_fold(acc1, al1_ref[...], g1_ref[...], bt1_ref[...], g_w, e_w)

    # ---- stage 2: bias21 -> prelu2 -> bias22 -> quan2 -> conv2 (3x3) -> bn2
    h = prelu(y1 + b21_ref[...], a2_ref[...]) + b22_ref[...]
    c2 = quant_codes(h, s_ref[1])
    zrow = jnp.zeros((1, c2.shape[1]), c2.dtype)
    up = jnp.concatenate([zrow, c2[:nh - 1, :]], axis=0)   # row r holds codes of row r-1
    dn = jnp.concatenate([c2[1:, :], zrow], axis=0)        # row r holds codes of row r+1
    yy = jax.lax.broadcasted_iota(jnp.int32, (nh, 1), 0) % img_h
    up = jnp.where(yy > 0, up, jnp.zeros_like(up))             # zero pad above each image
    dn = jnp.where(yy < img_h - 1, dn, jnp.zeros_like(dn))     # zero pad below each image
    big = jnp.concatenate([up, c2, dn], axis=1)                # kh im2col; kw lives in w2
    acc2 = jnp.dot(big, w2_ref[...], preferred_element_type=jnp.float32)
    y2 = bn_fold(acc2, al2_ref[...], g2_ref[...], bt2_ref[...], g_w, e_w)

    # ---- stage 3: bias31 -> prelu3 -> bias32 -> quan3 -> conv3 (1x1) -> bn3
    h = prelu(y2 + b31_ref[...], a3_ref[...]) + b32_ref[...]
    c3 = quant_codes(h, s_ref[2])
    acc3 = jnp.dot(c3, w3_ref[...], preferred_element_type=jnp.float32)
    y3 = bn_fold(acc3, al3_ref[...], g3_ref[...], bt3_ref[...], g_e, e_e)

    # ---- residual (downsample=None) + bias01 -> prelu0 -> bias02
    out = y3 + x
    out = prelu(out + b01_ref[...], a0_ref[...]) + b02_ref[...]
    o_ref[...] = out


# --------------------------------------------------------------------------
# Wrapper: parameter / layout glue in plain JAX.
# --------------------------------------------------------------------------
def bottleneck_lsq_forward(x, params, n_bit):
    N, H, W, Cin = x.shape
    w1, w2, w3 = params["w1"], params["w2"], params["w3"]
    width = w1.shape[0]
    Cexp = w3.shape[0]
    assert Cin == Cexp, "downsample=None requires inplanes == planes*expansion"
    NH = N * H
    nq = (2.0 ** n_bit - 1.0) / 2.0      # = (2^b - 1) / clip_val with clip_val = 2

    # weight integer codes (exact in bf16) + per-out-channel scales
    cc1, sf1 = quantize_weight_codes(w1, n_bit)
    cc2, sf2 = quantize_weight_codes(w2, n_bit)
    cc3, sf3 = quantize_weight_codes(w3, n_bit)
    w1cc = cc1.reshape(width, Cin).T                 # (Cin, width)
    w2cc = jnp.transpose(cc2, (2, 3, 1, 0))          # (kh, kw, ci, co)
    w3cc = cc3.reshape(Cexp, width).T                # (width, Cexp)

    # packed conv weights: block-diagonal (1x1) / block-tridiagonal (3x3)
    eye_w = jnp.eye(W, dtype=jnp.float32)
    w1bd = jnp.einsum("xy,io->xiyo", eye_w, w1cc).reshape(W * Cin, W * width)
    blocks = []
    for kh in range(3):
        blk = jnp.zeros((W, width, W, width), jnp.float32)
        for kw in range(3):
            s_mat = jnp.eye(W, k=1 - kw, dtype=jnp.float32)   # xin == xout + (kw-1)
            blk = blk + jnp.einsum("xy,io->xiyo", s_mat, w2cc[kh, kw])
        blocks.append(blk.reshape(W * width, W * width))
    w2bd = jnp.concatenate(blocks, axis=0)
    w3bd = jnp.einsum("xy,io->xiyo", eye_w, w3cc).reshape(W * width, W * Cexp)
    w1bd = w1bd.astype(jnp.bfloat16)
    w2bd = w2bd.astype(jnp.bfloat16)
    w3bd = w3bd.astype(jnp.bfloat16)

    # LSQ step sizes (forward value = max(s, eps)); hoisted reciprocals
    s1c = jnp.maximum(params["s1"], 1e-5)
    s2c = jnp.maximum(params["s2"], 1e-5)
    s3c = jnp.maximum(params["s3"], 1e-5)
    inv_s = jnp.stack([1.0 / s1c, 1.0 / s2c, 1.0 / s3c]).astype(jnp.float32)

    # folded post-matmul scales: true conv out = alpha * (code matmul)
    alpha1 = (s1c * sf1 / nq).reshape(1, width).astype(jnp.float32)
    alpha2 = (s2c * sf2 / nq).reshape(1, width).astype(jnp.float32)
    alpha3 = (s3c * sf3 / nq).reshape(1, Cexp).astype(jnp.float32)

    def tile_lanes(v):        # per-channel param -> packed (1, W*C) lane layout
        return jnp.tile(jnp.asarray(v, jnp.float32).reshape(1, -1), (1, W))

    def chan_row(v):          # per-channel param kept as (1, C)
        return jnp.asarray(v, jnp.float32).reshape(1, -1)

    x_packed = x.reshape(NH, W * Cin).astype(jnp.float32)

    kernel = functools.partial(_bottleneck_kernel, n_bit=n_bit, img_h=H, img_w=W)

    out_packed = pl.pallas_call(
        kernel,
        out_shape=jax.ShapeDtypeStruct((NH, W * Cexp), jnp.float32),
        in_specs=[pl.BlockSpec(memory_space=pltpu.MemorySpace.SMEM)]
                 + [pl.BlockSpec(memory_space=pltpu.MemorySpace.VMEM)] * 25,
        out_specs=pl.BlockSpec(memory_space=pltpu.MemorySpace.VMEM),
    )(inv_s, x_packed, w1bd, w2bd, w3bd,
      tile_lanes(params["b11"]), tile_lanes(params["a1"]), tile_lanes(params["b12"]),
      alpha1, chan_row(params["g1"]), chan_row(params["bt1"]),
      tile_lanes(params["b21"]), tile_lanes(params["a2"]), tile_lanes(params["b22"]),
      alpha2, chan_row(params["g2"]), chan_row(params["bt2"]),
      tile_lanes(params["b31"]), tile_lanes(params["a3"]), tile_lanes(params["b32"]),
      alpha3, chan_row(params["g3"]), chan_row(params["bt3"]),
      tile_lanes(params["b01"]), tile_lanes(params["a0"]), tile_lanes(params["b02"]))

    return out_packed.reshape(N, H, W, Cexp)


# --------------------------------------------------------------------------
# Pure-JAX reference (mirrors the PyTorch forward), used for a sanity check.
# --------------------------------------------------------------------------
def reference_forward(x, params, n_bit):
    nb = float(2 ** n_bit - 1)
    nq = nb / 2.0

    def prelu(h, a):
        return jnp.where(h > 0, h, a * h)

    def lsq(h, s):
        ss = jnp.maximum(s, 1e-5)
        return jnp.round(jnp.clip(h / ss, 0.0, nb)) * ss

    def bn(h, g, b):
        m = jnp.mean(h, axis=(0, 1, 2), keepdims=True)
        v = jnp.mean((h - m) ** 2, axis=(0, 1, 2), keepdims=True)
        return (h - m) * jax.lax.rsqrt(v + 1e-5) * g.reshape(1, 1, 1, -1) \
            + b.reshape(1, 1, 1, -1)

    def dequant_weight(w_oihw):
        cc, sf = quantize_weight_codes(w_oihw, n_bit)
        wq = (sf.reshape(-1, 1, 1, 1) / nq) * cc
        return jnp.transpose(wq, (2, 3, 1, 0))       # HWIO

    def conv(h, w_hwio, pad):
        return jax.lax.conv_general_dilated(
            h, w_hwio, (1, 1), ((pad, pad), (pad, pad)),
            dimension_numbers=("NHWC", "HWIO", "NHWC"),
            precision=jax.lax.Precision.HIGHEST)

    p = params
    cv = lambda v: jnp.asarray(v).reshape(1, 1, 1, -1)
    identity = x
    out = prelu(x + cv(p["b11"]), cv(p["a1"])) + cv(p["b12"])
    out = lsq(out, p["s1"])
    out = bn(conv(out, dequant_weight(p["w1"]), 0), p["g1"], p["bt1"])
    out = prelu(out + cv(p["b21"]), cv(p["a2"])) + cv(p["b22"])
    out = lsq(out, p["s2"])
    out = bn(conv(out, dequant_weight(p["w2"]), 1), p["g2"], p["bt2"])
    out = prelu(out + cv(p["b31"]), cv(p["a3"])) + cv(p["b32"])
    out = lsq(out, p["s3"])
    out = bn(conv(out, dequant_weight(p["w3"]), 0), p["g3"], p["bt3"])
    out = out + identity
    out = prelu(out + cv(p["b01"]), cv(p["a0"])) + cv(p["b02"])
    return out


if __name__ == "__main__":
    n_bit = 4
    N, H, W = 2, 16, 16
    planes = 8
    width = planes                     # base_width=64, groups=1
    Cexp = planes * 4                  # expansion = 4
    inplanes = Cexp                    # downsample=None => inplanes == planes*4

    key = jax.random.PRNGKey(0)
    ks = jax.random.split(key, 22)
    x = jax.random.normal(ks[0], (N, H, W, inplanes), jnp.float32)

    def chan(k, c, loc=0.0, scale=0.1):
        return loc + scale * jax.random.normal(k, (c,), jnp.float32)

    # HardQuantizeConv weight init: (rand - 0.5) * 0.001, OIHW
    w1 = (jax.random.uniform(ks[1], (width, inplanes, 1, 1), jnp.float32) - 0.5) * 0.001
    w2 = (jax.random.uniform(ks[2], (width, width, 3, 3), jnp.float32) - 0.5) * 0.001
    w3 = (jax.random.uniform(ks[3], (Cexp, width, 1, 1), jnp.float32) - 0.5) * 0.001

    params = dict(
        w1=w1, w2=w2, w3=w3,
        s1=jnp.float32(1.0), s2=jnp.float32(1.0), s3=jnp.float32(1.0),
        b11=chan(ks[4], inplanes), a1=chan(ks[5], inplanes, 0.25, 0.05), b12=chan(ks[6], inplanes),
        g1=chan(ks[7], width, 1.0, 0.1), bt1=chan(ks[8], width),
        b21=chan(ks[9], width), a2=chan(ks[10], width, 0.25, 0.05), b22=chan(ks[11], width),
        g2=chan(ks[12], width, 1.0, 0.1), bt2=chan(ks[13], width),
        b31=chan(ks[14], width), a3=chan(ks[15], width, 0.25, 0.05), b32=chan(ks[16], width),
        g3=chan(ks[17], Cexp, 1.0, 0.1), bt3=chan(ks[18], Cexp),
        b01=chan(ks[19], Cexp), a0=chan(ks[20], Cexp, 0.25, 0.05), b02=chan(ks[21], Cexp),
    )

    out = bottleneck_lsq_forward(x, params, n_bit)
    out = jax.block_until_ready(out)

    ref = reference_forward(x, params, n_bit)
    assert out.shape == ref.shape == (N, H, W, Cexp)
    assert bool(jnp.all(jnp.isfinite(out)))
    # A few elements may legitimately differ when a value lands on an LSQ
    # rounding boundary under different (but equally valid) accumulation
    # orders; require the overwhelming majority to match tightly and bound the
    # worst-case deviation.
    diff = jnp.abs(out - ref)
    tol = 1e-3 + 1e-3 * jnp.abs(ref)
    frac_bad = float(jnp.mean((diff > tol).astype(jnp.float32)))
    assert frac_bad < 0.02, f"mismatch fraction {frac_bad}"
    assert float(jnp.max(diff)) < 0.5, f"max abs diff {float(jnp.max(diff))}"

    print("KERNEL_OK")
</pallas_src>

<mosaic_0001>
module attributes {stable_mosaic.version = 11 : i64} {
  func.func @_bottleneck_kernel(%arg0: memref<3xf32, #tpu.memory_space<smem>>, %arg1: memref<32x512xf32, #tpu.memory_space<vmem>>, %arg2: memref<512x128xbf16, #tpu.memory_space<vmem>>, %arg3: memref<384x128xbf16, #tpu.memory_space<vmem>>, %arg4: memref<128x512xbf16, #tpu.memory_space<vmem>>, %arg5: memref<1x512xf32, #tpu.memory_space<vmem>>, %arg6: memref<1x512xf32, #tpu.memory_space<vmem>>, %arg7: memref<1x512xf32, #tpu.memory_space<vmem>>, %arg8: memref<1x8xf32, #tpu.memory_space<vmem>>, %arg9: memref<1x8xf32, #tpu.memory_space<vmem>>, %arg10: memref<1x8xf32, #tpu.memory_space<vmem>>, %arg11: memref<1x128xf32, #tpu.memory_space<vmem>>, %arg12: memref<1x128xf32, #tpu.memory_space<vmem>>, %arg13: memref<1x128xf32, #tpu.memory_space<vmem>>, %arg14: memref<1x8xf32, #tpu.memory_space<vmem>>, %arg15: memref<1x8xf32, #tpu.memory_space<vmem>>, %arg16: memref<1x8xf32, #tpu.memory_space<vmem>>, %arg17: memref<1x128xf32, #tpu.memory_space<vmem>>, %arg18: memref<1x128xf32, #tpu.memory_space<vmem>>, %arg19: memref<1x128xf32, #tpu.memory_space<vmem>>, %arg20: memref<1x32xf32, #tpu.memory_space<vmem>>, %arg21: memref<1x32xf32, #tpu.memory_space<vmem>>, %arg22: memref<1x32xf32, #tpu.memory_space<vmem>>, %arg23: memref<1x512xf32, #tpu.memory_space<vmem>>, %arg24: memref<1x512xf32, #tpu.memory_space<vmem>>, %arg25: memref<1x512xf32, #tpu.memory_space<vmem>>, %arg26: memref<32x512xf32, #tpu.memory_space<vmem>>) attributes {dimension_semantics = [], scalar_prefetch = 0 : i64, scratch_operands = 0 : i64, tpu.core_type = #tpu.core_type<tc>} {
    %0 = tpu.iota {dimensions = array<i32: 0>} : vector<128x8xi32>
    %1 = tpu.iota {dimensions = array<i32: 1>} : vector<128x8xi32>
    %c8_i32 = arith.constant 8 : i32
    %c0_i32 = arith.constant 0 : i32
    %2 = arith.cmpi eq, %c8_i32, %c0_i32 : i32
    %c1_i32 = arith.constant 1 : i32
    %3 = arith.select %2, %c1_i32, %c8_i32 : i32
    %4 = vector.broadcast %3 : i32 to vector<128x8xi32>
    %5 = arith.remsi %0, %4 : vector<128x8xi32>
    %c0_i32_0 = arith.constant 0 : i32
    %6 = vector.broadcast %c0_i32_0 : i32 to vector<128x8xi32>
    %7 = arith.cmpi ne, %5, %6 : vector<128x8xi32>
    %c0_i32_1 = arith.constant 0 : i32
    %8 = vector.broadcast %c0_i32_1 : i32 to vector<128x8xi32>
    %9 = arith.cmpi slt, %5, %8 : vector<128x8xi32>
    %c0_i32_2 = arith.constant 0 : i32
    %10 = arith.cmpi slt, %3, %c0_i32_2 : i32
    %11 = vector.broadcast %10 : i1 to vector<128x8xi1>
    %12 = vector.broadcast %11 : vector<128x8xi1> to vector<128x8xi1>
    %13 = arith.xori %9, %12 : vector<128x8xi1>
    %14 = arith.andi %13, %7 : vector<128x8xi1>
    %15 = vector.broadcast %3 : i32 to vector<128x8xi32>
    %16 = arith.addi %5, %15 : vector<128x8xi32>
    %17 = arith.select %14, %16, %5 : vector<128x8xi1>, vector<128x8xi32>
    %18 = arith.cmpi eq, %17, %1 : vector<128x8xi32>
    %19 = arith.extui %18 : vector<128x8xi1> to vector<128x8xi32>
    %20 = arith.sitofp %19 : vector<128x8xi32> to vector<128x8xf32>
    %21 = tpu.iota {dimensions = array<i32: 0>} : vector<8x128xi32>
    %22 = tpu.iota {dimensions = array<i32: 1>} : vector<8x128xi32>
    %c8_i32_3 = arith.constant 8 : i32
    %c0_i32_4 = arith.constant 0 : i32
    %23 = arith.cmpi eq, %c8_i32_3, %c0_i32_4 : i32
    %c1_i32_5 = arith.constant 1 : i32
    %24 = arith.select %23, %c1_i32_5, %c8_i32_3 : i32
    %25 = vector.broadcast %24 : i32 to vector<8x128xi32>
    %26 = arith.remsi %22, %25 : vector<8x128xi32>
    %c0_i32_6 = arith.constant 0 : i32
    %27 = vector.broadcast %c0_i32_6 : i32 to vector<8x128xi32>
    %28 = arith.cmpi ne, %26, %27 : vector<8x128xi32>
    %c0_i32_7 = arith.constant 0 : i32
    %29 = vector.broadcast %c0_i32_7 : i32 to vector<8x128xi32>
    %30 = arith.cmpi slt, %26, %29 : vector<8x128xi32>
    %c0_i32_8 = arith.constant 0 : i32
    %31 = arith.cmpi slt, %24, %c0_i32_8 : i32
    %32 = vector.broadcast %31 : i1 to vector<8x128xi1>
    %33 = vector.broadcast %32 : vector<8x128xi1> to vector<8x128xi1>
    %34 = arith.xori %30, %33 : vector<8x128xi1>
    %35 = arith.andi %34, %28 : vector<8x128xi1>
    %36 = vector.broadcast %24 : i32 to vector<8x128xi32>
    %37 = arith.addi %26, %36 : vector<8x128xi32>
    %38 = arith.select %35, %37, %26 : vector<8x128xi1>, vector<8x128xi32>
    %39 = arith.cmpi eq, %38, %21 : vector<8x128xi32>
    %40 = arith.extui %39 : vector<8x128xi1> to vector<8x128xi32>
    %41 = arith.sitofp %40 : vector<8x128xi32> to vector<8x128xf32>
    %42 = tpu.iota {dimensions = array<i32: 0>} : vector<512x32xi32>
    %43 = tpu.iota {dimensions = array<i32: 1>} : vector<512x32xi32>
    %c32_i32 = arith.constant 32 : i32
    %c0_i32_9 = arith.constant 0 : i32
    %44 = arith.cmpi eq, %c32_i32, %c0_i32_9 : i32
    %c1_i32_10 = arith.constant 1 : i32
    %45 = arith.select %44, %c1_i32_10, %c32_i32 : i32
    %46 = vector.broadcast %45 : i32 to vector<512x32xi32>
    %47 = arith.remsi %42, %46 : vector<512x32xi32>
    %c0_i32_11 = arith.constant 0 : i32
    %48 = vector.broadcast %c0_i32_11 : i32 to vector<512x32xi32>
    %49 = arith.cmpi ne, %47, %48 : vector<512x32xi32>
    %c0_i32_12 = arith.constant 0 : i32
    %50 = vector.broadcast %c0_i32_12 : i32 to vector<512x32xi32>
    %51 = arith.cmpi slt, %47, %50 : vector<512x32xi32>
    %c0_i32_13 = arith.constant 0 : i32
    %52 = arith.cmpi slt, %45, %c0_i32_13 : i32
    %53 = vector.broadcast %52 : i1 to vector<512x32xi1>
    %54 = vector.broadcast %53 : vector<512x32xi1> to vector<512x32xi1>
    %55 = arith.xori %51, %54 : vector<512x32xi1>
    %56 = arith.andi %55, %49 : vector<512x32xi1>
    %57 = vector.broadcast %45 : i32 to vector<512x32xi32>
    %58 = arith.addi %47, %57 : vector<512x32xi32>
    %59 = arith.select %56, %58, %47 : vector<512x32xi1>, vector<512x32xi32>
    %60 = arith.cmpi eq, %59, %43 : vector<512x32xi32>
    %61 = arith.extui %60 : vector<512x32xi1> to vector<512x32xi32>
    %62 = arith.sitofp %61 : vector<512x32xi32> to vector<512x32xf32>
    %63 = tpu.iota {dimensions = array<i32: 0>} : vector<32x512xi32>
    %64 = tpu.iota {dimensions = array<i32: 1>} : vector<32x512xi32>
    %c32_i32_14 = arith.constant 32 : i32
    %c0_i32_15 = arith.constant 0 : i32
    %65 = arith.cmpi eq, %c32_i32_14, %c0_i32_15 : i32
    %c1_i32_16 = arith.constant 1 : i32
    %66 = arith.select %65, %c1_i32_16, %c32_i32_14 : i32
    %67 = vector.broadcast %66 : i32 to vector<32x512xi32>
    %68 = arith.remsi %64, %67 : vector<32x512xi32>
    %c0_i32_17 = arith.constant 0 : i32
    %69 = vector.broadcast %c0_i32_17 : i32 to vector<32x512xi32>
    %70 = arith.cmpi ne, %68, %69 : vector<32x512xi32>
    %c0_i32_18 = arith.constant 0 : i32
    %71 = vector.broadcast %c0_i32_18 : i32 to vector<32x512xi32>
    %72 = arith.cmpi slt, %68, %71 : vector<32x512xi32>
    %c0_i32_19 = arith.constant 0 : i32
    %73 = arith.cmpi slt, %66, %c0_i32_19 : i32
    %74 = vector.broadcast %73 : i1 to vector<32x512xi1>
    %75 = vector.broadcast %74 : vector<32x512xi1> to vector<32x512xi1>
    %76 = arith.xori %72, %75 : vector<32x512xi1>
    %77 = arith.andi %76, %70 : vector<32x512xi1>
    %78 = vector.broadcast %66 : i32 to vector<32x512xi32>
    %79 = arith.addi %68, %78 : vector<32x512xi32>
    %80 = arith.select %77, %79, %68 : vector<32x512xi1>, vector<32x512xi32>
    %81 = arith.cmpi eq, %80, %63 : vector<32x512xi32>
    %82 = arith.extui %81 : vector<32x512xi1> to vector<32x512xi32>
    %83 = arith.sitofp %82 : vector<32x512xi32> to vector<32x512xf32>
    %c0 = arith.constant 0 : index
    %c0_20 = arith.constant 0 : index
    %84 = vector.load %arg1[%c0, %c0_20] : memref<32x512xf32, #tpu.memory_space<vmem>>, vector<32x512xf32>
    %c0_21 = arith.constant 0 : index
    %c0_22 = arith.constant 0 : index
    %85 = vector.load %arg5[%c0_21, %c0_22] : memref<1x512xf32, #tpu.memory_space<vmem>>, vector<1x512xf32>
    %86 = vector.broadcast %85 : vector<1x512xf32> to vector<32x512xf32>
    %87 = arith.addf %84, %86 : vector<32x512xf32>
    %c0_23 = arith.constant 0 : index
    %c0_24 = arith.constant 0 : index
    %88 = vector.load %arg6[%c0_23, %c0_24] : memref<1x512xf32, #tpu.memory_space<vmem>>, vector<1x512xf32>
    %cst = arith.constant 0.000000e+00 : f32
    %89 = vector.broadcast %cst : f32 to vector<32x512xf32>
    %90 = arith.cmpf ogt, %87, %89 : vector<32x512xf32>
    %91 = vector.broadcast %88 : vector<1x512xf32> to vector<32x512xf32>
    %92 = arith.mulf %91, %87 : vector<32x512xf32>
    %93 = arith.select %90, %87, %92 : vector<32x512xi1>, vector<32x512xf32>
    %c0_25 = arith.constant 0 : index
    %c0_26 = arith.constant 0 : index
    %94 = vector.load %arg7[%c0_25, %c0_26] : memref<1x512xf32, #tpu.memory_space<vmem>>, vector<1x512xf32>
    %95 = vector.broadcast %94 : vector<1x512xf32> to vector<32x512xf32>
    %96 = arith.addf %93, %95 : vector<32x512xf32>
    %c0_27 = arith.constant 0 : index
    %97 = memref.load %arg0[%c0_27] : memref<3xf32, #tpu.memory_space<smem>>
    %98 = vector.broadcast %97 : f32 to vector<32x512xf32>
    %99 = arith.mulf %96, %98 : vector<32x512xf32>
    %100 = math.roundeven %99 : vector<32x512xf32>
    %cst_28 = arith.constant 0.000000e+00 : f32
    %cst_29 = arith.constant 1.500000e+01 : f32
    %101 = vector.broadcast %cst_28 : f32 to vector<32x512xf32>
    %102 = arith.maximumf %101, %100 : vector<32x512xf32>
    %103 = vector.broadcast %cst_29 : f32 to vector<32x512xf32>
    %104 = arith.minimumf %103, %102 : vector<32x512xf32>
    %105 = arith.truncf %104 : vector<32x512xf32> to vector<32x512xbf16>
    %c0_30 = arith.constant 0 : index
    %c0_31 = arith.constant 0 : index
    %106 = vector.load %arg2[%c0_30, %c0_31] : memref<512x128xbf16, #tpu.memory_space<vmem>>, vector<512x128xbf16>
    %cst_32 = arith.constant dense<0.000000e+00> : vector<32x128xf32>
    %107 = tpu.matmul %105, %106, %cst_32 {dimension_numbers = #tpu.dot_dimension_numbers<[1], [0], [0], [1], [0, 0, 1, 1], [], []>} : vector<32x512xbf16>, vector<512x128xbf16>, vector<32x128xf32> -> vector<32x128xf32>
    %c0_33 = arith.constant 0 : index
    %c0_34 = arith.constant 0 : index
    %108 = vector.load %arg8[%c0_33, %c0_34] : memref<1x8xf32, #tpu.memory_space<vmem>>, vector<1x8xf32>
    %c0_35 = arith.constant 0 : index
    %c0_36 = arith.constant 0 : index
    %109 = vector.load %arg9[%c0_35, %c0_36] : memref<1x8xf32, #tpu.memory_space<vmem>>, vector<1x8xf32>
    %c0_37 = arith.constant 0 : index
    %c0_38 = arith.constant 0 : index
    %110 = vector.load %arg10[%c0_37, %c0_38] : memref<1x8xf32, #tpu.memory_space<vmem>>, vector<1x8xf32>
    %cst_39 = arith.constant dense<0.000000e+00> : vector<128xf32>
    %111 = vector.multi_reduction <add>, %107, %cst_39 [0] : vector<32x128xf32> to vector<128xf32>
    %112 = vector.shape_cast %111 : vector<128xf32> to vector<1x128xf32>
    %113 = arith.mulf %107, %107 : vector<32x128xf32>
    %cst_40 = arith.constant dense<0.000000e+00> : vector<128xf32>
    %114 = vector.multi_reduction <add>, %113, %cst_40 [0] : vector<32x128xf32> to vector<128xf32>
    %115 = vector.shape_cast %114 : vector<128xf32> to vector<1x128xf32>
    %cst_41 = arith.constant dense<0.000000e+00> : vector<1x8xf32>
    %116 = tpu.matmul %112, %20, %cst_41 {dimension_numbers = #tpu.dot_dimension_numbers<[1], [0], [0], [1], [0, 0, 1, 1], [], []>} : vector<1x128xf32>, vector<128x8xf32>, vector<1x8xf32> -> vector<1x8xf32>
    %cst_42 = arith.constant dense<0.000000e+00> : vector<1x8xf32>
    %117 = tpu.matmul %115, %20, %cst_42 {dimension_numbers = #tpu.dot_dimension_numbers<[1], [0], [0], [1], [0, 0, 1, 1], [], []>} : vector<1x128xf32>, vector<128x8xf32>, vector<1x8xf32> -> vector<1x8xf32>
    %cst_43 = arith.constant 0.001953125 : f32
    %118 = vector.broadcast %cst_43 : f32 to vector<1x8xf32>
    %119 = arith.mulf %116, %118 : vector<1x8xf32>
    %cst_44 = arith.constant 0.001953125 : f32
    %120 = vector.broadcast %cst_44 : f32 to vector<1x8xf32>
    %121 = arith.mulf %117, %120 : vector<1x8xf32>
    %122 = arith.mulf %119, %119 : vector<1x8xf32>
    %123 = arith.subf %121, %122 : vector<1x8xf32>
    %124 = arith.mulf %108, %109 : vector<1x8xf32>
    %125 = arith.mulf %108, %108 : vector<1x8xf32>
    %126 = arith.mulf %125, %123 : vector<1x8xf32>
    %cst_45 = arith.constant 9.99999974E-6 : f32
    %127 = vector.broadcast %cst_45 : f32 to vector<1x8xf32>
    %128 = arith.addf %126, %127 : vector<1x8xf32>
    %129 = math.rsqrt %128 : vector<1x8xf32>
    %130 = arith.mulf %124, %129 : vector<1x8xf32>
    %131 = arith.mulf %119, %130 : vector<1x8xf32>
    %132 = arith.subf %110, %131 : vector<1x8xf32>
    %cst_46 = arith.constant dense<0.000000e+00> : vector<1x128xf32>
    %133 = tpu.matmul %130, %41, %cst_46 {dimension_numbers = #tpu.dot_dimension_numbers<[1], [0], [0], [1], [0, 0, 1, 1], [], []>} : vector<1x8xf32>, vector<8x128xf32>, vector<1x128xf32> -> vector<1x128xf32>
    %cst_47 = arith.constant dense<0.000000e+00> : vector<1x128xf32>
    %134 = tpu.matmul %132, %41, %cst_47 {dimension_numbers = #tpu.dot_dimension_numbers<[1], [0], [0], [1], [0, 0, 1, 1], [], []>} : vector<1x8xf32>, vector<8x128xf32>, vector<1x128xf32> -> vector<1x128xf32>
    %135 = vector.broadcast %133 : vector<1x128xf32> to vector<32x128xf32>
    %136 = arith.mulf %107, %135 : vector<32x128xf32>
    %137 = vector.broadcast %134 : vector<1x128xf32> to vector<32x128xf32>
    %138 = arith.addf %136, %137 : vector<32x128xf32>
    %c0_48 = arith.constant 0 : index
    %c0_49 = arith.constant 0 : index
    %139 = vector.load %arg11[%c0_48, %c0_49] : memref<1x128xf32, #tpu.memory_space<vmem>>, vector<1x128xf32>
    %140 = vector.broadcast %139 : vector<1x128xf32> to vector<32x128xf32>
    %141 = arith.addf %138, %140 : vector<32x128xf32>
    %c0_50 = arith.constant 0 : index
    %c0_51 = arith.constant 0 : index
    %142 = vector.load %arg12[%c0_50, %c0_51] : memref<1x128xf32, #tpu.memory_space<vmem>>, vector<1x128xf32>
    %cst_52 = arith.constant 0.000000e+00 : f32
    %143 = vector.broadcast %cst_52 : f32 to vector<32x128xf32>
    %144 = arith.cmpf ogt, %141, %143 : vector<32x128xf32>
    %145 = vector.broadcast %142 : vector<1x128xf32> to vector<32x128xf32>
    %146 = arith.mulf %145, %141 : vector<32x128xf32>
    %147 = arith.select %144, %141, %146 : vector<32x128xi1>, vector<32x128xf32>
    %c0_53 = arith.constant 0 : index
    %c0_54 = arith.constant 0 : index
    %148 = vector.load %arg13[%c0_53, %c0_54] : memref<1x128xf32, #tpu.memory_space<vmem>>, vector<1x128xf32>
    %149 = vector.broadcast %148 : vector<1x128xf32> to vector<32x128xf32>
    %150 = arith.addf %147, %149 : vector<32x128xf32>
    %c1 = arith.constant 1 : index
    %151 = memref.load %arg0[%c1] : memref<3xf32, #tpu.memory_space<smem>>
    %152 = vector.broadcast %151 : f32 to vector<32x128xf32>
    %153 = arith.mulf %150, %152 : vector<32x128xf32>
    %154 = math.roundeven %153 : vector<32x128xf32>
    %cst_55 = arith.constant 0.000000e+00 : f32
    %cst_56 = arith.constant 1.500000e+01 : f32
    %155 = vector.broadcast %cst_55 : f32 to vector<32x128xf32>
    %156 = arith.maximumf %155, %154 : vector<32x128xf32>
    %157 = vector.broadcast %cst_56 : f32 to vector<32x128xf32>
    %158 = arith.minimumf %157, %156 : vector<32x128xf32>
    %159 = arith.truncf %158 : vector<32x128xf32> to vector<32x128xbf16>
    %cst_57 = arith.constant 0.000000e+00 : bf16
    %160 = vector.broadcast %cst_57 : bf16 to vector<1x128xbf16>
    %161 = vector.extract_strided_slice %159 {offsets = [0, 0], sizes = [31, 128], strides = [1, 1]} : vector<32x128xbf16> to vector<31x128xbf16>
    %162 = tpu.concatenate %160, %161 in 0 : vector<1x128xbf16>, vector<31x128xbf16> -> vector<32x128xbf16>
    %163 = vector.extract_strided_slice %159 {offsets = [1, 0], sizes = [31, 128], strides = [1, 1]} : vector<32x128xbf16> to vector<31x128xbf16>
    %164 = tpu.concatenate %163, %160 in 0 : vector<31x128xbf16>, vector<1x128xbf16> -> vector<32x128xbf16>
    %165 = tpu.iota {dimensions = array<i32: 0>} : vector<32x1xi32>
    %c16_i32 = arith.constant 16 : i32
    %c0_i32_58 = arith.constant 0 : i32
    %166 = arith.cmpi eq, %c16_i32, %c0_i32_58 : i32
    %c1_i32_59 = arith.constant 1 : i32
    %167 = arith.select %166, %c1_i32_59, %c16_i32 : i32
    %168 = vector.broadcast %167 : i32 to vector<32x1xi32>
    %169 = arith.remsi %165, %168 : vector<32x1xi32>
    %c0_i32_60 = arith.constant 0 : i32
    %170 = vector.broadcast %c0_i32_60 : i32 to vector<32x1xi32>
    %171 = arith.cmpi ne, %169, %170 : vector<32x1xi32>
    %c0_i32_61 = arith.constant 0 : i32
    %172 = vector.broadcast %c0_i32_61 : i32 to vector<32x1xi32>
    %173 = arith.cmpi slt, %169, %172 : vector<32x1xi32>
    %c0_i32_62 = arith.constant 0 : i32
    %174 = arith.cmpi slt, %167, %c0_i32_62 : i32
    %175 = vector.broadcast %174 : i1 to vector<32x1xi1>
    %176 = vector.broadcast %175 : vector<32x1xi1> to vector<32x1xi1>
    %177 = arith.xori %173, %176 : vector<32x1xi1>
    %178 = arith.andi %177, %171 : vector<32x1xi1>
    %179 = vector.broadcast %167 : i32 to vector<32x1xi32>
    %180 = arith.addi %169, %179 : vector<32x1xi32>
    %181 = arith.select %178, %180, %169 : vector<32x1xi1>, vector<32x1xi32>
    %c0_i32_63 = arith.constant 0 : i32
    %182 = vector.broadcast %c0_i32_63 : i32 to vector<32x1xi32>
    %183 = arith.cmpi sgt, %181, %182 : vector<32x1xi32>
    %cst_64 = arith.constant 0.000000e+00 : bf16
    %184 = vector.broadcast %cst_64 : bf16 to vector<32x128xbf16>
    %185 = vector.shape_cast %183 : vector<32x1xi1> to vector<32x1xi1>
    %186 = vector.broadcast %185 : vector<32x1xi1> to vector<32x128xi1>
    %187 = arith.select %186, %162, %184 : vector<32x128xi1>, vector<32x128xbf16>
    %c15_i32 = arith.constant 15 : i32
    %188 = vector.broadcast %c15_i32 : i32 to vector<32x1xi32>
    %189 = arith.cmpi slt, %181, %188 : vector<32x1xi32>
    %cst_65 = arith.constant 0.000000e+00 : bf16
    %190 = vector.broadcast %cst_65 : bf16 to vector<32x128xbf16>
    %191 = vector.shape_cast %189 : vector<32x1xi1> to vector<32x1xi1>
    %192 = vector.broadcast %191 : vector<32x1xi1> to vector<32x128xi1>
    %193 = arith.select %192, %164, %190 : vector<32x128xi1>, vector<32x128xbf16>
    %194 = tpu.concatenate %187, %159, %193 in 1 : vector<32x128xbf16>, vector<32x128xbf16>, vector<32x128xbf16> -> vector<32x384xbf16>
    %c0_66 = arith.constant 0 : index
    %c0_67 = arith.constant 0 : index
    %195 = vector.load %arg3[%c0_66, %c0_67] : memref<384x128xbf16, #tpu.memory_space<vmem>>, vector<384x128xbf16>
    %cst_68 = arith.constant dense<0.000000e+00> : vector<32x128xf32>
    %196 = tpu.matmul %194, %195, %cst_68 {dimension_numbers = #tpu.dot_dimension_numbers<[1], [0], [0], [1], [0, 0, 1, 1], [], []>} : vector<32x384xbf16>, vector<384x128xbf16>, vector<32x128xf32> -> vector<32x128xf32>
    %c0_69 = arith.constant 0 : index
    %c0_70 = arith.constant 0 : index
    %197 = vector.load %arg14[%c0_69, %c0_70] : memref<1x8xf32, #tpu.memory_space<vmem>>, vector<1x8xf32>
    %c0_71 = arith.constant 0 : index
    %c0_72 = arith.constant 0 : index
    %198 = vector.load %arg15[%c0_71, %c0_72] : memref<1x8xf32, #tpu.memory_space<vmem>>, vector<1x8xf32>
    %c0_73 = arith.constant 0 : index
    %c0_74 = arith.constant 0 : index
    %199 = vector.load %arg16[%c0_73, %c0_74] : memref<1x8xf32, #tpu.memory_space<vmem>>, vector<1x8xf32>
    %cst_75 = arith.constant dense<0.000000e+00> : vector<128xf32>
    %200 = vector.multi_reduction <add>, %196, %cst_75 [0] : vector<32x128xf32> to vector<128xf32>
    %201 = vector.shape_cast %200 : vector<128xf32> to vector<1x128xf32>
    %202 = arith.mulf %196, %196 : vector<32x128xf32>
    %cst_76 = arith.constant dense<0.000000e+00> : vector<128xf32>
    %203 = vector.multi_reduction <add>, %202, %cst_76 [0] : vector<32x128xf32> to vector<128xf32>
    %204 = vector.shape_cast %203 : vector<128xf32> to vector<1x128xf32>
    %cst_77 = arith.constant dense<0.000000e+00> : vector<1x8xf32>
    %205 = tpu.matmul %201, %20, %cst_77 {dimension_numbers = #tpu.dot_dimension_numbers<[1], [0], [0], [1], [0, 0, 1, 1], [], []>} : vector<1x128xf32>, vector<128x8xf32>, vector<1x8xf32> -> vector<1x8xf32>
    %cst_78 = arith.constant dense<0.000000e+00> : vector<1x8xf32>
    %206 = tpu.matmul %204, %20, %cst_78 {dimension_numbers = #tpu.dot_dimension_numbers<[1], [0], [0], [1], [0, 0, 1, 1], [], []>} : vector<1x128xf32>, vector<128x8xf32>, vector<1x8xf32> -> vector<1x8xf32>
    %cst_79 = arith.constant 0.001953125 : f32
    %207 = vector.broadcast %cst_79 : f32 to vector<1x8xf32>
    %208 = arith.mulf %205, %207 : vector<1x8xf32>
    %cst_80 = arith.constant 0.001953125 : f32
    %209 = vector.broadcast %cst_80 : f32 to vector<1x8xf32>
    %210 = arith.mulf %206, %209 : vector<1x8xf32>
    %211 = arith.mulf %208, %208 : vector<1x8xf32>
    %212 = arith.subf %210, %211 : vector<1x8xf32>
    %213 = arith.mulf %197, %198 : vector<1x8xf32>
    %214 = arith.mulf %197, %197 : vector<1x8xf32>
    %215 = arith.mulf %214, %212 : vector<1x8xf32>
    %cst_81 = arith.constant 9.99999974E-6 : f32
    %216 = vector.broadcast %cst_81 : f32 to vector<1x8xf32>
    %217 = arith.addf %215, %216 : vector<1x8xf32>
    %218 = math.rsqrt %217 : vector<1x8xf32>
    %219 = arith.mulf %213, %218 : vector<1x8xf32>
    %220 = arith.mulf %208, %219 : vector<1x8xf32>
    %221 = arith.subf %199, %220 : vector<1x8xf32>
    %cst_82 = arith.constant dense<0.000000e+00> : vector<1x128xf32>
    %222 = tpu.matmul %219, %41, %cst_82 {dimension_numbers = #tpu.dot_dimension_numbers<[1], [0], [0], [1], [0, 0, 1, 1], [], []>} : vector<1x8xf32>, vector<8x128xf32>, vector<1x128xf32> -> vector<1x128xf32>
    %cst_83 = arith.constant dense<0.000000e+00> : vector<1x128xf32>
    %223 = tpu.matmul %221, %41, %cst_83 {dimension_numbers = #tpu.dot_dimension_numbers<[1], [0], [0], [1], [0, 0, 1, 1], [], []>} : vector<1x8xf32>, vector<8x128xf32>, vector<1x128xf32> -> vector<1x128xf32>
    %224 = vector.broadcast %222 : vector<1x128xf32> to vector<32x128xf32>
    %225 = arith.mulf %196, %224 : vector<32x128xf32>
    %226 = vector.broadcast %223 : vector<1x128xf32> to vector<32x128xf32>
    %227 = arith.addf %225, %226 : vector<32x128xf32>
    %c0_84 = arith.constant 0 : index
    %c0_85 = arith.constant 0 : index
    %228 = vector.load %arg17[%c0_84, %c0_85] : memref<1x128xf32, #tpu.memory_space<vmem>>, vector<1x128xf32>
    %229 = vector.broadcast %228 : vector<1x128xf32> to vector<32x128xf32>
    %230 = arith.addf %227, %229 : vector<32x128xf32>
    %c0_86 = arith.constant 0 : index
    %c0_87 = arith.constant 0 : index
    %231 = vector.load %arg18[%c0_86, %c0_87] : memref<1x128xf32, #tpu.memory_space<vmem>>, vector<1x128xf32>
    %cst_88 = arith.constant 0.000000e+00 : f32
    %232 = vector.broadcast %cst_88 : f32 to vector<32x128xf32>
    %233 = arith.cmpf ogt, %230, %232 : vector<32x128xf32>
    %234 = vector.broadcast %231 : vector<1x128xf32> to vector<32x128xf32>
    %235 = arith.mulf %234, %230 : vector<32x128xf32>
    %236 = arith.select %233, %230, %235 : vector<32x128xi1>, vector<32x128xf32>
    %c0_89 = arith.constant 0 : index
    %c0_90 = arith.constant 0 : index
    %237 = vector.load %arg19[%c0_89, %c0_90] : memref<1x128xf32, #tpu.memory_space<vmem>>, vector<1x128xf32>
    %238 = vector.broadcast %237 : vector<1x128xf32> to vector<32x128xf32>
    %239 = arith.addf %236, %238 : vector<32x128xf32>
    %c2 = arith.constant 2 : index
    %240 = memref.load %arg0[%c2] : memref<3xf32, #tpu.memory_space<smem>>
    %241 = vector.broadcast %240 : f32 to vector<32x128xf32>
    %242 = arith.mulf %239, %241 : vector<32x128xf32>
    %243 = math.roundeven %242 : vector<32x128xf32>
    %cst_91 = arith.constant 0.000000e+00 : f32
    %cst_92 = arith.constant 1.500000e+01 : f32
    %244 = vector.broadcast %cst_91 : f32 to vector<32x128xf32>
    %245 = arith.maximumf %244, %243 : vector<32x128xf32>
    %246 = vector.broadcast %cst_92 : f32 to vector<32x128xf32>
    %247 = arith.minimumf %246, %245 : vector<32x128xf32>
    %248 = arith.truncf %247 : vector<32x128xf32> to vector<32x128xbf16>
    %c0_93 = arith.constant 0 : index
    %c0_94 = arith.constant 0 : index
    %249 = vector.load %arg4[%c0_93, %c0_94] : memref<128x512xbf16, #tpu.memory_space<vmem>>, vector<128x512xbf16>
    %cst_95 = arith.constant dense<0.000000e+00> : vector<32x512xf32>
    %250 = tpu.matmul %248, %249, %cst_95 {dimension_numbers = #tpu.dot_dimension_numbers<[1], [0], [0], [1], [0, 0, 1, 1], [], []>} : vector<32x128xbf16>, vector<128x512xbf16>, vector<32x512xf32> -> vector<32x512xf32>
    %c0_96 = arith.constant 0 : index
    %c0_97 = arith.constant 0 : index
    %251 = vector.load %arg20[%c0_96, %c0_97] : memref<1x32xf32, #tpu.memory_space<vmem>>, vector<1x32xf32>
    %c0_98 = arith.constant 0 : index
    %c0_99 = arith.constant 0 : index
    %252 = vector.load %arg21[%c0_98, %c0_99] : memref<1x32xf32, #tpu.memory_space<vmem>>, vector<1x32xf32>
    %c0_100 = arith.constant 0 : index
    %c0_101 = arith.constant 0 : index
    %253 = vector.load %arg22[%c0_100, %c0_101] : memref<1x32xf32, #tpu.memory_space<vmem>>, vector<1x32xf32>
    %cst_102 = arith.constant dense<0.000000e+00> : vector<512xf32>
    %254 = vector.multi_reduction <add>, %250, %cst_102 [0] : vector<32x512xf32> to vector<512xf32>
    %255 = vector.shape_cast %254 : vector<512xf32> to vector<1x512xf32>
    %256 = arith.mulf %250, %250 : vector<32x512xf32>
    %cst_103 = arith.constant dense<0.000000e+00> : vector<512xf32>
    %257 = vector.multi_reduction <add>, %256, %cst_103 [0] : vector<32x512xf32> to vector<512xf32>
    %258 = vector.shape_cast %257 : vector<512xf32> to vector<1x512xf32>
    %cst_104 = arith.constant dense<0.000000e+00> : vector<1x32xf32>
    %259 = tpu.matmul %255, %62, %cst_104 {dimension_numbers = #tpu.dot_dimension_numbers<[1], [0], [0], [1], [0, 0, 1, 1], [], []>} : vector<1x512xf32>, vector<512x32xf32>, vector<1x32xf32> -> vector<1x32xf32>
    %cst_105 = arith.constant dense<0.000000e+00> : vector<1x32xf32>
    %260 = tpu.matmul %258, %62, %cst_105 {dimension_numbers = #tpu.dot_dimension_numbers<[1], [0], [0], [1], [0, 0, 1, 1], [], []>} : vector<1x512xf32>, vector<512x32xf32>, vector<1x32xf32> -> vector<1x32xf32>
    %cst_106 = arith.constant 0.001953125 : f32
    %261 = vector.broadcast %cst_106 : f32 to vector<1x32xf32>
    %262 = arith.mulf %259, %261 : vector<1x32xf32>
    %cst_107 = arith.constant 0.001953125 : f32
    %263 = vector.broadcast %cst_107 : f32 to vector<1x32xf32>
    %264 = arith.mulf %260, %263 : vector<1x32xf32>
    %265 = arith.mulf %262, %262 : vector<1x32xf32>
    %266 = arith.subf %264, %265 : vector<1x32xf32>
    %267 = arith.mulf %251, %252 : vector<1x32xf32>
    %268 = arith.mulf %251, %251 : vector<1x32xf32>
    %269 = arith.mulf %268, %266 : vector<1x32xf32>
    %cst_108 = arith.constant 9.99999974E-6 : f32
    %270 = vector.broadcast %cst_108 : f32 to vector<1x32xf32>
    %271 = arith.addf %269, %270 : vector<1x32xf32>
    %272 = math.rsqrt %271 : vector<1x32xf32>
    %273 = arith.mulf %267, %272 : vector<1x32xf32>
    %274 = arith.mulf %262, %273 : vector<1x32xf32>
    %275 = arith.subf %253, %274 : vector<1x32xf32>
    %cst_109 = arith.constant dense<0.000000e+00> : vector<1x512xf32>
    %276 = tpu.matmul %273, %83, %cst_109 {dimension_numbers = #tpu.dot_dimension_numbers<[1], [0], [0], [1], [0, 0, 1, 1], [], []>} : vector<1x32xf32>, vector<32x512xf32>, vector<1x512xf32> -> vector<1x512xf32>
    %cst_110 = arith.constant dense<0.000000e+00> : vector<1x512xf32>
    %277 = tpu.matmul %275, %83, %cst_110 {dimension_numbers = #tpu.dot_dimension_numbers<[1], [0], [0], [1], [0, 0, 1, 1], [], []>} : vector<1x32xf32>, vector<32x512xf32>, vector<1x512xf32> -> vector<1x512xf32>
    %278 = vector.broadcast %276 : vector<1x512xf32> to vector<32x512xf32>
    %279 = arith.mulf %250, %278 : vector<32x512xf32>
    %280 = vector.broadcast %277 : vector<1x512xf32> to vector<32x512xf32>
    %281 = arith.addf %279, %280 : vector<32x512xf32>
    %282 = arith.addf %281, %84 : vector<32x512xf32>
    %c0_111 = arith.constant 0 : index
    %c0_112 = arith.constant 0 : index
    %283 = vector.load %arg23[%c0_111, %c0_112] : memref<1x512xf32, #tpu.memory_space<vmem>>, vector<1x512xf32>
    %284 = vector.broadcast %283 : vector<1x512xf32> to vector<32x512xf32>
    %285 = arith.addf %282, %284 : vector<32x512xf32>
    %c0_113 = arith.constant 0 : index
    %c0_114 = arith.constant 0 : index
    %286 = vector.load %arg24[%c0_113, %c0_114] : memref<1x512xf32, #tpu.memory_space<vmem>>, vector<1x512xf32>
    %cst_115 = arith.constant 0.000000e+00 : f32
    %287 = vector.broadcast %cst_115 : f32 to vector<32x512xf32>
    %288 = arith.cmpf ogt, %285, %287 : vector<32x512xf32>
    %289 = vector.broadcast %286 : vector<1x512xf32> to vector<32x512xf32>
    %290 = arith.mulf %289, %285 : vector<32x512xf32>
    %291 = arith.select %288, %285, %290 : vector<32x512xi1>, vector<32x512xf32>
    %c0_116 = arith.constant 0 : index
    %c0_117 = arith.constant 0 : index
    %292 = vector.load %arg25[%c0_116, %c0_117] : memref<1x512xf32, #tpu.memory_space<vmem>>, vector<1x512xf32>
    %293 = vector.broadcast %292 : vector<1x512xf32> to vector<32x512xf32>
    %294 = arith.addf %291, %293 : vector<32x512xf32>
    %c0_118 = arith.constant 0 : index
    %c0_119 = arith.constant 0 : index
    %295 = vector.load %arg26[%c0_118, %c0_119] : memref<32x512xf32, #tpu.memory_space<vmem>>, vector<32x512xf32>
    tpu.vector_store %arg26[%c0_118, %c0_119], %294 {strides = array<i32>} : memref<32x512xf32, #tpu.memory_space<vmem>>, vector<32x512xf32>,
    return
  }
}

</mosaic_0001>

<llo_original>
// kernel: tpu_custom_call.1
$region0: #{tpu_custom_call.1}
  #allocation0 [shape = 'u32[]', space=smem, size = 0x4, offset = 0x4, fixed_abs, tag = 'smem constant byte address 0x4 - core index']
  #allocation1 [shape = 'u32[144,128]{1,0:T(1,128)}', space=vmem, size = 0x12000, scoped, tag = 'internal scratch']
  %s0 = inlined_call_operand.hbm [shape: f32[3], index: 0, kind: input, shape index: {}]
  %s1 = inlined_call_operand.hbm [shape: f32[32,512], index: 1, kind: input, shape index: {}]
  %s2 = inlined_call_operand.hbm [shape: bf16[512,128], index: 2, kind: input, shape index: {}]
  %s3 = inlined_call_operand.hbm [shape: bf16[384,128], index: 3, kind: input, shape index: {}]
  %s4 = inlined_call_operand.hbm [shape: bf16[128,512], index: 4, kind: input, shape index: {}]
  %s5 = inlined_call_operand.vmem [shape: f32[1,512], index: 5, kind: input, shape index: {}]
  %s6 = inlined_call_operand.vmem [shape: f32[1,512], index: 6, kind: input, shape index: {}]
  %s7 = inlined_call_operand.vmem [shape: f32[1,512], index: 7, kind: input, shape index: {}]
  %s8 = inlined_call_operand.vmem [shape: f32[1,8], index: 8, kind: input, shape index: {}]
  %s9 = inlined_call_operand.vmem [shape: f32[1,8], index: 9, kind: input, shape index: {}]
  %s10 = inlined_call_operand.vmem [shape: f32[1,8], index: 10, kind: input, shape index: {}]
  %s11 = inlined_call_operand.vmem [shape: f32[1,128], index: 11, kind: input, shape index: {}]
  %s12 = inlined_call_operand.vmem [shape: f32[1,128], index: 12, kind: input, shape index: {}]
  %s13 = inlined_call_operand.vmem [shape: f32[1,128], index: 13, kind: input, shape index: {}]
  %s14 = inlined_call_operand.vmem [shape: f32[1,8], index: 14, kind: input, shape index: {}]
  %s15 = inlined_call_operand.vmem [shape: f32[1,8], index: 15, kind: input, shape index: {}]
  %s16 = inlined_call_operand.vmem [shape: f32[1,8], index: 16, kind: input, shape index: {}]
  %s17 = inlined_call_operand.vmem [shape: f32[1,128], index: 17, kind: input, shape index: {}]
  %s18 = inlined_call_operand.vmem [shape: f32[1,128], index: 18, kind: input, shape index: {}]
  %s19 = inlined_call_operand.vmem [shape: f32[1,128], index: 19, kind: input, shape index: {}]
  %s20 = inlined_call_operand.vmem [shape: f32[1,32], index: 20, kind: input, shape index: {}]
  %s21 = inlined_call_operand.vmem [shape: f32[1,32], index: 21, kind: input, shape index: {}]
  %s22 = inlined_call_operand.vmem [shape: f32[1,32], index: 22, kind: input, shape index: {}]
  %s23 = inlined_call_operand.vmem [shape: f32[1,512], index: 23, kind: input, shape index: {}]
  %s24 = inlined_call_operand.vmem [shape: f32[1,512], index: 24, kind: input, shape index: {}]
  %s25 = inlined_call_operand.vmem [shape: f32[1,512], index: 25, kind: input, shape index: {}]
  %s26 = inlined_call_operand.hbm [shape: f32[32,512], index: 26, kind: output, shape index: {}]
  %s27 = sld [smem:[#allocation0]]
  $region134: #{tpu_custom_call.1} parent=0
    _
  %s29 = ssub.s32 1, %s27
  %s30 = scalar_select 0, %s29, %s27
  $region1: #{tpu_custom_call.1} parent=0
    #allocation2 [shape = 'u8[512]{0}', space=smem, size = 0x200, scoped, tag = 'input window, operand 0, single buffered']
    #allocation3 [shape = 's32[1]{0}', space=sflag, size = 0x4, scoped, tag = 'scoped memory for tpu_custom_call.1']
    #allocation4 [shape = 's32[1]{0}', space=sflag, size = 0x4, scoped, tag = 'scoped memory for tpu_custom_call.1']
    #allocation5 [shape = 's32[1]{0}', space=sflag, size = 0x4, scoped, tag = 'scoped memory for tpu_custom_call.1']
    #allocation6 [shape = 'u8[65536]{0}', space=vmem, size = 0x10000, scoped, tag = 'input window, operand 1, single buffered']
    #allocation7 [shape = 'u8[131072]{0}', space=vmem, size = 0x20000, scoped, tag = 'input window, operand 2, single buffered']
    #allocation8 [shape = 's32[1]{0}', space=sflag, size = 0x4, scoped, tag = 'scoped memory for tpu_custom_call.1']
    #allocation9 [shape = 'u8[98304]{0}', space=vmem, size = 0x18000, scoped, tag = 'input window, operand 3, single buffered']
    #allocation10 [shape = 'u8[131072]{0}', space=vmem, size = 0x20000, scoped, tag = 'input window, operand 4, single buffered']
    #allocation11 [shape = 's32[1]{0}', space=sflag, size = 0x4, scoped, tag = 'scoped memory for tpu_custom_call.1']
    #allocation12 [shape = 'u8[65536]{0}', space=vmem, size = 0x10000, scoped, tag = 'output window, operand 0, single buffered']
    %31 = vsyncpa [#allocation5], 0
    %32 = vsyncpa [#allocation3], 0
    %33 = vsyncpa [#allocation8], 0
    %34 = vsyncpa [#allocation11], 0
    %35 = vsyncpa [#allocation4], 0
    // Predicated region
    $region2: #{tpu_custom_call.1} parent=1 // pred_check
      _
    $region3: #{tpu_custom_call.1} parent=1 // pred_check_branch
      %37 = sbr.rel (0) target = $region5
    $region4: #{tpu_custom_call.1} parent=1 // pred_region
      %s39 = ssub.s32 16, 16
      %40 = vsyncadd [#allocation5], %s39
      %43 = dma.hbm_to_smem %s0, 16, [#allocation2], [#allocation5]
    $region5: #{tpu_custom_call.1} parent=1 // pred_fallthru
      _
    // Predicated region
    $region6: #{tpu_custom_call.1} parent=1 // pred_check
      _
    $region7: #{tpu_custom_call.1} parent=1 // pred_check_branch
      %45 = sbr.rel (0) target = $region9
    $region8: #{tpu_custom_call.1} parent=1 // pred_region
      %s47 = ssub.s32 2048, 2048
      %48 = vsyncadd [#allocation3], %s47
      %s49 = sshll.u32 [#allocation6], 4
      %s50 = int_to_ptr.vmem [resolvable:$true] %s49
      %55 = dma.hbm_to_vmem [thread:$0]  %s1, 2048, %s50, [#allocation3], 512, 512, 32
    $region9: #{tpu_custom_call.1} parent=1 // pred_fallthru
      _
    // Predicated region
    $region10: #{tpu_custom_call.1} parent=1 // pred_check
      _
    $region11: #{tpu_custom_call.1} parent=1 // pred_check_branch
      %57 = sbr.rel (0) target = $region13
    $region12: #{tpu_custom_call.1} parent=1 // pred_region
      %s59 = ssub.s32 4096, 4096
      %60 = vsyncadd [#allocation8], %s59
      %s61 = sshll.u32 [#allocation7], 4
      %s62 = int_to_ptr.vmem [resolvable:$true] %s61
      %67 = dma.hbm_to_vmem [thread:$0]  %s2, 4096, %s62, [#allocation8], 64, 64, 4
    $region13: #{tpu_custom_call.1} parent=1 // pred_fallthru
      _
    // Predicated region
    $region14: #{tpu_custom_call.1} parent=1 // pred_check
      _
    $region15: #{tpu_custom_call.1} parent=1 // pred_check_branch
      %69 = sbr.rel (0) target = $region17
    $region16: #{tpu_custom_call.1} parent=1 // pred_region
      %s71 = ssub.s32 3072, 3072
      %72 = vsyncadd [#allocation8], %s71
      %s73 = sshll.u32 [#allocation9], 4
      %s74 = int_to_ptr.vmem [resolvable:$true] %s73
      %79 = dma.hbm_to_vmem [thread:$0]  %s3, 3072, %s74, [#allocation8], 64, 64, 4
    $region17: #{tpu_custom_call.1} parent=1 // pred_fallthru
      _
    // Predicated region
    $region18: #{tpu_custom_call.1} parent=1 // pred_check
      _
    $region19: #{tpu_custom_call.1} parent=1 // pred_check_branch
      %81 = sbr.rel (0) target = $region21
    $region20: #{tpu_custom_call.1} parent=1 // pred_region
      %s83 = ssub.s32 4096, 4096
      %84 = vsyncadd [#allocation11], %s83
      %s85 = sshll.u32 [#allocation10], 4
      %s86 = int_to_ptr.vmem [resolvable:$true] %s85
      %91 = dma.hbm_to_vmem [thread:$0]  %s4, 4096, %s86, [#allocation11], 256, 256, 16
    $region21: #{tpu_custom_call.1} parent=1 // pred_fallthru
      _
    // Predicated region
    $region22: #{tpu_custom_call.1} parent=1 // pred_check
      _
    $region23: #{tpu_custom_call.1} parent=1 // pred_check_branch
      %93 = sbr.rel (0) target = $region25
    $region24: #{tpu_custom_call.1} parent=1 // pred_region
      _
    $region25: #{tpu_custom_call.1} parent=1 // pred_fallthru
      _
    // Predicated region
    $region26: #{tpu_custom_call.1} parent=1 // pred_check
      _
    $region27: #{tpu_custom_call.1} parent=1 // pred_check_branch
      %95 = sbr.rel (0) target = $region29
    $region28: #{tpu_custom_call.1} parent=1 // pred_region
      _
    $region29: #{tpu_custom_call.1} parent=1 // pred_fallthru
      _
    // Predicated region
    $region30: #{tpu_custom_call.1} parent=1 // pred_check
      _
    $region31: #{tpu_custom_call.1} parent=1 // pred_check_branch
      %97 = sbr.rel (0) target = $region33
    $region32: #{tpu_custom_call.1} parent=1 // pred_region
      _
    $region33: #{tpu_custom_call.1} parent=1 // pred_fallthru
      _
    // Predicated region
    $region34: #{tpu_custom_call.1} parent=1 // pred_check
      _
    $region35: #{tpu_custom_call.1} parent=1 // pred_check_branch
      %99 = sbr.rel (0) target = $region37
    $region36: #{tpu_custom_call.1} parent=1 // pred_region
      _
    $region37: #{tpu_custom_call.1} parent=1 // pred_fallthru
      _
    // Predicated region
    $region38: #{tpu_custom_call.1} parent=1 // pred_check
      _
    $region39: #{tpu_custom_call.1} parent=1 // pred_check_branch
      %101 = sbr.rel (0) target = $region41
    $region40: #{tpu_custom_call.1} parent=1 // pred_region
      _
    $region41: #{tpu_custom_call.1} parent=1 // pred_fallthru
      _
    // Predicated region
    $region42: #{tpu_custom_call.1} parent=1 // pred_check
      _
    $region43: #{tpu_custom_call.1} parent=1 // pred_check_branch
      %103 = sbr.rel (0) target = $region45
    $region44: #{tpu_custom_call.1} parent=1 // pred_region
      _
    $region45: #{tpu_custom_call.1} parent=1 // pred_fallthru
      _
    // Predicated region
    $region46: #{tpu_custom_call.1} parent=1 // pred_check
      _
    $region47: #{tpu_custom_call.1} parent=1 // pred_check_branch
      %105 = sbr.rel (0) target = $region49
    $region48: #{tpu_custom_call.1} parent=1 // pred_region
      _
    $region49: #{tpu_custom_call.1} parent=1 // pred_fallthru
      _
    // Predicated region
    $region50: #{tpu_custom_call.1} parent=1 // pred_check
      _
    $region51: #{tpu_custom_call.1} parent=1 // pred_check_branch
      %107 = sbr.rel (0) target = $region53
    $region52: #{tpu_custom_call.1} parent=1 // pred_region
      _
    $region53: #{tpu_custom_call.1} parent=1 // pred_fallthru
      _
    // Predicated region
    $region54: #{tpu_custom_call.1} parent=1 // pred_check
      _
    $region55: #{tpu_custom_call.1} parent=1 // pred_check_branch
      %109 = sbr.rel (0) target = $region57
    $region56: #{tpu_custom_call.1} parent=1 // pred_region
      _
    $region57: #{tpu_custom_call.1} parent=1 // pred_fallthru
      _
    // Predicated region
    $region58: #{tpu_custom_call.1} parent=1 // pred_check
      _
    $region59: #{tpu_custom_call.1} parent=1 // pred_check_branch
      %111 = sbr.rel (0) target = $region61
    $region60: #{tpu_custom_call.1} parent=1 // pred_region
      _
    $region61: #{tpu_custom_call.1} parent=1 // pred_fallthru
      _
    // Predicated region
    $region62: #{tpu_custom_call.1} parent=1 // pred_check
      _
    $region63: #{tpu_custom_call.1} parent=1 // pred_check_branch
      %113 = sbr.rel (0) target = $region65
    $region64: #{tpu_custom_call.1} parent=1 // pred_region
      _
    $region65: #{tpu_custom_call.1} parent=1 // pred_fallthru
      _
    // Predicated region
    $region66: #{tpu_custom_call.1} parent=1 // pred_check
      _
    $region67: #{tpu_custom_call.1} parent=1 // pred_check_branch
      %115 = sbr.rel (0) target = $region69
    $region68: #{tpu_custom_call.1} parent=1 // pred_region
      _
    $region69: #{tpu_custom_call.1} parent=1 // pred_fallthru
      _
    // Predicated region
    $region70: #{tpu_custom_call.1} parent=1 // pred_check
      _
    $region71: #{tpu_custom_call.1} parent=1 // pred_check_branch
      %117 = sbr.rel (0) target = $region73
    $region72: #{tpu_custom_call.1} parent=1 // pred_region
      _
    $region73: #{tpu_custom_call.1} parent=1 // pred_fallthru
      _
    // Predicated region
    $region74: #{tpu_custom_call.1} parent=1 // pred_check
      _
    $region75: #{tpu_custom_call.1} parent=1 // pred_check_branch
      %119 = sbr.rel (0) target = $region77
    $region76: #{tpu_custom_call.1} parent=1 // pred_region
      _
    $region77: #{tpu_custom_call.1} parent=1 // pred_fallthru
      _
    // Predicated region
    $region78: #{tpu_custom_call.1} parent=1 // pred_check
      _
    $region79: #{tpu_custom_call.1} parent=1 // pred_check_branch
      %121 = sbr.rel (0) target = $region81
    $region80: #{tpu_custom_call.1} parent=1 // pred_region
      _
    $region81: #{tpu_custom_call.1} parent=1 // pred_fallthru
      _
    // Predicated region
    $region82: #{tpu_custom_call.1} parent=1 // pred_check
      _
    $region83: #{tpu_custom_call.1} parent=1 // pred_check_branch
      %123 = sbr.rel (0) target = $region85
    $region84: #{tpu_custom_call.1} parent=1 // pred_region
      _
    $region85: #{tpu_custom_call.1} parent=1 // pred_fallthru
      _
    // Predicated region
    $region86: #{tpu_custom_call.1} parent=1 // pred_check
      _
    $region87: #{tpu_custom_call.1} parent=1 // pred_check_branch
      %125 = sbr.rel (0) target = $region89
    $region88: #{tpu_custom_call.1} parent=1 // pred_region
      _
    $region89: #{tpu_custom_call.1} parent=1 // pred_fallthru
      _
    // Predicated region
    $region90: #{tpu_custom_call.1} parent=1 // pred_check
      _
    $region91: #{tpu_custom_call.1} parent=1 // pred_check_branch
      %127 = sbr.rel (0) target = $region93
    $region92: #{tpu_custom_call.1} parent=1 // pred_region
      _
    $region93: #{tpu_custom_call.1} parent=1 // pred_fallthru
      _
    // Predicated region
    $region94: #{tpu_custom_call.1} parent=1 // pred_check
      _
    $region95: #{tpu_custom_call.1} parent=1 // pred_check_branch
      %129 = sbr.rel (0) target = $region97
    $region96: #{tpu_custom_call.1} parent=1 // pred_region
      _
    $region97: #{tpu_custom_call.1} parent=1 // pred_fallthru
      _
    // Predicated region
    $region98: #{tpu_custom_call.1} parent=1 // pred_check
      _
    $region99: #{tpu_custom_call.1} parent=1 // pred_check_branch
      %131 = sbr.rel (0) target = $region101
    $region100: #{tpu_custom_call.1} parent=1 // pred_region
      _
    $region101: #{tpu_custom_call.1} parent=1 // pred_fallthru
      _
    // Predicated region
    $region102: #{tpu_custom_call.1} parent=1 // pred_check
      _
    $region103: #{tpu_custom_call.1} parent=1 // pred_check_branch
      %133 = sbr.rel (0) target = $region105
    $region104: #{tpu_custom_call.1} parent=1 // pred_region
      _
    $region105: #{tpu_custom_call.1} parent=1 // pred_fallthru
      _
    // Predicated region
    $region106: #{tpu_custom_call.1} parent=1 // pred_check
      _
    $region107: #{tpu_custom_call.1} parent=1 // pred_check_branch
      %135 = sbr.rel (0) target = $region109
    $region108: #{tpu_custom_call.1} parent=1 // pred_region
      %136 = dma.done [#allocation5], 16
    $region109: #{tpu_custom_call.1} parent=1 // pred_fallthru
      _
    // Predicated region
    $region110: #{tpu_custom_call.1} parent=1 // pred_check
      _
    $region111: #{tpu_custom_call.1} parent=1 // pred_check_branch
      %138 = sbr.rel (0) target = $region113
    $region112: #{tpu_custom_call.1} parent=1 // pred_region
      %139 = dma.done [#allocation3], 2048
    $region113: #{tpu_custom_call.1} parent=1 // pred_fallthru
      _
    // Predicated region
    $region114: #{tpu_custom_call.1} parent=1 // pred_check
      _
    $region115: #{tpu_custom_call.1} parent=1 // pred_check_branch
      %141 = sbr.rel (0) target = $region117
    $region116: #{tpu_custom_call.1} parent=1 // pred_region
      %142 = dma.done [#allocation8], 4096
    $region117: #{tpu_custom_call.1} parent=1 // pred_fallthru
      _
    // Predicated region
    $region118: #{tpu_custom_call.1} parent=1 // pred_check
      _
    $region119: #{tpu_custom_call.1} parent=1 // pred_check_branch
      %144 = sbr.rel (0) target = $region121
    $region120: #{tpu_custom_call.1} parent=1 // pred_region
      %145 = dma.done [#allocation8], 3072
    $region121: #{tpu_custom_call.1} parent=1 // pred_fallthru
      _
    // Predicated region
    $region122: #{tpu_custom_call.1} parent=1 // pred_check
      _
    $region123: #{tpu_custom_call.1} parent=1 // pred_check_branch
      %147 = sbr.rel (0) target = $region125
    $region124: #{tpu_custom_call.1} parent=1 // pred_region
      %148 = dma.done [#allocation11], 4096
    $region125: #{tpu_custom_call.1} parent=1 // pred_fallthru
      _
    %149 = sfence
    %v153 = vlaneseq
    %v154 = vshrl.u32 %v153, 7
    %v155 = vadd.s32 %v154, 8
    %v156 = vadd.s32 %v154, 16
    %v157 = vadd.s32 %v154, 24
    %v158 = vadd.s32 %v154, 32
    %v159 = vadd.s32 %v154, 40
    %v160 = vadd.s32 %v154, 48
    %v161 = vadd.s32 %v154, 56
    %v162 = vadd.s32 %v154, 64
    %v163 = vadd.s32 %v154, 72
    %v164 = vadd.s32 %v154, 80
    %v165 = vadd.s32 %v154, 88
    %v166 = vadd.s32 %v154, 96
    %v167 = vadd.s32 %v154, 104
    %v168 = vadd.s32 %v154, 112
    %v169 = vadd.s32 %v154, 120
    %v170 = vlaneseq
    %v171 = vand.u32 %v170, 127
    %vm172 = vcmp.lt.s32.totalorder %v154, 0
    %v173 = vsub.s32 0, %v154
    %v174 = vsel %vm172, %v173, %v154
    %v175 = vshrl.u32 %v174, 3
    %v176 = vand.u32 %v174, 7
    %v177 = vsub.s32 0, %v176
    %v178 = vsel %vm172, %v177, %v176
    %vm179 = vcmp.lt.s32.totalorder %v155, 0
    %v180 = vsub.s32 0, %v155
    %v181 = vsel %vm179, %v180, %v155
    %v182 = vshrl.u32 %v181, 3
    %v183 = vand.u32 %v181, 7
    %v184 = vsub.s32 0, %v183
    %v185 = vsel %vm179, %v184, %v183
    %vm186 = vcmp.lt.s32.totalorder %v156, 0
    %v187 = vsub.s32 0, %v156
    %v188 = vsel %vm186, %v187, %v156
    %v189 = vshrl.u32 %v188, 3
    %v190 = vand.u32 %v188, 7
    %v191 = vsub.s32 0, %v190
    %v192 = vsel %vm186, %v191, %v190
    %vm193 = vcmp.lt.s32.totalorder %v157, 0
    %v194 = vsub.s32 0, %v157
    %v195 = vsel %vm193, %v194, %v157
    %v196 = vshrl.u32 %v195, 3
    %v197 = vand.u32 %v195, 7
    %v198 = vsub.s32 0, %v197
    %v199 = vsel %vm193, %v198, %v197
    %vm200 = vcmp.lt.s32.totalorder %v158, 0
    %v201 = vsub.s32 0, %v158
    %v202 = vsel %vm200, %v201, %v158
    %v203 = vshrl.u32 %v202, 3
    %v204 = vand.u32 %v202, 7
    %v205 = vsub.s32 0, %v204
    %v206 = vsel %vm200, %v205, %v204
    %vm207 = vcmp.lt.s32.totalorder %v159, 0
    %v208 = vsub.s32 0, %v159
    %v209 = vsel %vm207, %v208, %v159
    %v210 = vshrl.u32 %v209, 3
    %v211 = vand.u32 %v209, 7
    %v212 = vsub.s32 0, %v211
    %v213 = vsel %vm207, %v212, %v211
    %vm214 = vcmp.lt.s32.totalorder %v160, 0
    %v215 = vsub.s32 0, %v160
    %v216 = vsel %vm214, %v215, %v160
    %v217 = vshrl.u32 %v216, 3
    %v218 = vand.u32 %v216, 7
    %v219 = vsub.s32 0, %v218
    %v220 = vsel %vm214, %v219, %v218
    %vm221 = vcmp.lt.s32.totalorder %v161, 0
    %v222 = vsub.s32 0, %v161
    %v223 = vsel %vm221, %v222, %v161
    %v224 = vshrl.u32 %v223, 3
    %v225 = vand.u32 %v223, 7
    %v226 = vsub.s32 0, %v225
    %v227 = vsel %vm221, %v226, %v225
    %vm228 = vcmp.lt.s32.totalorder %v162, 0
    %v229 = vsub.s32 0, %v162
    %v230 = vsel %vm228, %v229, %v162
    %v231 = vshrl.u32 %v230, 3
    %v232 = vand.u32 %v230, 7
    %v233 = vsub.s32 0, %v232
    %v234 = vsel %vm228, %v233, %v232
    %vm235 = vcmp.lt.s32.totalorder %v163, 0
    %v236 = vsub.s32 0, %v163
    %v237 = vsel %vm235, %v236, %v163
    %v238 = vshrl.u32 %v237, 3
    %v239 = vand.u32 %v237, 7
    %v240 = vsub.s32 0, %v239
    %v241 = vsel %vm235, %v240, %v239
    %vm242 = vcmp.lt.s32.totalorder %v164, 0
    %v243 = vsub.s32 0, %v164
    %v244 = vsel %vm242, %v243, %v164
    %v245 = vshrl.u32 %v244, 3
    %v246 = vand.u32 %v244, 7
    %v247 = vsub.s32 0, %v246
    %v248 = vsel %vm242, %v247, %v246
    %vm249 = vcmp.lt.s32.totalorder %v165, 0
    %v250 = vsub.s32 0, %v165
    %v251 = vsel %vm249, %v250, %v165
    %v252 = vshrl.u32 %v251, 3
    %v253 = vand.u32 %v251, 7
    %v254 = vsub.s32 0, %v253
    %v255 = vsel %vm249, %v254, %v253
    %vm256 = vcmp.lt.s32.totalorder %v166, 0
    %v257 = vsub.s32 0, %v166
    %v258 = vsel %vm256, %v257, %v166
    %v259 = vshrl.u32 %v258, 3
    %v260 = vand.u32 %v258, 7
    %v261 = vsub.s32 0, %v260
    %v262 = vsel %vm256, %v261, %v260
    %vm263 = vcmp.lt.s32.totalorder %v167, 0
    %v264 = vsub.s32 0, %v167
    %v265 = vsel %vm263, %v264, %v167
    %v266 = vshrl.u32 %v265, 3
    %v267 = vand.u32 %v265, 7
    %v268 = vsub.s32 0, %v267
    %v269 = vsel %vm263, %v268, %v267
    %vm270 = vcmp.lt.s32.totalorder %v168, 0
    %v271 = vsub.s32 0, %v168
    %v272 = vsel %vm270, %v271, %v168
    %v273 = vshrl.u32 %v272, 3
    %v274 = vand.u32 %v272, 7
    %v275 = vsub.s32 0, %v274
    %v276 = vsel %vm270, %v275, %v274
    %vm277 = vcmp.lt.s32.totalorder %v169, 0
    %v278 = vsub.s32 0, %v169
    %v279 = vsel %vm277, %v278, %v169
    %v280 = vshrl.u32 %v279, 3
    %v281 = vand.u32 %v279, 7
    %v282 = vsub.s32 0, %v281
    %v283 = vsel %vm277, %v282, %v281
    %vm284 = vcmp.ne.s32.totalorder %v178, 0
    %vm285 = vcmp.ne.s32.totalorder %v185, 0
    %vm286 = vcmp.ne.s32.totalorder %v192, 0
    %vm287 = vcmp.ne.s32.totalorder %v199, 0
    %vm288 = vcmp.ne.s32.totalorder %v206, 0
    %vm289 = vcmp.ne.s32.totalorder %v213, 0
    %vm290 = vcmp.ne.s32.totalorder %v220, 0
    %vm291 = vcmp.ne.s32.totalorder %v227, 0
    %vm292 = vcmp.ne.s32.totalorder %v234, 0
    %vm293 = vcmp.ne.s32.totalorder %v241, 0
    %vm294 = vcmp.ne.s32.totalorder %v248, 0
    %vm295 = vcmp.ne.s32.totalorder %v255, 0
    %vm296 = vcmp.ne.s32.totalorder %v262, 0
    %vm297 = vcmp.ne.s32.totalorder %v269, 0
    %vm298 = vcmp.ne.s32.totalorder %v276, 0
    %vm299 = vcmp.ne.s32.totalorder %v283, 0
    %vm300 = vcmp.lt.s32.totalorder %v178, 0
    %vm301 = vcmp.lt.s32.totalorder %v185, 0
    %vm302 = vcmp.lt.s32.totalorder %v192, 0
    %vm303 = vcmp.lt.s32.totalorder %v199, 0
    %vm304 = vcmp.lt.s32.totalorder %v206, 0
    %vm305 = vcmp.lt.s32.totalorder %v213, 0
    %vm306 = vcmp.lt.s32.totalorder %v220, 0
    %vm307 = vcmp.lt.s32.totalorder %v227, 0
    %vm308 = vcmp.lt.s32.totalorder %v234, 0
    %vm309 = vcmp.lt.s32.totalorder %v241, 0
    %vm310 = vcmp.lt.s32.totalorder %v248, 0
    %vm311 = vcmp.lt.s32.totalorder %v255, 0
    %vm312 = vcmp.lt.s32.totalorder %v262, 0
    %vm313 = vcmp.lt.s32.totalorder %v269, 0
    %vm314 = vcmp.lt.s32.totalorder %v276, 0
    %vm315 = vcmp.lt.s32.totalorder %v283, 0
    %vm316 = vmand %vm300, %vm284
    %vm317 = vmand %vm301, %vm285
    %vm318 = vmand %vm302, %vm286
    %vm319 = vmand %vm303, %vm287
    %vm320 = vmand %vm304, %vm288
    %vm321 = vmand %vm305, %vm289
    %vm322 = vmand %vm306, %vm290
    %vm323 = vmand %vm307, %vm291
    %vm324 = vmand %vm308, %vm292
    %vm325 = vmand %vm309, %vm293
    %vm326 = vmand %vm310, %vm294
    %vm327 = vmand %vm311, %vm295
    %vm328 = vmand %vm312, %vm296
    %vm329 = vmand %vm313, %vm297
    %vm330 = vmand %vm314, %vm298
    %vm331 = vmand %vm315, %vm299
    %v332 = vadd.s32 %v178, 8
    %v333 = vadd.s32 %v185, 8
    %v334 = vadd.s32 %v192, 8
    %v335 = vadd.s32 %v199, 8
    %v336 = vadd.s32 %v206, 8
    %v337 = vadd.s32 %v213, 8
    %v338 = vadd.s32 %v220, 8
    %v339 = vadd.s32 %v227, 8
    %v340 = vadd.s32 %v234, 8
    %v341 = vadd.s32 %v241, 8
    %v342 = vadd.s32 %v248, 8
    %v343 = vadd.s32 %v255, 8
    %v344 = vadd.s32 %v262, 8
    %v345 = vadd.s32 %v269, 8
    %v346 = vadd.s32 %v276, 8
    %v347 = vadd.s32 %v283, 8
    %v348 = vsel %vm316, %v332, %v178
    %v349 = vsel %vm317, %v333, %v185
    %v350 = vsel %vm318, %v334, %v192
    %v351 = vsel %vm319, %v335, %v199
    %v352 = vsel %vm320, %v336, %v206
    %v353 = vsel %vm321, %v337, %v213
    %v354 = vsel %vm322, %v338, %v220
    %v355 = vsel %vm323, %v339, %v227
    %v356 = vsel %vm324, %v340, %v234
    %v357 = vsel %vm325, %v341, %v241
    %v358 = vsel %vm326, %v342, %v248
    %v359 = vsel %vm327, %v343, %v255
    %v360 = vsel %vm328, %v344, %v262
    %v361 = vsel %vm329, %v345, %v269
    %v362 = vsel %vm330, %v346, %v276
    %v363 = vsel %vm331, %v347, %v283
    %vm364 = vcmp.eq.s32.totalorder %v348, %v171
    %vm365 = vcmp.eq.s32.totalorder %v349, %v171
    %vm366 = vcmp.eq.s32.totalorder %v350, %v171
    %vm367 = vcmp.eq.s32.totalorder %v351, %v171
    %vm368 = vcmp.eq.s32.totalorder %v352, %v171
    %vm369 = vcmp.eq.s32.totalorder %v353, %v171
    %vm370 = vcmp.eq.s32.totalorder %v354, %v171
    %vm371 = vcmp.eq.s32.totalorder %v355, %v171
    %vm372 = vcmp.eq.s32.totalorder %v356, %v171
    %vm373 = vcmp.eq.s32.totalorder %v357, %v171
    %vm374 = vcmp.eq.s32.totalorder %v358, %v171
    %vm375 = vcmp.eq.s32.totalorder %v359, %v171
    %vm376 = vcmp.eq.s32.totalorder %v360, %v171
    %vm377 = vcmp.eq.s32.totalorder %v361, %v171
    %vm378 = vcmp.eq.s32.totalorder %v362, %v171
    %vm379 = vcmp.eq.s32.totalorder %v363, %v171
    %v380 = vsel %vm364, 1, 0
    %v381 = vsel %vm365, 1, 0
    %v382 = vsel %vm366, 1, 0
    %v383 = vsel %vm367, 1, 0
    %v384 = vsel %vm368, 1, 0
    %v385 = vsel %vm369, 1, 0
    %v386 = vsel %vm370, 1, 0
    %v387 = vsel %vm371, 1, 0
    %v388 = vsel %vm372, 1, 0
    %v389 = vsel %vm373, 1, 0
    %v390 = vsel %vm374, 1, 0
    %v391 = vsel %vm375, 1, 0
    %v392 = vsel %vm376, 1, 0
    %v393 = vsel %vm377, 1, 0
    %v394 = vsel %vm378, 1, 0
    %v395 = vsel %vm379, 1, 0
    %v396 = vcvt.s32.f32 %v380
    %v397 = vcvt.s32.f32 %v381
    %v398 = vcvt.s32.f32 %v382
    %v399 = vcvt.s32.f32 %v383
    %v400 = vcvt.s32.f32 %v384
    %v401 = vcvt.s32.f32 %v385
    %v402 = vcvt.s32.f32 %v386
    %v403 = vcvt.s32.f32 %v387
    %v404 = vcvt.s32.f32 %v388
    %v405 = vcvt.s32.f32 %v389
    %v406 = vcvt.s32.f32 %v390
    %v407 = vcvt.s32.f32 %v391
    %v408 = vcvt.s32.f32 %v392
    %v409 = vcvt.s32.f32 %v393
    %v410 = vcvt.s32.f32 %v394
    %v411 = vcvt.s32.f32 %v395
    %vm412 = vcmp.lt.s32.totalorder %v171, 0
    %v413 = vsub.s32 0, %v171
    %v414 = vsel %vm412, %v413, %v171
    %v415 = vshrl.u32 %v414, 3
    %v416 = vand.u32 %v414, 7
    %v417 = vsub.s32 0, %v416
    %v418 = vsel %vm412, %v417, %v416
    %vm419 = vcmp.ne.s32.totalorder %v418, 0
    %vm420 = vcmp.lt.s32.totalorder %v418, 0
    %vm421 = vmand %vm420, %vm419
    %v422 = vadd.s32 %v418, 8
    %v423 = vsel %vm421, %v422, %v418
    %vm424 = vcmp.eq.s32.totalorder %v423, %v154
    %v425 = vsel %vm424, 1, 0
    %v426 = vcvt.s32.f32 %v425
    %v427 = vadd.s32 %v154, 128
    %v428 = vadd.s32 %v154, 136
    %v429 = vadd.s32 %v154, 144
    %v430 = vadd.s32 %v154, 152
    %v431 = vadd.s32 %v154, 160
    %v432 = vadd.s32 %v154, 168
    %v433 = vadd.s32 %v154, 176
    %v434 = vadd.s32 %v154, 184
    %v435 = vadd.s32 %v154, 192
    %v436 = vadd.s32 %v154, 200
    %v437 = vadd.s32 %v154, 208
    %v438 = vadd.s32 %v154, 216
    %v439 = vadd.s32 %v154, 224
    %v440 = vadd.s32 %v154, 232
    %v441 = vadd.s32 %v154, 240
    %v442 = vadd.s32 %v154, 248
    %v443 = vadd.s32 %v154, 256
    %v444 = vadd.s32 %v154, 264
    %v445 = vadd.s32 %v154, 272
    %v446 = vadd.s32 %v154, 280
    %v447 = vadd.s32 %v154, 288
    %v448 = vadd.s32 %v154, 296
    %v449 = vadd.s32 %v154, 304
    %v450 = vadd.s32 %v154, 312
    %v451 = vadd.s32 %v154, 320
    %v452 = vadd.s32 %v154, 328
    %v453 = vadd.s32 %v154, 336
    %v454 = vadd.s32 %v154, 344
    %v455 = vadd.s32 %v154, 352
    %v456 = vadd.s32 %v154, 360
    %v457 = vadd.s32 %v154, 368
    %v458 = vadd.s32 %v154, 376
    %v459 = vadd.s32 %v154, 384
    %v460 = vadd.s32 %v154, 392
    %v461 = vadd.s32 %v154, 400
    %v462 = vadd.s32 %v154, 408
    %v463 = vadd.s32 %v154, 416
    %v464 = vadd.s32 %v154, 424
    %v465 = vadd.s32 %v154, 432
    %v466 = vadd.s32 %v154, 440
    %v467 = vadd.s32 %v154, 448
    %v468 = vadd.s32 %v154, 456
    %v469 = vadd.s32 %v154, 464
    %v470 = vadd.s32 %v154, 472
    %v471 = vadd.s32 %v154, 480
    %v472 = vadd.s32 %v154, 488
    %v473 = vadd.s32 %v154, 496
    %v474 = vadd.s32 %v154, 504
    %vm475 = vcmp.lt.s32.totalorder %v154, 0
    %v476 = vsub.s32 0, %v154
    %v477 = vsel %vm475, %v476, %v154
    %v478 = vshrl.u32 %v477, 5
    %v479 = vand.u32 %v477, 31
    %v480 = vsub.s32 0, %v479
    %v481 = vsel %vm475, %v480, %v479
    %vm482 = vcmp.lt.s32.totalorder %v155, 0
    %v483 = vsub.s32 0, %v155
    %v484 = vsel %vm482, %v483, %v155
    %v485 = vshrl.u32 %v484, 5
    %v486 = vand.u32 %v484, 31
    %v487 = vsub.s32 0, %v486
    %v488 = vsel %vm482, %v487, %v486
    %vm489 = vcmp.lt.s32.totalorder %v156, 0
    %v490 = vsub.s32 0, %v156
    %v491 = vsel %vm489, %v490, %v156
    %v492 = vshrl.u32 %v491, 5
    %v493 = vand.u32 %v491, 31
    %v494 = vsub.s32 0, %v493
    %v495 = vsel %vm489, %v494, %v493
    %vm496 = vcmp.lt.s32.totalorder %v157, 0
    %v497 = vsub.s32 0, %v157
    %v498 = vsel %vm496, %v497, %v157
    %v499 = vshrl.u32 %v498, 5
    %v500 = vand.u32 %v498, 31
    %v501 = vsub.s32 0, %v500
    %v502 = vsel %vm496, %v501, %v500
    %vm503 = vcmp.lt.s32.totalorder %v158, 0
    %v504 = vsub.s32 0, %v158
    %v505 = vsel %vm503, %v504, %v158
    %v506 = vshrl.u32 %v505, 5
    %v507 = vand.u32 %v505, 31
    %v508 = vsub.s32 0, %v507
    %v509 = vsel %vm503, %v508, %v507
    %vm510 = vcmp.lt.s32.totalorder %v159, 0
    %v511 = vsub.s32 0, %v159
    %v512 = vsel %vm510, %v511, %v159
    %v513 = vshrl.u32 %v512, 5
    %v514 = vand.u32 %v512, 31
    %v515 = vsub.s32 0, %v514
    %v516 = vsel %vm510, %v515, %v514
    %vm517 = vcmp.lt.s32.totalorder %v160, 0
    %v518 = vsub.s32 0, %v160
    %v519 = vsel %vm517, %v518, %v160
    %v520 = vshrl.u32 %v519, 5
    %v521 = vand.u32 %v519, 31
    %v522 = vsub.s32 0, %v521
    %v523 = vsel %vm517, %v522, %v521
    %vm524 = vcmp.lt.s32.totalorder %v161, 0
    %v525 = vsub.s32 0, %v161
    %v526 = vsel %vm524, %v525, %v161
    %v527 = vshrl.u32 %v526, 5
    %v528 = vand.u32 %v526, 31
    %v529 = vsub.s32 0, %v528
    %v530 = vsel %vm524, %v529, %v528
    %vm531 = vcmp.lt.s32.totalorder %v162, 0
    %v532 = vsub.s32 0, %v162
    %v533 = vsel %vm531, %v532, %v162
    %v534 = vshrl.u32 %v533, 5
    %v535 = vand.u32 %v533, 31
    %v536 = vsub.s32 0, %v535
    %v537 = vsel %vm531, %v536, %v535
    %vm538 = vcmp.lt.s32.totalorder %v163, 0
    %v539 = vsub.s32 0, %v163
    %v540 = vsel %vm538, %v539, %v163
    %v541 = vshrl.u32 %v540, 5
    %v542 = vand.u32 %v540, 31
    %v543 = vsub.s32 0, %v542
    %v544 = vsel %vm538, %v543, %v542
    %vm545 = vcmp.lt.s32.totalorder %v164, 0
    %v546 = vsub.s32 0, %v164
    %v547 = vsel %vm545, %v546, %v164
    %v548 = vshrl.u32 %v547, 5
    %v549 = vand.u32 %v547, 31
    %v550 = vsub.s32 0, %v549
    %v551 = vsel %vm545, %v550, %v549
    %vm552 = vcmp.lt.s32.totalorder %v165, 0
    %v553 = vsub.s32 0, %v165
    %v554 = vsel %vm552, %v553, %v165
    %v555 = vshrl.u32 %v554, 5
    %v556 = vand.u32 %v554, 31
    %v557 = vsub.s32 0, %v556
    %v558 = vsel %vm552, %v557, %v556
    %vm559 = vcmp.lt.s32.totalorder %v166, 0
    %v560 = vsub.s32 0, %v166
    %v561 = vsel %vm559, %v560, %v166
    %v562 = vshrl.u32 %v561, 5
    %v563 = vand.u32 %v561, 31
    %v564 = vsub.s32 0, %v563
    %v565 = vsel %vm559, %v564, %v563
    %vm566 = vcmp.lt.s32.totalorder %v167, 0
    %v567 = vsub.s32 0, %v167
    %v568 = vsel %vm566, %v567, %v167
    %v569 = vshrl.u32 %v568, 5
    %v570 = vand.u32 %v568, 31
    %v571 = vsub.s32 0, %v570
    %v572 = vsel %vm566, %v571, %v570
    %vm573 = vcmp.lt.s32.totalorder %v168, 0
    %v574 = vsub.s32 0, %v168
    %v575 = vsel %vm573, %v574, %v168
    %v576 = vshrl.u32 %v575, 5
    %v577 = vand.u32 %v575, 31
    %v578 = vsub.s32 0, %v577
    %v579 = vsel %vm573, %v578, %v577
    %vm580 = vcmp.lt.s32.totalorder %v169, 0
    %v581 = vsub.s32 0, %v169
    %v582 = vsel %vm580, %v581, %v169
    %v583 = vshrl.u32 %v582, 5
    %v584 = vand.u32 %v582, 31
    %v585 = vsub.s32 0, %v584
    %v586 = vsel %vm580, %v585, %v584
    %vm587 = vcmp.lt.s32.totalorder %v427, 0
    %v588 = vsub.s32 0, %v427
    %v589 = vsel %vm587, %v588, %v427
    %v590 = vshrl.u32 %v589, 5
    %v591 = vand.u32 %v589, 31
    %v592 = vsub.s32 0, %v591
    %v593 = vsel %vm587, %v592, %v591
    %vm594 = vcmp.lt.s32.totalorder %v428, 0
    %v595 = vsub.s32 0, %v428
    %v596 = vsel %vm594, %v595, %v428
    %v597 = vshrl.u32 %v596, 5
    %v598 = vand.u32 %v596, 31
    %v599 = vsub.s32 0, %v598
    %v600 = vsel %vm594, %v599, %v598
    %vm601 = vcmp.lt.s32.totalorder %v429, 0
    %v602 = vsub.s32 0, %v429
    %v603 = vsel %vm601, %v602, %v429
    %v604 = vshrl.u32 %v603, 5
    %v605 = vand.u32 %v603, 31
    %v606 = vsub.s32 0, %v605
    %v607 = vsel %vm601, %v606, %v605
    %vm608 = vcmp.lt.s32.totalorder %v430, 0
    %v609 = vsub.s32 0, %v430
    %v610 = vsel %vm608, %v609, %v430
    %v611 = vshrl.u32 %v610, 5
    %v612 = vand.u32 %v610, 31
    %v613 = vsub.s32 0, %v612
    %v614 = vsel %vm608, %v613, %v612
    %vm615 = vcmp.lt.s32.totalorder %v431, 0
    %v616 = vsub.s32 0, %v431
    %v617 = vsel %vm615, %v616, %v431
    %v618 = vshrl.u32 %v617, 5
    %v619 = vand.u32 %v617, 31
    %v620 = vsub.s32 0, %v619
    %v621 = vsel %vm615, %v620, %v619
    %vm622 = vcmp.lt.s32.totalorder %v432, 0
    %v623 = vsub.s32 0, %v432
    %v624 = vsel %vm622, %v623, %v432
    %v625 = vshrl.u32 %v624, 5
    %v626 = vand.u32 %v624, 31
    %v627 = vsub.s32 0, %v626
    %v628 = vsel %vm622, %v627, %v626
    %vm629 = vcmp.lt.s32.totalorder %v433, 0
    %v630 = vsub.s32 0, %v433
    %v631 = vsel %vm629, %v630, %v433
    %v632 = vshrl.u32 %v631, 5
    %v633 = vand.u32 %v631, 31
    %v634 = vsub.s32 0, %v633
    %v635 = vsel %vm629, %v634, %v633
    %vm636 = vcmp.lt.s32.totalorder %v434, 0
    %v637 = vsub.s32 0, %v434
    %v638 = vsel %vm636, %v637, %v434
    %v639 = vshrl.u32 %v638, 5
    %v640 = vand.u32 %v638, 31
    %v641 = vsub.s32 0, %v640
    %v642 = vsel %vm636, %v641, %v640
    %vm643 = vcmp.lt.s32.totalorder %v435, 0
    %v644 = vsub.s32 0, %v435
    %v645 = vsel %vm643, %v644, %v435
    %v646 = vshrl.u32 %v645, 5
    %v647 = vand.u32 %v645, 31
    %v648 = vsub.s32 0, %v647
    %v649 = vsel %vm643, %v648, %v647
    %vm650 = vcmp.lt.s32.totalorder %v436, 0
    %v651 = vsub.s32 0, %v436
    %v652 = vsel %vm650, %v651, %v436
    %v653 = vshrl.u32 %v652, 5
    %v654 = vand.u32 %v652, 31
    %v655 = vsub.s32 0, %v654
    %v656 = vsel %vm650, %v655, %v654
    %vm657 = vcmp.lt.s32.totalorder %v437, 0
    %v658 = vsub.s32 0, %v437
    %v659 = vsel %vm657, %v658, %v437
    %v660 = vshrl.u32 %v659, 5
    %v661 = vand.u32 %v659, 31
    %v662 = vsub.s32 0, %v661
    %v663 = vsel %vm657, %v662, %v661
    %vm664 = vcmp.lt.s32.totalorder %v438, 0
    %v665 = vsub.s32 0, %v438
    %v666 = vsel %vm664, %v665, %v438
    %v667 = vshrl.u32 %v666, 5
    %v668 = vand.u32 %v666, 31
    %v669 = vsub.s32 0, %v668
    %v670 = vsel %vm664, %v669, %v668
    %vm671 = vcmp.lt.s32.totalorder %v439, 0
    %v672 = vsub.s32 0, %v439
    %v673 = vsel %vm671, %v672, %v439
    %v674 = vshrl.u32 %v673, 5
    %v675 = vand.u32 %v673, 31
    %v676 = vsub.s32 0, %v675
    %v677 = vsel %vm671, %v676, %v675
    %vm678 = vcmp.lt.s32.totalorder %v440, 0
    %v679 = vsub.s32 0, %v440
    %v680 = vsel %vm678, %v679, %v440
    %v681 = vshrl.u32 %v680, 5
    %v682 = vand.u32 %v680, 31
    %v683 = vsub.s32 0, %v682
    %v684 = vsel %vm678, %v683, %v682
    %vm685 = vcmp.lt.s32.totalorder %v441, 0
    %v686 = vsub.s32 0, %v441
    %v687 = vsel %vm685, %v686, %v441
    %v688 = vshrl.u32 %v687, 5
    %v689 = vand.u32 %v687, 31
    %v690 = vsub.s32 0, %v689
    %v691 = vsel %vm685, %v690, %v689
    %vm692 = vcmp.lt.s32.totalorder %v442, 0
    %v693 = vsub.s32 0, %v442
    %v694 = vsel %vm692, %v693, %v442
    %v695 = vshrl.u32 %v694, 5
    %v696 = vand.u32 %v694, 31
    %v697 = vsub.s32 0, %v696
    %v698 = vsel %vm692, %v697, %v696
    %vm699 = vcmp.lt.s32.totalorder %v443, 0
    %v700 = vsub.s32 0, %v443
    %v701 = vsel %vm699, %v700, %v443
    %v702 = vshrl.u32 %v701, 5
    %v703 = vand.u32 %v701, 31
    %v704 = vsub.s32 0, %v703
    %v705 = vsel %vm699, %v704, %v703
    %vm706 = vcmp.lt.s32.totalorder %v444, 0
    %v707 = vsub.s32 0, %v444
    %v708 = vsel %vm706, %v707, %v444
    %v709 = vshrl.u32 %v708, 5
    %v710 = vand.u32 %v708, 31
    %v711 = vsub.s32 0, %v710
    %v712 = vsel %vm706, %v711, %v710
    %vm713 = vcmp.lt.s32.totalorder %v445, 0
    %v714 = vsub.s32 0, %v445
    %v715 = vsel %vm713, %v714, %v445
    %v716 = vshrl.u32 %v715, 5
    %v717 = vand.u32 %v715, 31
    %v718 = vsub.s32 0, %v717
    %v719 = vsel %vm713, %v718, %v717
    %vm720 = vcmp.lt.s32.totalorder %v446, 0
    %v721 = vsub.s32 0, %v446
    %v722 = vsel %vm720, %v721, %v446
    %v723 = vshrl.u32 %v722, 5
    %v724 = vand.u32 %v722, 31
    %v725 = vsub.s32 0, %v724
    %v726 = vsel %vm720, %v725, %v724
    %vm727 = vcmp.lt.s32.totalorder %v447, 0
    %v728 = vsub.s32 0, %v447
    %v729 = vsel %vm727, %v728, %v447
    %v730 = vshrl.u32 %v729, 5
    %v731 = vand.u32 %v729, 31
    %v732 = vsub.s32 0, %v731
    %v733 = vsel %vm727, %v732, %v731
    %vm734 = vcmp.lt.s32.totalorder %v448, 0
    %v735 = vsub.s32 0, %v448
    %v736 = vsel %vm734, %v735, %v448
    %v737 = vshrl.u32 %v736, 5
    %v738 = vand.u32 %v736, 31
    %v739 = vsub.s32 0, %v738
    %v740 = vsel %vm734, %v739, %v738
    %vm741 = vcmp.lt.s32.totalorder %v449, 0
    %v742 = vsub.s32 0, %v449
    %v743 = vsel %vm741, %v742, %v449
    %v744 = vshrl.u32 %v743, 5
    %v745 = vand.u32 %v743, 31
    %v746 = vsub.s32 0, %v745
    %v747 = vsel %vm741, %v746, %v745
    %vm748 = vcmp.lt.s32.totalorder %v450, 0
    %v749 = vsub.s32 0, %v450
    %v750 = vsel %vm748, %v749, %v450
    %v751 = vshrl.u32 %v750, 5
    %v752 = vand.u32 %v750, 31
    %v753 = vsub.s32 0, %v752
    %v754 = vsel %vm748, %v753, %v752
    %vm755 = vcmp.lt.s32.totalorder %v451, 0
    %v756 = vsub.s32 0, %v451
    %v757 = vsel %vm755, %v756, %v451
    %v758 = vshrl.u32 %v757, 5
    %v759 = vand.u32 %v757, 31
    %v760 = vsub.s32 0, %v759
    %v761 = vsel %vm755, %v760, %v759
    %vm762 = vcmp.lt.s32.totalorder %v452, 0
    %v763 = vsub.s32 0, %v452
    %v764 = vsel %vm762, %v763, %v452
    %v765 = vshrl.u32 %v764, 5
    %v766 = vand.u32 %v764, 31
    %v767 = vsub.s32 0, %v766
    %v768 = vsel %vm762, %v767, %v766
    %vm769 = vcmp.lt.s32.totalorder %v453, 0
    %v770 = vsub.s32 0, %v453
    %v771 = vsel %vm769, %v770, %v453
    %v772 = vshrl.u32 %v771, 5
    %v773 = vand.u32 %v771, 31
    %v774 = vsub.s32 0, %v773
    %v775 = vsel %vm769, %v774, %v773
    %vm776 = vcmp.lt.s32.totalorder %v454, 0
    %v777 = vsub.s32 0, %v454
    %v778 = vsel %vm776, %v777, %v454
    %v779 = vshrl.u32 %v778, 5
    %v780 = vand.u32 %v778, 31
    %v781 = vsub.s32 0, %v780
    %v782 = vsel %vm776, %v781, %v780
    %vm783 = vcmp.lt.s32.totalorder %v455, 0
    %v784 = vsub.s32 0, %v455
    %v785 = vsel %vm783, %v784, %v455
    %v786 = vshrl.u32 %v785, 5
    %v787 = vand.u32 %v785, 31
    %v788 = vsub.s32 0, %v787
    %v789 = vsel %vm783, %v788, %v787
    %vm790 = vcmp.lt.s32.totalorder %v456, 0
    %v791 = vsub.s32 0, %v456
    %v792 = vsel %vm790, %v791, %v456
    %v793 = vshrl.u32 %v792, 5
    %v794 = vand.u32 %v792, 31
    %v795 = vsub.s32 0, %v794
    %v796 = vsel %vm790, %v795, %v794
    %vm797 = vcmp.lt.s32.totalorder %v457, 0
    %v798 = vsub.s32 0, %v457
    %v799 = vsel %vm797, %v798, %v457
    %v800 = vshrl.u32 %v799, 5
    %v801 = vand.u32 %v799, 31
    %v802 = vsub.s32 0, %v801
    %v803 = vsel %vm797, %v802, %v801
    %vm804 = vcmp.lt.s32.totalorder %v458, 0
    %v805 = vsub.s32 0, %v458
    %v806 = vsel %vm804, %v805, %v458
    %v807 = vshrl.u32 %v806, 5
    %v808 = vand.u32 %v806, 31
    %v809 = vsub.s32 0, %v808
    %v810 = vsel %vm804, %v809, %v808
    %vm811 = vcmp.lt.s32.totalorder %v459, 0
    %v812 = vsub.s32 0, %v459
    %v813 = vsel %vm811, %v812, %v459
    %v814 = vshrl.u32 %v813, 5
    %v815 = vand.u32 %v813, 31
    %v816 = vsub.s32 0, %v815
    %v817 = vsel %vm811, %v816, %v815
    %vm818 = vcmp.lt.s32.totalorder %v460, 0
    %v819 = vsub.s32 0, %v460
    %v820 = vsel %vm818, %v819, %v460
    %v821 = vshrl.u32 %v820, 5
    %v822 = vand.u32 %v820, 31
    %v823 = vsub.s32 0, %v822
    %v824 = vsel %vm818, %v823, %v822
    %vm825 = vcmp.lt.s32.totalorder %v461, 0
    %v826 = vsub.s32 0, %v461
    %v827 = vsel %vm825, %v826, %v461
    %v828 = vshrl.u32 %v827, 5
    %v829 = vand.u32 %v827, 31
    %v830 = vsub.s32 0, %v829
    %v831 = vsel %vm825, %v830, %v829
    %vm832 = vcmp.lt.s32.totalorder %v462, 0
    %v833 = vsub.s32 0, %v462
    %v834 = vsel %vm832, %v833, %v462
    %v835 = vshrl.u32 %v834, 5
    %v836 = vand.u32 %v834, 31
    %v837 = vsub.s32 0, %v836
    %v838 = vsel %vm832, %v837, %v836
    %vm839 = vcmp.lt.s32.totalorder %v463, 0
    %v840 = vsub.s32 0, %v463
    %v841 = vsel %vm839, %v840, %v463
    %v842 = vshrl.u32 %v841, 5
    %v843 = vand.u32 %v841, 31
    %v844 = vsub.s32 0, %v843
    %v845 = vsel %vm839, %v844, %v843
    %vm846 = vcmp.lt.s32.totalorder %v464, 0
    %v847 = vsub.s32 0, %v464
    %v848 = vsel %vm846, %v847, %v464
    %v849 = vshrl.u32 %v848, 5
    %v850 = vand.u32 %v848, 31
    %v851 = vsub.s32 0, %v850
    %v852 = vsel %vm846, %v851, %v850
    %vm853 = vcmp.lt.s32.totalorder %v465, 0
    %v854 = vsub.s32 0, %v465
    %v855 = vsel %vm853, %v854, %v465
    %v856 = vshrl.u32 %v855, 5
    %v857 = vand.u32 %v855, 31
    %v858 = vsub.s32 0, %v857
    %v859 = vsel %vm853, %v858, %v857
    %vm860 = vcmp.lt.s32.totalorder %v466, 0
    %v861 = vsub.s32 0, %v466
    %v862 = vsel %vm860, %v861, %v466
    %v863 = vshrl.u32 %v862, 5
    %v864 = vand.u32 %v862, 31
    %v865 = vsub.s32 0, %v864
    %v866 = vsel %vm860, %v865, %v864
    %vm867 = vcmp.lt.s32.totalorder %v467, 0
    %v868 = vsub.s32 0, %v467
    %v869 = vsel %vm867, %v868, %v467
    %v870 = vshrl.u32 %v869, 5
    %v871 = vand.u32 %v869, 31
    %v872 = vsub.s32 0, %v871
    %v873 = vsel %vm867, %v872, %v871
    %vm874 = vcmp.lt.s32.totalorder %v468, 0
    %v875 = vsub.s32 0, %v468
    %v876 = vsel %vm874, %v875, %v468
    %v877 = vshrl.u32 %v876, 5
    %v878 = vand.u32 %v876, 31
    %v879 = vsub.s32 0, %v878
    %v880 = vsel %vm874, %v879, %v878
    %vm881 = vcmp.lt.s32.totalorder %v469, 0
    %v882 = vsub.s32 0, %v469
    %v883 = vsel %vm881, %v882, %v469
    %v884 = vshrl.u32 %v883, 5
    %v885 = vand.u32 %v883, 31
    %v886 = vsub.s32 0, %v885
    %v887 = vsel %vm881, %v886, %v885
    %vm888 = vcmp.lt.s32.totalorder %v470, 0
    %v889 = vsub.s32 0, %v470
    %v890 = vsel %vm888, %v889, %v470
    %v891 = vshrl.u32 %v890, 5
    %v892 = vand.u32 %v890, 31
    %v893 = vsub.s32 0, %v892
    %v894 = vsel %vm888, %v893, %v892
    %vm895 = vcmp.lt.s32.totalorder %v471, 0
    %v896 = vsub.s32 0, %v471
    %v897 = vsel %vm895, %v896, %v471
    %v898 = vshrl.u32 %v897, 5
    %v899 = vand.u32 %v897, 31
    %v900 = vsub.s32 0, %v899
    %v901 = vsel %vm895, %v900, %v899
    %vm902 = vcmp.lt.s32.totalorder %v472, 0
    %v903 = vsub.s32 0, %v472
    %v904 = vsel %vm902, %v903, %v472
    %v905 = vshrl.u32 %v904, 5
    %v906 = vand.u32 %v904, 31
    %v907 = vsub.s32 0, %v906
    %v908 = vsel %vm902, %v907, %v906
    %vm909 = vcmp.lt.s32.totalorder %v473, 0
    %v910 = vsub.s32 0, %v473
    %v911 = vsel %vm909, %v910, %v473
    %v912 = vshrl.u32 %v911, 5
    %v913 = vand.u32 %v911, 31
    %v914 = vsub.s32 0, %v913
    %v915 = vsel %vm909, %v914, %v913
    %vm916 = vcmp.lt.s32.totalorder %v474, 0
    %v917 = vsub.s32 0, %v474
    %v918 = vsel %vm916, %v917, %v474
    %v919 = vshrl.u32 %v918, 5
    %v920 = vand.u32 %v918, 31
    %v921 = vsub.s32 0, %v920
    %v922 = vsel %vm916, %v921, %v920
    %vm923 = vcmp.ne.s32.totalorder %v481, 0
    %vm924 = vcmp.ne.s32.totalorder %v488, 0
    %vm925 = vcmp.ne.s32.totalorder %v495, 0
    %vm926 = vcmp.ne.s32.totalorder %v502, 0
    %vm927 = vcmp.ne.s32.totalorder %v509, 0
    %vm928 = vcmp.ne.s32.totalorder %v516, 0
    %vm929 = vcmp.ne.s32.totalorder %v523, 0
    %vm930 = vcmp.ne.s32.totalorder %v530, 0
    %vm931 = vcmp.ne.s32.totalorder %v537, 0
    %vm932 = vcmp.ne.s32.totalorder %v544, 0
    %vm933 = vcmp.ne.s32.totalorder %v551, 0
    %vm934 = vcmp.ne.s32.totalorder %v558, 0
    %vm935 = vcmp.ne.s32.totalorder %v565, 0
    %vm936 = vcmp.ne.s32.totalorder %v572, 0
    %vm937 = vcmp.ne.s32.totalorder %v579, 0
    %vm938 = vcmp.ne.s32.totalorder %v586, 0
    %vm939 = vcmp.ne.s32.totalorder %v593, 0
    %vm940 = vcmp.ne.s32.totalorder %v600, 0
    %vm941 = vcmp.ne.s32.totalorder %v607, 0
    %vm942 = vcmp.ne.s32.totalorder %v614, 0
    %vm943 = vcmp.ne.s32.totalorder %v621, 0
    %vm944 = vcmp.ne.s32.totalorder %v628, 0
    %vm945 = vcmp.ne.s32.totalorder %v635, 0
    %vm946 = vcmp.ne.s32.totalorder %v642, 0
    %vm947 = vcmp.ne.s32.totalorder %v649, 0
    %vm948 = vcmp.ne.s32.totalorder %v656, 0
    %vm949 = vcmp.ne.s32.totalorder %v663, 0
    %vm950 = vcmp.ne.s32.totalorder %v670, 0
    %vm951 = vcmp.ne.s32.totalorder %v677, 0
    %vm952 = vcmp.ne.s32.totalorder %v684, 0
    %vm953 = vcmp.ne.s32.totalorder %v691, 0
    %vm954 = vcmp.ne.s32.totalorder %v698, 0
    %vm955 = vcmp.ne.s32.totalorder %v705, 0
    %vm956 = vcmp.ne.s32.totalorder %v712, 0
    %vm957 = vcmp.ne.s32.totalorder %v719, 0
    %vm958 = vcmp.ne.s32.totalorder %v726, 0
    %vm959 = vcmp.ne.s32.totalorder %v733, 0
    %vm960 = vcmp.ne.s32.totalorder %v740, 0
    %vm961 = vcmp.ne.s32.totalorder %v747, 0
    %vm962 = vcmp.ne.s32.totalorder %v754, 0
    %vm963 = vcmp.ne.s32.totalorder %v761, 0
    %vm964 = vcmp.ne.s32.totalorder %v768, 0
    %vm965 = vcmp.ne.s32.totalorder %v775, 0
    %vm966 = vcmp.ne.s32.totalorder %v782, 0
    %vm967 = vcmp.ne.s32.totalorder %v789, 0
    %vm968 = vcmp.ne.s32.totalorder %v796, 0
    %vm969 = vcmp.ne.s32.totalorder %v803, 0
    %vm970 = vcmp.ne.s32.totalorder %v810, 0
    %vm971 = vcmp.ne.s32.totalorder %v817, 0
    %vm972 = vcmp.ne.s32.totalorder %v824, 0
    %vm973 = vcmp.ne.s32.totalorder %v831, 0
    %vm974 = vcmp.ne.s32.totalorder %v838, 0
    %vm975 = vcmp.ne.s32.totalorder %v845, 0
    %vm976 = vcmp.ne.s32.totalorder %v852, 0
    %vm977 = vcmp.ne.s32.totalorder %v859, 0
    %vm978 = vcmp.ne.s32.totalorder %v866, 0
    %vm979 = vcmp.ne.s32.totalorder %v873, 0
    %vm980 = vcmp.ne.s32.totalorder %v880, 0
    %vm981 = vcmp.ne.s32.totalorder %v887, 0
    %vm982 = vcmp.ne.s32.totalorder %v894, 0
    %vm983 = vcmp.ne.s32.totalorder %v901, 0
    %vm984 = vcmp.ne.s32.totalorder %v908, 0
    %vm985 = vcmp.ne.s32.totalorder %v915, 0
    %vm986 = vcmp.ne.s32.totalorder %v922, 0
    %vm987 = vcmp.lt.s32.totalorder %v481, 0
    %vm988 = vcmp.lt.s32.totalorder %v488, 0
    %vm989 = vcmp.lt.s32.totalorder %v495, 0
    %vm990 = vcmp.lt.s32.totalorder %v502, 0
    %vm991 = vcmp.lt.s32.totalorder %v509, 0
    %vm992 = vcmp.lt.s32.totalorder %v516, 0
    %vm993 = vcmp.lt.s32.totalorder %v523, 0
    %vm994 = vcmp.lt.s32.totalorder %v530, 0
    %vm995 = vcmp.lt.s32.totalorder %v537, 0
    %vm996 = vcmp.lt.s32.totalorder %v544, 0
    %vm997 = vcmp.lt.s32.totalorder %v551, 0
    %vm998 = vcmp.lt.s32.totalorder %v558, 0
    %vm999 = vcmp.lt.s32.totalorder %v565, 0
    %vm1000 = vcmp.lt.s32.totalorder %v572, 0
    %vm1001 = vcmp.lt.s32.totalorder %v579, 0
    %vm1002 = vcmp.lt.s32.totalorder %v586, 0
    %vm1003 = vcmp.lt.s32.totalorder %v593, 0
    %vm1004 = vcmp.lt.s32.totalorder %v600, 0
    %vm1005 = vcmp.lt.s32.totalorder %v607, 0
    %vm1006 = vcmp.lt.s32.totalorder %v614, 0
    %vm1007 = vcmp.lt.s32.totalorder %v621, 0
    %vm1008 = vcmp.lt.s32.totalorder %v628, 0
    %vm1009 = vcmp.lt.s32.totalorder %v635, 0
    %vm1010 = vcmp.lt.s32.totalorder %v642, 0
    %vm1011 = vcmp.lt.s32.totalorder %v649, 0
    %vm1012 = vcmp.lt.s32.totalorder %v656, 0
    %vm1013 = vcmp.lt.s32.totalorder %v663, 0
    %vm1014 = vcmp.lt.s32.totalorder %v670, 0
    %vm1015 = vcmp.lt.s32.totalorder %v677, 0
    %vm1016 = vcmp.lt.s32.totalorder %v684, 0
    %vm1017 = vcmp.lt.s32.totalorder %v691, 0
    %vm1018 = vcmp.lt.s32.totalorder %v698, 0
    %vm1019 = vcmp.lt.s32.totalorder %v705, 0
    %vm1020 = vcmp.lt.s32.totalorder %v712, 0
    %vm1021 = vcmp.lt.s32.totalorder %v719, 0
    %vm1022 = vcmp.lt.s32.totalorder %v726, 0
    %vm1023 = vcmp.lt.s32.totalorder %v733, 0
    %vm1024 = vcmp.lt.s32.totalorder %v740, 0
    %vm1025 = vcmp.lt.s32.totalorder %v747, 0
    %vm1026 = vcmp.lt.s32.totalorder %v754, 0
    %vm1027 = vcmp.lt.s32.totalorder %v761, 0
    %vm1028 = vcmp.lt.s32.totalorder %v768, 0
    %vm1029 = vcmp.lt.s32.totalorder %v775, 0
    %vm1030 = vcmp.lt.s32.totalorder %v782, 0
    %vm1031 = vcmp.lt.s32.totalorder %v789, 0
    %vm1032 = vcmp.lt.s32.totalorder %v796, 0
    %vm1033 = vcmp.lt.s32.totalorder %v803, 0
    %vm1034 = vcmp.lt.s32.totalorder %v810, 0
    %vm1035 = vcmp.lt.s32.totalorder %v817, 0
    %vm1036 = vcmp.lt.s32.totalorder %v824, 0
    %vm1037 = vcmp.lt.s32.totalorder %v831, 0
    %vm1038 = vcmp.lt.s32.totalorder %v838, 0
    %vm1039 = vcmp.lt.s32.totalorder %v845, 0
    %vm1040 = vcmp.lt.s32.totalorder %v852, 0
    %vm1041 = vcmp.lt.s32.totalorder %v859, 0
    %vm1042 = vcmp.lt.s32.totalorder %v866, 0
    %vm1043 = vcmp.lt.s32.totalorder %v873, 0
    %vm1044 = vcmp.lt.s32.totalorder %v880, 0
    %vm1045 = vcmp.lt.s32.totalorder %v887, 0
    %vm1046 = vcmp.lt.s32.totalorder %v894, 0
    %vm1047 = vcmp.lt.s32.totalorder %v901, 0
    %vm1048 = vcmp.lt.s32.totalorder %v908, 0
    %vm1049 = vcmp.lt.s32.totalorder %v915, 0
    %vm1050 = vcmp.lt.s32.totalorder %v922, 0
    %vm1051 = vmand %vm987, %vm923
    %vm1052 = vmand %vm988, %vm924
    %vm1053 = vmand %vm989, %vm925
    %vm1054 = vmand %vm990, %vm926
    %vm1055 = vmand %vm991, %vm927
    %vm1056 = vmand %vm992, %vm928
    %vm1057 = vmand %vm993, %vm929
    %vm1058 = vmand %vm994, %vm930
    %vm1059 = vmand %vm995, %vm931
    %vm1060 = vmand %vm996, %vm932
    %vm1061 = vmand %vm997, %vm933
    %vm1062 = vmand %vm998, %vm934
    %vm1063 = vmand %vm999, %vm935
    %vm1064 = vmand %vm1000, %vm936
    %vm1065 = vmand %vm1001, %vm937
    %vm1066 = vmand %vm1002, %vm938
    %vm1067 = vmand %vm1003, %vm939
    %vm1068 = vmand %vm1004, %vm940
    %vm1069 = vmand %vm1005, %vm941
    %vm1070 = vmand %vm1006, %vm942
    %vm1071 = vmand %vm1007, %vm943
    %vm1072 = vmand %vm1008, %vm944
    %vm1073 = vmand %vm1009, %vm945
    %vm1074 = vmand %vm1010, %vm946
    %vm1075 = vmand %vm1011, %vm947
    %vm1076 = vmand %vm1012, %vm948
    %vm1077 = vmand %vm1013, %vm949
    %vm1078 = vmand %vm1014, %vm950
    %vm1079 = vmand %vm1015, %vm951
    %vm1080 = vmand %vm1016, %vm952
    %vm1081 = vmand %vm1017, %vm953
    %vm1082 = vmand %vm1018, %vm954
    %vm1083 = vmand %vm1019, %vm955
    %vm1084 = vmand %vm1020, %vm956
    %vm1085 = vmand %vm1021, %vm957
    %vm1086 = vmand %vm1022, %vm958
    %vm1087 = vmand %vm1023, %vm959
    %vm1088 = vmand %vm1024, %vm960
    %vm1089 = vmand %vm1025, %vm961
    %vm1090 = vmand %vm1026, %vm962
    %vm1091 = vmand %vm1027, %vm963
    %vm1092 = vmand %vm1028, %vm964
    %vm1093 = vmand %vm1029, %vm965
    %vm1094 = vmand %vm1030, %vm966
    %vm1095 = vmand %vm1031, %vm967
    %vm1096 = vmand %vm1032, %vm968
    %vm1097 = vmand %vm1033, %vm969
    %vm1098 = vmand %vm1034, %vm970
    %vm1099 = vmand %vm1035, %vm971
    %vm1100 = vmand %vm1036, %vm972
    %vm1101 = vmand %vm1037, %vm973
    %vm1102 = vmand %vm1038, %vm974
    %vm1103 = vmand %vm1039, %vm975
    %vm1104 = vmand %vm1040, %vm976
    %vm1105 = vmand %vm1041, %vm977
    %vm1106 = vmand %vm1042, %vm978
    %vm1107 = vmand %vm1043, %vm979
    %vm1108 = vmand %vm1044, %vm980
    %vm1109 = vmand %vm1045, %vm981
    %vm1110 = vmand %vm1046, %vm982
    %vm1111 = vmand %vm1047, %vm983
    %vm1112 = vmand %vm1048, %vm984
    %vm1113 = vmand %vm1049, %vm985
    %vm1114 = vmand %vm1050, %vm986
    %v1115 = vadd.s32 %v481, 32
    %v1116 = vadd.s32 %v488, 32
    %v1117 = vadd.s32 %v495, 32
    %v1118 = vadd.s32 %v502, 32
    %v1119 = vadd.s32 %v509, 32
    %v1120 = vadd.s32 %v516, 32
    %v1121 = vadd.s32 %v523, 32
    %v1122 = vadd.s32 %v530, 32
    %v1123 = vadd.s32 %v537, 32
    %v1124 = vadd.s32 %v544, 32
    %v1125 = vadd.s32 %v551, 32
    %v1126 = vadd.s32 %v558, 32
    %v1127 = vadd.s32 %v565, 32
    %v1128 = vadd.s32 %v572, 32
    %v1129 = vadd.s32 %v579, 32
    %v1130 = vadd.s32 %v586, 32
    %v1131 = vadd.s32 %v593, 32
    %v1132 = vadd.s32 %v600, 32
    %v1133 = vadd.s32 %v607, 32
    %v1134 = vadd.s32 %v614, 32
    %v1135 = vadd.s32 %v621, 32
    %v1136 = vadd.s32 %v628, 32
    %v1137 = vadd.s32 %v635, 32
    %v1138 = vadd.s32 %v642, 32
    %v1139 = vadd.s32 %v649, 32
    %v1140 = vadd.s32 %v656, 32
    %v1141 = vadd.s32 %v663, 32
    %v1142 = vadd.s32 %v670, 32
    %v1143 = vadd.s32 %v677, 32
    %v1144 = vadd.s32 %v684, 32
    %v1145 = vadd.s32 %v691, 32
    %v1146 = vadd.s32 %v698, 32
    %v1147 = vadd.s32 %v705, 32
    %v1148 = vadd.s32 %v712, 32
    %v1149 = vadd.s32 %v719, 32
    %v1150 = vadd.s32 %v726, 32
    %v1151 = vadd.s32 %v733, 32
    %v1152 = vadd.s32 %v740, 32
    %v1153 = vadd.s32 %v747, 32
    %v1154 = vadd.s32 %v754, 32
    %v1155 = vadd.s32 %v761, 32
    %v1156 = vadd.s32 %v768, 32
    %v1157 = vadd.s32 %v775, 32
    %v1158 = vadd.s32 %v782, 32
    %v1159 = vadd.s32 %v789, 32
    %v1160 = vadd.s32 %v796, 32
    %v1161 = vadd.s32 %v803, 32
    %v1162 = vadd.s32 %v810, 32
    %v1163 = vadd.s32 %v817, 32
    %v1164 = vadd.s32 %v824, 32
    %v1165 = vadd.s32 %v831, 32
    %v1166 = vadd.s32 %v838, 32
    %v1167 = vadd.s32 %v845, 32
    %v1168 = vadd.s32 %v852, 32
    %v1169 = vadd.s32 %v859, 32
    %v1170 = vadd.s32 %v866, 32
    %v1171 = vadd.s32 %v873, 32
    %v1172 = vadd.s32 %v880, 32
    %v1173 = vadd.s32 %v887, 32
    %v1174 = vadd.s32 %v894, 32
    %v1175 = vadd.s32 %v901, 32
    %v1176 = vadd.s32 %v908, 32
    %v1177 = vadd.s32 %v915, 32
    %v1178 = vadd.s32 %v922, 32
    %v1179 = vsel %vm1051, %v1115, %v481
    %v1180 = vsel %vm1052, %v1116, %v488
    %v1181 = vsel %vm1053, %v1117, %v495
    %v1182 = vsel %vm1054, %v1118, %v502
    %v1183 = vsel %vm1055, %v1119, %v509
    %v1184 = vsel %vm1056, %v1120, %v516
    %v1185 = vsel %vm1057, %v1121, %v523
    %v1186 = vsel %vm1058, %v1122, %v530
    %v1187 = vsel %vm1059, %v1123, %v537
    %v1188 = vsel %vm1060, %v1124, %v544
    %v1189 = vsel %vm1061, %v1125, %v551
    %v1190 = vsel %vm1062, %v1126, %v558
    %v1191 = vsel %vm1063, %v1127, %v565
    %v1192 = vsel %vm1064, %v1128, %v572
    %v1193 = vsel %vm1065, %v1129, %v579
    %v1194 = vsel %vm1066, %v1130, %v586
    %v1195 = vsel %vm1067, %v1131, %v593
    %v1196 = vsel %vm1068, %v1132, %v600
    %v1197 = vsel %vm1069, %v1133, %v607
    %v1198 = vsel %vm1070, %v1134, %v614
    %v1199 = vsel %vm1071, %v1135, %v621
    %v1200 = vsel %vm1072, %v1136, %v628
    %v1201 = vsel %vm1073, %v1137, %v635
    %v1202 = vsel %vm1074, %v1138, %v642
    %v1203 = vsel %vm1075, %v1139, %v649
    %v1204 = vsel %vm1076, %v1140, %v656
    %v1205 = vsel %vm1077, %v1141, %v663
    %v1206 = vsel %vm1078, %v1142, %v670
    %v1207 = vsel %vm1079, %v1143, %v677
    %v1208 = vsel %vm1080, %v1144, %v684
    %v1209 = vsel %vm1081, %v1145, %v691
    %v1210 = vsel %vm1082, %v1146, %v698
    %v1211 = vsel %vm1083, %v1147, %v705
    %v1212 = vsel %vm1084, %v1148, %v712
    %v1213 = vsel %vm1085, %v1149, %v719
    %v1214 = vsel %vm1086, %v1150, %v726
    %v1215 = vsel %vm1087, %v1151, %v733
    %v1216 = vsel %vm1088, %v1152, %v740
    %v1217 = vsel %vm1089, %v1153, %v747
    %v1218 = vsel %vm1090, %v1154, %v754
    %v1219 = vsel %vm1091, %v1155, %v761
    %v1220 = vsel %vm1092, %v1156, %v768
    %v1221 = vsel %vm1093, %v1157, %v775
    %v1222 = vsel %vm1094, %v1158, %v782
    %v1223 = vsel %vm1095, %v1159, %v789
    %v1224 = vsel %vm1096, %v1160, %v796
    %v1225 = vsel %vm1097, %v1161, %v803
    %v1226 = vsel %vm1098, %v1162, %v810
    %v1227 = vsel %vm1099, %v1163, %v817
    %v1228 = vsel %vm1100, %v1164, %v824
    %v1229 = vsel %vm1101, %v1165, %v831
    %v1230 = vsel %vm1102, %v1166, %v838
    %v1231 = vsel %vm1103, %v1167, %v845
    %v1232 = vsel %vm1104, %v1168, %v852
    %v1233 = vsel %vm1105, %v1169, %v859
    %v1234 = vsel %vm1106, %v1170, %v866
    %v1235 = vsel %vm1107, %v1171, %v873
    %v1236 = vsel %vm1108, %v1172, %v880
    %v1237 = vsel %vm1109, %v1173, %v887
    %v1238 = vsel %vm1110, %v1174, %v894
    %v1239 = vsel %vm1111, %v1175, %v901
    %v1240 = vsel %vm1112, %v1176, %v908
    %v1241 = vsel %vm1113, %v1177, %v915
    %v1242 = vsel %vm1114, %v1178, %v922
    %vm1243 = vcmp.eq.s32.totalorder %v1179, %v171
    %vm1244 = vcmp.eq.s32.totalorder %v1180, %v171
    %vm1245 = vcmp.eq.s32.totalorder %v1181, %v171
    %vm1246 = vcmp.eq.s32.totalorder %v1182, %v171
    %vm1247 = vcmp.eq.s32.totalorder %v1183, %v171
    %vm1248 = vcmp.eq.s32.totalorder %v1184, %v171
    %vm1249 = vcmp.eq.s32.totalorder %v1185, %v171
    %vm1250 = vcmp.eq.s32.totalorder %v1186, %v171
    %vm1251 = vcmp.eq.s32.totalorder %v1187, %v171
    %vm1252 = vcmp.eq.s32.totalorder %v1188, %v171
    %vm1253 = vcmp.eq.s32.totalorder %v1189, %v171
    %vm1254 = vcmp.eq.s32.totalorder %v1190, %v171
    %vm1255 = vcmp.eq.s32.totalorder %v1191, %v171
    %vm1256 = vcmp.eq.s32.totalorder %v1192, %v171
    %vm1257 = vcmp.eq.s32.totalorder %v1193, %v171
    %vm1258 = vcmp.eq.s32.totalorder %v1194, %v171
    %vm1259 = vcmp.eq.s32.totalorder %v1195, %v171
    %vm1260 = vcmp.eq.s32.totalorder %v1196, %v171
    %vm1261 = vcmp.eq.s32.totalorder %v1197, %v171
    %vm1262 = vcmp.eq.s32.totalorder %v1198, %v171
    %vm1263 = vcmp.eq.s32.totalorder %v1199, %v171
    %vm1264 = vcmp.eq.s32.totalorder %v1200, %v171
    %vm1265 = vcmp.eq.s32.totalorder %v1201, %v171
    %vm1266 = vcmp.eq.s32.totalorder %v1202, %v171
    %vm1267 = vcmp.eq.s32.totalorder %v1203, %v171
    %vm1268 = vcmp.eq.s32.totalorder %v1204, %v171
    %vm1269 = vcmp.eq.s32.totalorder %v1205, %v171
    %vm1270 = vcmp.eq.s32.totalorder %v1206, %v171
    %vm1271 = vcmp.eq.s32.totalorder %v1207, %v171
    %vm1272 = vcmp.eq.s32.totalorder %v1208, %v171
    %vm1273 = vcmp.eq.s32.totalorder %v1209, %v171
    %vm1274 = vcmp.eq.s32.totalorder %v1210, %v171
    %vm1275 = vcmp.eq.s32.totalorder %v1211, %v171
    %vm1276 = vcmp.eq.s32.totalorder %v1212, %v171
    %vm1277 = vcmp.eq.s32.totalorder %v1213, %v171
    %vm1278 = vcmp.eq.s32.totalorder %v1214, %v171
    %vm1279 = vcmp.eq.s32.totalorder %v1215, %v171
    %vm1280 = vcmp.eq.s32.totalorder %v1216, %v171
    %vm1281 = vcmp.eq.s32.totalorder %v1217, %v171
    %vm1282 = vcmp.eq.s32.totalorder %v1218, %v171
    %vm1283 = vcmp.eq.s32.totalorder %v1219, %v171
    %vm1284 = vcmp.eq.s32.totalorder %v1220, %v171
    %vm1285 = vcmp.eq.s32.totalorder %v1221, %v171
    %vm1286 = vcmp.eq.s32.totalorder %v1222, %v171
    %vm1287 = vcmp.eq.s32.totalorder %v1223, %v171
    %vm1288 = vcmp.eq.s32.totalorder %v1224, %v171
    %vm1289 = vcmp.eq.s32.totalorder %v1225, %v171
    %vm1290 = vcmp.eq.s32.totalorder %v1226, %v171
    %vm1291 = vcmp.eq.s32.totalorder %v1227, %v171
    %vm1292 = vcmp.eq.s32.totalorder %v1228, %v171
    %vm1293 = vcmp.eq.s32.totalorder %v1229, %v171
    %vm1294 = vcmp.eq.s32.totalorder %v1230, %v171
    %vm1295 = vcmp.eq.s32.totalorder %v1231, %v171
    %vm1296 = vcmp.eq.s32.totalorder %v1232, %v171
    %vm1297 = vcmp.eq.s32.totalorder %v1233, %v171
    %vm1298 = vcmp.eq.s32.totalorder %v1234, %v171
    %vm1299 = vcmp.eq.s32.totalorder %v1235, %v171
    %vm1300 = vcmp.eq.s32.totalorder %v1236, %v171
    %vm1301 = vcmp.eq.s32.totalorder %v1237, %v171
    %vm1302 = vcmp.eq.s32.totalorder %v1238, %v171
    %vm1303 = vcmp.eq.s32.totalorder %v1239, %v171
    %vm1304 = vcmp.eq.s32.totalorder %v1240, %v171
    %vm1305 = vcmp.eq.s32.totalorder %v1241, %v171
    %vm1306 = vcmp.eq.s32.totalorder %v1242, %v171
    %v1307 = vsel %vm1243, 1, 0
    %v1308 = vsel %vm1244, 1, 0
    %v1309 = vsel %vm1245, 1, 0
    %v1310 = vsel %vm1246, 1, 0
    %v1311 = vsel %vm1247, 1, 0
    %v1312 = vsel %vm1248, 1, 0
    %v1313 = vsel %vm1249, 1, 0
    %v1314 = vsel %vm1250, 1, 0
    %v1315 = vsel %vm1251, 1, 0
    %v1316 = vsel %vm1252, 1, 0
    %v1317 = vsel %vm1253, 1, 0
    %v1318 = vsel %vm1254, 1, 0
    %v1319 = vsel %vm1255, 1, 0
    %v1320 = vsel %vm1256, 1, 0
    %v1321 = vsel %vm1257, 1, 0
    %v1322 = vsel %vm1258, 1, 0
    %v1323 = vsel %vm1259, 1, 0
    %v1324 = vsel %vm1260, 1, 0
    %v1325 = vsel %vm1261, 1, 0
    %v1326 = vsel %vm1262, 1, 0
    %v1327 = vsel %vm1263, 1, 0
    %v1328 = vsel %vm1264, 1, 0
    %v1329 = vsel %vm1265, 1, 0
    %v1330 = vsel %vm1266, 1, 0
    %v1331 = vsel %vm1267, 1, 0
    %v1332 = vsel %vm1268, 1, 0
    %v1333 = vsel %vm1269, 1, 0
    %v1334 = vsel %vm1270, 1, 0
    %v1335 = vsel %vm1271, 1, 0
    %v1336 = vsel %vm1272, 1, 0
    %v1337 = vsel %vm1273, 1, 0
    %v1338 = vsel %vm1274, 1, 0
    %v1339 = vsel %vm1275, 1, 0
    %v1340 = vsel %vm1276, 1, 0
    %v1341 = vsel %vm1277, 1, 0
    %v1342 = vsel %vm1278, 1, 0
    %v1343 = vsel %vm1279, 1, 0
    %v1344 = vsel %vm1280, 1, 0
    %v1345 = vsel %vm1281, 1, 0
    %v1346 = vsel %vm1282, 1, 0
    %v1347 = vsel %vm1283, 1, 0
    %v1348 = vsel %vm1284, 1, 0
    %v1349 = vsel %vm1285, 1, 0
    %v1350 = vsel %vm1286, 1, 0
    %v1351 = vsel %vm1287, 1, 0
    %v1352 = vsel %vm1288, 1, 0
    %v1353 = vsel %vm1289, 1, 0
    %v1354 = vsel %vm1290, 1, 0
    %v1355 = vsel %vm1291, 1, 0
    %v1356 = vsel %vm1292, 1, 0
    %v1357 = vsel %vm1293, 1, 0
    %v1358 = vsel %vm1294, 1, 0
    %v1359 = vsel %vm1295, 1, 0
    %v1360 = vsel %vm1296, 1, 0
    %v1361 = vsel %vm1297, 1, 0
    %v1362 = vsel %vm1298, 1, 0
    %v1363 = vsel %vm1299, 1, 0
    %v1364 = vsel %vm1300, 1, 0
    %v1365 = vsel %vm1301, 1, 0
    %v1366 = vsel %vm1302, 1, 0
    %v1367 = vsel %vm1303, 1, 0
    %v1368 = vsel %vm1304, 1, 0
    %v1369 = vsel %vm1305, 1, 0
    %v1370 = vsel %vm1306, 1, 0
    %v1371 = vcvt.s32.f32 %v1307
    %v1372 = vcvt.s32.f32 %v1308
    %v1373 = vcvt.s32.f32 %v1309
    %v1374 = vcvt.s32.f32 %v1310
    %v1375 = vcvt.s32.f32 %v1311
    %v1376 = vcvt.s32.f32 %v1312
    %v1377 = vcvt.s32.f32 %v1313
    %v1378 = vcvt.s32.f32 %v1314
    %v1379 = vcvt.s32.f32 %v1315
    %v1380 = vcvt.s32.f32 %v1316
    %v1381 = vcvt.s32.f32 %v1317
    %v1382 = vcvt.s32.f32 %v1318
    %v1383 = vcvt.s32.f32 %v1319
    %v1384 = vcvt.s32.f32 %v1320
    %v1385 = vcvt.s32.f32 %v1321
    %v1386 = vcvt.s32.f32 %v1322
    %v1387 = vcvt.s32.f32 %v1323
    %v1388 = vcvt.s32.f32 %v1324
    %v1389 = vcvt.s32.f32 %v1325
    %v1390 = vcvt.s32.f32 %v1326
    %v1391 = vcvt.s32.f32 %v1327
    %v1392 = vcvt.s32.f32 %v1328
    %v1393 = vcvt.s32.f32 %v1329
    %v1394 = vcvt.s32.f32 %v1330
    %v1395 = vcvt.s32.f32 %v1331
    %v1396 = vcvt.s32.f32 %v1332
    %v1397 = vcvt.s32.f32 %v1333
    %v1398 = vcvt.s32.f32 %v1334
    %v1399 = vcvt.s32.f32 %v1335
    %v1400 = vcvt.s32.f32 %v1336
    %v1401 = vcvt.s32.f32 %v1337
    %v1402 = vcvt.s32.f32 %v1338
    %v1403 = vcvt.s32.f32 %v1339
    %v1404 = vcvt.s32.f32 %v1340
    %v1405 = vcvt.s32.f32 %v1341
    %v1406 = vcvt.s32.f32 %v1342
    %v1407 = vcvt.s32.f32 %v1343
    %v1408 = vcvt.s32.f32 %v1344
    %v1409 = vcvt.s32.f32 %v1345
    %v1410 = vcvt.s32.f32 %v1346
    %v1411 = vcvt.s32.f32 %v1347
    %v1412 = vcvt.s32.f32 %v1348
    %v1413 = vcvt.s32.f32 %v1349
    %v1414 = vcvt.s32.f32 %v1350
    %v1415 = vcvt.s32.f32 %v1351
    %v1416 = vcvt.s32.f32 %v1352
    %v1417 = vcvt.s32.f32 %v1353
    %v1418 = vcvt.s32.f32 %v1354
    %v1419 = vcvt.s32.f32 %v1355
    %v1420 = vcvt.s32.f32 %v1356
    %v1421 = vcvt.s32.f32 %v1357
    %v1422 = vcvt.s32.f32 %v1358
    %v1423 = vcvt.s32.f32 %v1359
    %v1424 = vcvt.s32.f32 %v1360
    %v1425 = vcvt.s32.f32 %v1361
    %v1426 = vcvt.s32.f32 %v1362
    %v1427 = vcvt.s32.f32 %v1363
    %v1428 = vcvt.s32.f32 %v1364
    %v1429 = vcvt.s32.f32 %v1365
    %v1430 = vcvt.s32.f32 %v1366
    %v1431 = vcvt.s32.f32 %v1367
    %v1432 = vcvt.s32.f32 %v1368
    %v1433 = vcvt.s32.f32 %v1369
    %v1434 = vcvt.s32.f32 %v1370
    %v1435 = vadd.s32 %v171, 128
    %v1436 = vadd.s32 %v171, 256
    %v1437 = vadd.s32 %v171, 384
    %vm1438 = vcmp.lt.s32.totalorder %v171, 0
    %v1439 = vsub.s32 0, %v171
    %v1440 = vsel %vm1438, %v1439, %v171
    %v1441 = vshrl.u32 %v1440, 5
    %v1442 = vand.u32 %v1440, 31
    %v1443 = vsub.s32 0, %v1442
    %v1444 = vsel %vm1438, %v1443, %v1442
    %vm1445 = vcmp.lt.s32.totalorder %v1435, 0
    %v1446 = vsub.s32 0, %v1435
    %v1447 = vsel %vm1445, %v1446, %v1435
    %v1448 = vshrl.u32 %v1447, 5
    %v1449 = vand.u32 %v1447, 31
    %v1450 = vsub.s32 0, %v1449
    %v1451 = vsel %vm1445, %v1450, %v1449
    %vm1452 = vcmp.lt.s32.totalorder %v1436, 0
    %v1453 = vsub.s32 0, %v1436
    %v1454 = vsel %vm1452, %v1453, %v1436
    %v1455 = vshrl.u32 %v1454, 5
    %v1456 = vand.u32 %v1454, 31
    %v1457 = vsub.s32 0, %v1456
    %v1458 = vsel %vm1452, %v1457, %v1456
    %vm1459 = vcmp.lt.s32.totalorder %v1437, 0
    %v1460 = vsub.s32 0, %v1437
    %v1461 = vsel %vm1459, %v1460, %v1437
    %v1462 = vshrl.u32 %v1461, 5
    %v1463 = vand.u32 %v1461, 31
    %v1464 = vsub.s32 0, %v1463
    %v1465 = vsel %vm1459, %v1464, %v1463
    %vm1466 = vcmp.ne.s32.totalorder %v1444, 0
    %vm1467 = vcmp.ne.s32.totalorder %v1451, 0
    %vm1468 = vcmp.ne.s32.totalorder %v1458, 0
    %vm1469 = vcmp.ne.s32.totalorder %v1465, 0
    %vm1470 = vcmp.lt.s32.totalorder %v1444, 0
    %vm1471 = vcmp.lt.s32.totalorder %v1451, 0
    %vm1472 = vcmp.lt.s32.totalorder %v1458, 0
    %vm1473 = vcmp.lt.s32.totalorder %v1465, 0
    %vm1474 = vmand %vm1470, %vm1466
    %vm1475 = vmand %vm1471, %vm1467
    %vm1476 = vmand %vm1472, %vm1468
    %vm1477 = vmand %vm1473, %vm1469
    %v1478 = vadd.s32 %v1444, 32
    %v1479 = vadd.s32 %v1451, 32
    %v1480 = vadd.s32 %v1458, 32
    %v1481 = vadd.s32 %v1465, 32
    %v1482 = vsel %vm1474, %v1478, %v1444
    %v1483 = vsel %vm1475, %v1479, %v1451
    %v1484 = vsel %vm1476, %v1480, %v1458
    %v1485 = vsel %vm1477, %v1481, %v1465
    %vm1486 = vcmp.eq.s32.totalorder %v1482, %v154
    %vm1487 = vcmp.eq.s32.totalorder %v1483, %v154
    %vm1488 = vcmp.eq.s32.totalorder %v1484, %v154
    %vm1489 = vcmp.eq.s32.totalorder %v1485, %v154
    %vm1490 = vcmp.eq.s32.totalorder %v1482, %v155
    %vm1491 = vcmp.eq.s32.totalorder %v1483, %v155
    %vm1492 = vcmp.eq.s32.totalorder %v1484, %v155
    %vm1493 = vcmp.eq.s32.totalorder %v1485, %v155
    %vm1494 = vcmp.eq.s32.totalorder %v1482, %v156
    %vm1495 = vcmp.eq.s32.totalorder %v1483, %v156
    %vm1496 = vcmp.eq.s32.totalorder %v1484, %v156
    %vm1497 = vcmp.eq.s32.totalorder %v1485, %v156
    %vm1498 = vcmp.eq.s32.totalorder %v1482, %v157
    %vm1499 = vcmp.eq.s32.totalorder %v1483, %v157
    %vm1500 = vcmp.eq.s32.totalorder %v1484, %v157
    %vm1501 = vcmp.eq.s32.totalorder %v1485, %v157
    %v1502 = vsel %vm1486, 1, 0
    %v1503 = vsel %vm1487, 1, 0
    %v1504 = vsel %vm1488, 1, 0
    %v1505 = vsel %vm1489, 1, 0
    %v1506 = vsel %vm1490, 1, 0
    %v1507 = vsel %vm1491, 1, 0
    %v1508 = vsel %vm1492, 1, 0
    %v1509 = vsel %vm1493, 1, 0
    %v1510 = vsel %vm1494, 1, 0
    %v1511 = vsel %vm1495, 1, 0
    %v1512 = vsel %vm1496, 1, 0
    %v1513 = vsel %vm1497, 1, 0
    %v1514 = vsel %vm1498, 1, 0
    %v1515 = vsel %vm1499, 1, 0
    %v1516 = vsel %vm1500, 1, 0
    %v1517 = vsel %vm1501, 1, 0
    %v1518 = vcvt.s32.f32 %v1502
    %v1519 = vcvt.s32.f32 %v1503
    %v1520 = vcvt.s32.f32 %v1504
    %v1521 = vcvt.s32.f32 %v1505
    %v1522 = vcvt.s32.f32 %v1506
    %v1523 = vcvt.s32.f32 %v1507
    %v1524 = vcvt.s32.f32 %v1508
    %v1525 = vcvt.s32.f32 %v1509
    %v1526 = vcvt.s32.f32 %v1510
    %v1527 = vcvt.s32.f32 %v1511
    %v1528 = vcvt.s32.f32 %v1512
    %v1529 = vcvt.s32.f32 %v1513
    %v1530 = vcvt.s32.f32 %v1514
    %v1531 = vcvt.s32.f32 %v1515
    %v1532 = vcvt.s32.f32 %v1516
    %v1533 = vcvt.s32.f32 %v1517
    %v1534 = vld [vmem:[#allocation6] sm:$0xff]
    %v1535 = vld [vmem:[#allocation6 + $0x8] sm:$0xff]
    %v1536 = vld [vmem:[#allocation6 + $0x10] sm:$0xff]
    %v1537 = vld [vmem:[#allocation6 + $0x18] sm:$0xff]
    %v1538 = vld [vmem:[#allocation6 + $0x20] sm:$0xff]
    %v1539 = vld [vmem:[#allocation6 + $0x28] sm:$0xff]
    %v1540 = vld [vmem:[#allocation6 + $0x30] sm:$0xff]
    %v1541 = vld [vmem:[#allocation6 + $0x38] sm:$0xff]
    %v1542 = vld [vmem:[#allocation6 + $0x40] sm:$0xff]
    %v1543 = vld [vmem:[#allocation6 + $0x48] sm:$0xff]
    %v1544 = vld [vmem:[#allocation6 + $0x50] sm:$0xff]
    %v1545 = vld [vmem:[#allocation6 + $0x58] sm:$0xff]
    %v1546 = vld [vmem:[#allocation6 + $0x60] sm:$0xff]
    %v1547 = vld [vmem:[#allocation6 + $0x68] sm:$0xff]
    %v1548 = vld [vmem:[#allocation6 + $0x70] sm:$0xff]
    %v1549 = vld [vmem:[#allocation6 + $0x78] sm:$0xff]
    %v1550 = vld [vmem:[%s5] sm:$0xf]
    %v1552 = vlaneseq
    %v1553 = vshrl.u32 %v1552, 7
    %v1554 = vsub.s32 0, %v1553
    %v1555 = vrot.slane %v1550, %v1554
    %v1556 = vlaneseq
    %v1557 = vshrl.u32 %v1556, 7
    %v1558 = vsub.s32 1, %v1557
    %v1559 = vrot.slane %v1550, %v1558
    %v1560 = vlaneseq
    %v1561 = vshrl.u32 %v1560, 7
    %v1562 = vsub.s32 2, %v1561
    %v1563 = vrot.slane %v1550, %v1562
    %v1564 = vlaneseq
    %v1565 = vshrl.u32 %v1564, 7
    %v1566 = vsub.s32 3, %v1565
    %v1567 = vrot.slane %v1550, %v1566
    %v1572 = vadd.f32 %v1534, %v1555
    %v1573 = vadd.f32 %v1535, %v1559
    %v1574 = vadd.f32 %v1536, %v1563
    %v1575 = vadd.f32 %v1537, %v1567
    %v1576 = vadd.f32 %v1538, %v1555
    %v1577 = vadd.f32 %v1539, %v1559
    %v1578 = vadd.f32 %v1540, %v1563
    %v1579 = vadd.f32 %v1541, %v1567
    %v1580 = vadd.f32 %v1542, %v1555
    %v1581 = vadd.f32 %v1543, %v1559
    %v1582 = vadd.f32 %v1544, %v1563
    %v1583 = vadd.f32 %v1545, %v1567
    %v1584 = vadd.f32 %v1546, %v1555
    %v1585 = vadd.f32 %v1547, %v1559
    %v1586 = vadd.f32 %v1548, %v1563
    %v1587 = vadd.f32 %v1549, %v1567
    %v1588 = vld [vmem:[%s6] sm:$0xf]
    %vm1589 = vcmp.gt.f32.partialorder %v1572, 0.0
    %vm1590 = vcmp.gt.f32.partialorder %v1573, 0.0
    %vm1591 = vcmp.gt.f32.partialorder %v1574, 0.0
    %vm1592 = vcmp.gt.f32.partialorder %v1575, 0.0
    %vm1593 = vcmp.gt.f32.partialorder %v1576, 0.0
    %vm1594 = vcmp.gt.f32.partialorder %v1577, 0.0
    %vm1595 = vcmp.gt.f32.partialorder %v1578, 0.0
    %vm1596 = vcmp.gt.f32.partialorder %v1579, 0.0
    %vm1597 = vcmp.gt.f32.partialorder %v1580, 0.0
    %vm1598 = vcmp.gt.f32.partialorder %v1581, 0.0
    %vm1599 = vcmp.gt.f32.partialorder %v1582, 0.0
    %vm1600 = vcmp.gt.f32.partialorder %v1583, 0.0
    %vm1601 = vcmp.gt.f32.partialorder %v1584, 0.0
    %vm1602 = vcmp.gt.f32.partialorder %v1585, 0.0
    %vm1603 = vcmp.gt.f32.partialorder %v1586, 0.0
    %vm1604 = vcmp.gt.f32.partialorder %v1587, 0.0
    %v1606 = vlaneseq
    %v1607 = vshrl.u32 %v1606, 7
    %v1608 = vsub.s32 0, %v1607
    %v1609 = vrot.slane %v1588, %v1608
    %v1610 = vlaneseq
    %v1611 = vshrl.u32 %v1610, 7
    %v1612 = vsub.s32 1, %v1611
    %v1613 = vrot.slane %v1588, %v1612
    %v1614 = vlaneseq
    %v1615 = vshrl.u32 %v1614, 7
    %v1616 = vsub.s32 2, %v1615
    %v1617 = vrot.slane %v1588, %v1616
    %v1618 = vlaneseq
    %v1619 = vshrl.u32 %v1618, 7
    %v1620 = vsub.s32 3, %v1619
    %v1621 = vrot.slane %v1588, %v1620
    %v1626 = vmul.f32 %v1609, %v1572
    %v1627 = vmul.f32 %v1613, %v1573
    %v1628 = vmul.f32 %v1617, %v1574
    %v1629 = vmul.f32 %v1621, %v1575
    %v1630 = vmul.f32 %v1609, %v1576
    %v1631 = vmul.f32 %v1613, %v1577
    %v1632 = vmul.f32 %v1617, %v1578
    %v1633 = vmul.f32 %v1621, %v1579
    %v1634 = vmul.f32 %v1609, %v1580
    %v1635 = vmul.f32 %v1613, %v1581
    %v1636 = vmul.f32 %v1617, %v1582
    %v1637 = vmul.f32 %v1621, %v1583
    %v1638 = vmul.f32 %v1609, %v1584
    %v1639 = vmul.f32 %v1613, %v1585
    %v1640 = vmul.f32 %v1617, %v1586
    %v1641 = vmul.f32 %v1621, %v1587
    %v1642 = vsel %vm1589, %v1572, %v1626
    %v1643 = vsel %vm1590, %v1573, %v1627
    %v1644 = vsel %vm1591, %v1574, %v1628
    %v1645 = vsel %vm1592, %v1575, %v1629
    %v1646 = vsel %vm1593, %v1576, %v1630
    %v1647 = vsel %vm1594, %v1577, %v1631
    %v1648 = vsel %vm1595, %v1578, %v1632
    %v1649 = vsel %vm1596, %v1579, %v1633
    %v1650 = vsel %vm1597, %v1580, %v1634
    %v1651 = vsel %vm1598, %v1581, %v1635
    %v1652 = vsel %vm1599, %v1582, %v1636
    %v1653 = vsel %vm1600, %v1583, %v1637
    %v1654 = vsel %vm1601, %v1584, %v1638
    %v1655 = vsel %vm1602, %v1585, %v1639
    %v1656 = vsel %vm1603, %v1586, %v1640
    %v1657 = vsel %vm1604, %v1587, %v1641
    %v1658 = vld [vmem:[%s7] sm:$0xf]
    %v1660 = vlaneseq
    %v1661 = vshrl.u32 %v1660, 7
    %v1662 = vsub.s32 0, %v1661
    %v1663 = vrot.slane %v1658, %v1662
    %v1664 = vlaneseq
    %v1665 = vshrl.u32 %v1664, 7
    %v1666 = vsub.s32 1, %v1665
    %v1667 = vrot.slane %v1658, %v1666
    %v1668 = vlaneseq
    %v1669 = vshrl.u32 %v1668, 7
    %v1670 = vsub.s32 2, %v1669
    %v1671 = vrot.slane %v1658, %v1670
    %v1672 = vlaneseq
    %v1673 = vshrl.u32 %v1672, 7
    %v1674 = vsub.s32 3, %v1673
    %v1675 = vrot.slane %v1658, %v1674
    %v1680 = vadd.f32 %v1642, %v1663
    %v1681 = vadd.f32 %v1643, %v1667
    %v1682 = vadd.f32 %v1644, %v1671
    %v1683 = vadd.f32 %v1645, %v1675
    %v1684 = vadd.f32 %v1646, %v1663
    %v1685 = vadd.f32 %v1647, %v1667
    %v1686 = vadd.f32 %v1648, %v1671
    %v1687 = vadd.f32 %v1649, %v1675
    %v1688 = vadd.f32 %v1650, %v1663
    %v1689 = vadd.f32 %v1651, %v1667
    %v1690 = vadd.f32 %v1652, %v1671
    %v1691 = vadd.f32 %v1653, %v1675
    %v1692 = vadd.f32 %v1654, %v1663
    %v1693 = vadd.f32 %v1655, %v1667
    %v1694 = vadd.f32 %v1656, %v1671
    %v1695 = vadd.f32 %v1657, %v1675
    %s1696 = sld [smem:[#allocation2]]
    %v1697 = vstv %s1696
    %v1698 = vmul.f32 %v1680, %v1697
    %v1699 = vmul.f32 %v1681, %v1697
    %v1700 = vmul.f32 %v1682, %v1697
    %v1701 = vmul.f32 %v1683, %v1697
    %v1702 = vmul.f32 %v1684, %v1697
    %v1703 = vmul.f32 %v1685, %v1697
    %v1704 = vmul.f32 %v1686, %v1697
    %v1705 = vmul.f32 %v1687, %v1697
    %v1706 = vmul.f32 %v1688, %v1697
    %v1707 = vmul.f32 %v1689, %v1697
    %v1708 = vmul.f32 %v1690, %v1697
    %v1709 = vmul.f32 %v1691, %v1697
    %v1710 = vmul.f32 %v1692, %v1697
    %v1711 = vmul.f32 %v1693, %v1697
    %v1712 = vmul.f32 %v1694, %v1697
    %v1713 = vmul.f32 %v1695, %v1697
    %v1714 = vround.ne.pseudo %v1698
    %v1715 = vround.ne.pseudo %v1699
    %v1716 = vround.ne.pseudo %v1700
    %v1717 = vround.ne.pseudo %v1701
    %v1718 = vround.ne.pseudo %v1702
    %v1719 = vround.ne.pseudo %v1703
    %v1720 = vround.ne.pseudo %v1704
    %v1721 = vround.ne.pseudo %v1705
    %v1722 = vround.ne.pseudo %v1706
    %v1723 = vround.ne.pseudo %v1707
    %v1724 = vround.ne.pseudo %v1708
    %v1725 = vround.ne.pseudo %v1709
    %v1726 = vround.ne.pseudo %v1710
    %v1727 = vround.ne.pseudo %v1711
    %v1728 = vround.ne.pseudo %v1712
    %v1729 = vround.ne.pseudo %v1713
    %v1730 = vmax.f32 %v1714, 0.0
    %v1731 = vmax.f32 %v1715, 0.0
    %v1732 = vmax.f32 %v1716, 0.0
    %v1733 = vmax.f32 %v1717, 0.0
    %v1734 = vmax.f32 %v1718, 0.0
    %v1735 = vmax.f32 %v1719, 0.0
    %v1736 = vmax.f32 %v1720, 0.0
    %v1737 = vmax.f32 %v1721, 0.0
    %v1738 = vmax.f32 %v1722, 0.0
    %v1739 = vmax.f32 %v1723, 0.0
    %v1740 = vmax.f32 %v1724, 0.0
    %v1741 = vmax.f32 %v1725, 0.0
    %v1742 = vmax.f32 %v1726, 0.0
    %v1743 = vmax.f32 %v1727, 0.0
    %v1744 = vmax.f32 %v1728, 0.0
    %v1745 = vmax.f32 %v1729, 0.0
    %v1746 = vmin.f32 %v1730, 15.0
    %v1747 = vmin.f32 %v1731, 15.0
    %v1748 = vmin.f32 %v1732, 15.0
    %v1749 = vmin.f32 %v1733, 15.0
    %v1750 = vmin.f32 %v1734, 15.0
    %v1751 = vmin.f32 %v1735, 15.0
    %v1752 = vmin.f32 %v1736, 15.0
    %v1753 = vmin.f32 %v1737, 15.0
    %v1754 = vmin.f32 %v1738, 15.0
    %v1755 = vmin.f32 %v1739, 15.0
    %v1756 = vmin.f32 %v1740, 15.0
    %v1757 = vmin.f32 %v1741, 15.0
    %v1758 = vmin.f32 %v1742, 15.0
    %v1759 = vmin.f32 %v1743, 15.0
    %v1760 = vmin.f32 %v1744, 15.0
    %v1761 = vmin.f32 %v1745, 15.0
    %v1762 = vpack.c.bf16 %v1750, %v1746
    %v1763 = vpack.c.bf16 %v1751, %v1747
    %v1764 = vpack.c.bf16 %v1752, %v1748
    %v1765 = vpack.c.bf16 %v1753, %v1749
    %v1766 = vpack.c.bf16 %v1758, %v1754
    %v1767 = vpack.c.bf16 %v1759, %v1755
    %v1768 = vpack.c.bf16 %v1760, %v1756
    %v1769 = vpack.c.bf16 %v1761, %v1757
    %v1770 = vld [vmem:[#allocation7] sm:$0xf]
    %v1771 = vld [vmem:[#allocation7 + $0x4] sm:$0xf]
    %v1772 = vld [vmem:[#allocation7 + $0x8] sm:$0xf]
    %v1773 = vld [vmem:[#allocation7 + $0xc] sm:$0xf]
    %v1774 = vld [vmem:[#allocation7 + $0x10] sm:$0xf]
    %v1775 = vld [vmem:[#allocation7 + $0x14] sm:$0xf]
    %v1776 = vld [vmem:[#allocation7 + $0x18] sm:$0xf]
    %v1777 = vld [vmem:[#allocation7 + $0x1c] sm:$0xf]
    %v1778 = vld [vmem:[#allocation7 + $0x20] sm:$0xf]
    %v1779 = vld [vmem:[#allocation7 + $0x24] sm:$0xf]
    %v1780 = vld [vmem:[#allocation7 + $0x28] sm:$0xf]
    %v1781 = vld [vmem:[#allocation7 + $0x2c] sm:$0xf]
    %v1782 = vld [vmem:[#allocation7 + $0x30] sm:$0xf]
    %v1783 = vld [vmem:[#allocation7 + $0x34] sm:$0xf]
    %v1784 = vld [vmem:[#allocation7 + $0x38] sm:$0xf]
    %v1785 = vld [vmem:[#allocation7 + $0x3c] sm:$0xf]
    %v1786 = vld [vmem:[#allocation7 + $0x40] sm:$0xf]
    %v1787 = vld [vmem:[#allocation7 + $0x44] sm:$0xf]
    %v1788 = vld [vmem:[#allocation7 + $0x48] sm:$0xf]
    %v1789 = vld [vmem:[#allocation7 + $0x4c] sm:$0xf]
    %v1790 = vld [vmem:[#allocation7 + $0x50] sm:$0xf]
    %v1791 = vld [vmem:[#allocation7 + $0x54] sm:$0xf]
    %v1792 = vld [vmem:[#allocation7 + $0x58] sm:$0xf]
    %v1793 = vld [vmem:[#allocation7 + $0x5c] sm:$0xf]
    %v1794 = vld [vmem:[#allocation7 + $0x60] sm:$0xf]
    %v1795 = vld [vmem:[#allocation7 + $0x64] sm:$0xf]
    %v1796 = vld [vmem:[#allocation7 + $0x68] sm:$0xf]
    %v1797 = vld [vmem:[#allocation7 + $0x6c] sm:$0xf]
    %v1798 = vld [vmem:[#allocation7 + $0x70] sm:$0xf]
    %v1799 = vld [vmem:[#allocation7 + $0x74] sm:$0xf]
    %v1800 = vld [vmem:[#allocation7 + $0x78] sm:$0xf]
    %v1801 = vld [vmem:[#allocation7 + $0x7c] sm:$0xf]
    %v1802 = vld [vmem:[#allocation7 + $0x80] sm:$0xf]
    %v1803 = vld [vmem:[#allocation7 + $0x84] sm:$0xf]
    %v1804 = vld [vmem:[#allocation7 + $0x88] sm:$0xf]
    %v1805 = vld [vmem:[#allocation7 + $0x8c] sm:$0xf]
    %v1806 = vld [vmem:[#allocation7 + $0x90] sm:$0xf]
    %v1807 = vld [vmem:[#allocation7 + $0x94] sm:$0xf]
    %v1808 = vld [vmem:[#allocation7 + $0x98] sm:$0xf]
    %v1809 = vld [vmem:[#allocation7 + $0x9c] sm:$0xf]
    %v1810 = vld [vmem:[#allocation7 + $0xa0] sm:$0xf]
    %v1811 = vld [vmem:[#allocation7 + $0xa4] sm:$0xf]
    %v1812 = vld [vmem:[#allocation7 + $0xa8] sm:$0xf]
    %v1813 = vld [vmem:[#allocation7 + $0xac] sm:$0xf]
    %v1814 = vld [vmem:[#allocation7 + $0xb0] sm:$0xf]
    %v1815 = vld [vmem:[#allocation7 + $0xb4] sm:$0xf]
    %v1816 = vld [vmem:[#allocation7 + $0xb8] sm:$0xf]
    %v1817 = vld [vmem:[#allocation7 + $0xbc] sm:$0xf]
    %v1818 = vld [vmem:[#allocation7 + $0xc0] sm:$0xf]
    %v1819 = vld [vmem:[#allocation7 + $0xc4] sm:$0xf]
    %v1820 = vld [vmem:[#allocation7 + $0xc8] sm:$0xf]
    %v1821 = vld [vmem:[#allocation7 + $0xcc] sm:$0xf]
    %v1822 = vld [vmem:[#allocation7 + $0xd0] sm:$0xf]
    %v1823 = vld [vmem:[#allocation7 + $0xd4] sm:$0xf]
    %v1824 = vld [vmem:[#allocation7 + $0xd8] sm:$0xf]
    %v1825 = vld [vmem:[#allocation7 + $0xdc] sm:$0xf]
    %v1826 = vld [vmem:[#allocation7 + $0xe0] sm:$0xf]
    %v1827 = vld [vmem:[#allocation7 + $0xe4] sm:$0xf]
    %v1828 = vld [vmem:[#allocation7 + $0xe8] sm:$0xf]
    %v1829 = vld [vmem:[#allocation7 + $0xec] sm:$0xf]
    %v1830 = vld [vmem:[#allocation7 + $0xf0] sm:$0xf]
    %v1831 = vld [vmem:[#allocation7 + $0xf4] sm:$0xf]
    %v1832 = vld [vmem:[#allocation7 + $0xf8] sm:$0xf]
    %v1833 = vld [vmem:[#allocation7 + $0xfc] sm:$0xf]
    %v1898 = vunpack.c.l.b16 %v1770
    %v1899 = vunpack.c.l.b16 %v1771
    %v1900 = vunpack.c.l.b16 %v1772
    %v1901 = vunpack.c.l.b16 %v1773
    %v1902 = vunpack.c.l.b16 %v1774
    %v1903 = vunpack.c.l.b16 %v1775
    %v1904 = vunpack.c.l.b16 %v1776
    %v1905 = vunpack.c.l.b16 %v1777
    %v1906 = vunpack.c.l.b16 %v1778
    %v1907 = vunpack.c.l.b16 %v1779
    %v1908 = vunpack.c.l.b16 %v1780
    %v1909 = vunpack.c.l.b16 %v1781
    %v1910 = vunpack.c.l.b16 %v1782
    %v1911 = vunpack.c.l.b16 %v1783
    %v1912 = vunpack.c.l.b16 %v1784
    %v1913 = vunpack.c.l.b16 %v1785
    %v1914 = vunpack.c.l.b16 %v1786
    %v1915 = vunpack.c.l.b16 %v1787
    %v1916 = vunpack.c.l.b16 %v1788
    %v1917 = vunpack.c.l.b16 %v1789
    %v1918 = vunpack.c.l.b16 %v1790
    %v1919 = vunpack.c.l.b16 %v1791
    %v1920 = vunpack.c.l.b16 %v1792
    %v1921 = vunpack.c.l.b16 %v1793
    %v1922 = vunpack.c.l.b16 %v1794
    %v1923 = vunpack.c.l.b16 %v1795
    %v1924 = vunpack.c.l.b16 %v1796
    %v1925 = vunpack.c.l.b16 %v1797
    %v1926 = vunpack.c.l.b16 %v1798
    %v1927 = vunpack.c.l.b16 %v1799
    %v1928 = vunpack.c.l.b16 %v1800
    %v1929 = vunpack.c.l.b16 %v1801
    %v1930 = vunpack.c.l.b16 %v1802
    %v1931 = vunpack.c.l.b16 %v1803
    %v1932 = vunpack.c.l.b16 %v1804
    %v1933 = vunpack.c.l.b16 %v1805
    %v1934 = vunpack.c.l.b16 %v1806
    %v1935 = vunpack.c.l.b16 %v1807
    %v1936 = vunpack.c.l.b16 %v1808
    %v1937 = vunpack.c.l.b16 %v1809
    %v1938 = vunpack.c.l.b16 %v1810
    %v1939 = vunpack.c.l.b16 %v1811
    %v1940 = vunpack.c.l.b16 %v1812
    %v1941 = vunpack.c.l.b16 %v1813
    %v1942 = vunpack.c.l.b16 %v1814
    %v1943 = vunpack.c.l.b16 %v1815
    %v1944 = vunpack.c.l.b16 %v1816
    %v1945 = vunpack.c.l.b16 %v1817
    %v1946 = vunpack.c.l.b16 %v1818
    %v1947 = vunpack.c.l.b16 %v1819
    %v1948 = vunpack.c.l.b16 %v1820
    %v1949 = vunpack.c.l.b16 %v1821
    %v1950 = vunpack.c.l.b16 %v1822
    %v1951 = vunpack.c.l.b16 %v1823
    %v1952 = vunpack.c.l.b16 %v1824
    %v1953 = vunpack.c.l.b16 %v1825
    %v1954 = vunpack.c.l.b16 %v1826
    %v1955 = vunpack.c.l.b16 %v1827
    %v1956 = vunpack.c.l.b16 %v1828
    %v1957 = vunpack.c.l.b16 %v1829
    %v1958 = vunpack.c.l.b16 %v1830
    %v1959 = vunpack.c.l.b16 %v1831
    %v1960 = vunpack.c.l.b16 %v1832
    %v1961 = vunpack.c.l.b16 %v1833
    %v1962 = vpack.c.b16 %v1899, %v1898
    %v1963 = vpack.c.b16 %v1901, %v1900
    %v1964 = vpack.c.b16 %v1903, %v1902
    %v1965 = vpack.c.b16 %v1905, %v1904
    %v1966 = vpack.c.b16 %v1907, %v1906
    %v1967 = vpack.c.b16 %v1909, %v1908
    %v1968 = vpack.c.b16 %v1911, %v1910
    %v1969 = vpack.c.b16 %v1913, %v1912
    %v1970 = vpack.c.b16 %v1915, %v1914
    %v1971 = vpack.c.b16 %v1917, %v1916
    %v1972 = vpack.c.b16 %v1919, %v1918
    %v1973 = vpack.c.b16 %v1921, %v1920
    %v1974 = vpack.c.b16 %v1923, %v1922
    %v1975 = vpack.c.b16 %v1925, %v1924
    %v1976 = vpack.c.b16 %v1927, %v1926
    %v1977 = vpack.c.b16 %v1929, %v1928
    %v1978 = vpack.c.b16 %v1931, %v1930
    %v1979 = vpack.c.b16 %v1933, %v1932
    %v1980 = vpack.c.b16 %v1935, %v1934
    %v1981 = vpack.c.b16 %v1937, %v1936
    %v1982 = vpack.c.b16 %v1939, %v1938
    %v1983 = vpack.c.b16 %v1941, %v1940
    %v1984 = vpack.c.b16 %v1943, %v1942
    %v1985 = vpack.c.b16 %v1945, %v1944
    %v1986 = vpack.c.b16 %v1947, %v1946
    %v1987 = vpack.c.b16 %v1949, %v1948
    %v1988 = vpack.c.b16 %v1951, %v1950
    %v1989 = vpack.c.b16 %v1953, %v1952
    %v1990 = vpack.c.b16 %v1955, %v1954
    %v1991 = vpack.c.b16 %v1957, %v1956
    %v1992 = vpack.c.b16 %v1959, %v1958
    %v1993 = vpack.c.b16 %v1961, %v1960
    %2026 = vmatprep.subr.bf16.mxu0 0
    %2027 = vmatpush1.bf16.msra.mxu0 %v1962
    %2028 = vmatprep.subr.bf16.mxu0 0
    %2029 = vmatpush1.bf16.msra.mxu0 %v1963
    %2030 = vmatprep.subr.bf16.mxu0 0
    %2031 = vmatpush1.bf16.msra.mxu0 %v1964
    %2032 = vmatprep.subr.bf16.mxu0 0
    %2033 = vmatpush1.bf16.msra.mxu0 %v1965
    %2034 = vmatprep.subr.bf16.mxu0 0
    %2035 = vmatpush1.bf16.msra.mxu0 %v1966
    %2036 = vmatprep.subr.bf16.mxu0 0
    %2037 = vmatpush1.bf16.msra.mxu0 %v1967
    %2038 = vmatprep.subr.bf16.mxu0 0
    %2039 = vmatpush1.bf16.msra.mxu0 %v1968
    %2040 = vmatprep.subr.bf16.mxu0 0
    %2041 = vmatpush1.bf16.msra.mxu0 %v1969
    %2042 = vmatprep.subr.bf16.mxu0 0
    %2043 = vmatpush1.bf16.msra.mxu0 %v1970
    %2044 = vmatprep.subr.bf16.mxu0 0
    %2045 = vmatpush1.bf16.msra.mxu0 %v1971
    %2046 = vmatprep.subr.bf16.mxu0 0
    %2047 = vmatpush1.bf16.msra.mxu0 %v1972
    %2048 = vmatprep.subr.bf16.mxu0 0
    %2049 = vmatpush1.bf16.msra.mxu0 %v1973
    %2050 = vmatprep.subr.bf16.mxu0 0
    %2051 = vmatpush1.bf16.msra.mxu0 %v1974
    %2052 = vmatprep.subr.bf16.mxu0 0
    %2053 = vmatpush1.bf16.msra.mxu0 %v1975
    %2054 = vmatprep.subr.bf16.mxu0 0
    %2055 = vmatpush1.bf16.msra.mxu0 %v1976
    %2056 = vmatprep.subr.bf16.mxu0 0
    %2057 = vmatpush1.bf16.msra.mxu0 %v1977
    %2058 = vmatprep.mubr.bf16.mxu0 %v1763
    %2059 = vmatmul.mubr.bf16.gmra.mrb[0].mxu0 %v1762
    %v2060 = vpop.f32.mrb[0].mxu0
    %v2061 = vadd.f32 0.0, %v2060
    %v2062 = vpop.f32.mrb[0].mxu0
    %v2063 = vpop.f32.mrb[0].mxu0
    %v2064 = vadd.f32 0.0, %v2063
    %v2065 = vpop.f32.mrb[0].mxu0
    %2066 = vmatprep.mubr.bf16.mxu0 %v1767
    %2067 = vmatmul.mubr.bf16.gmra.mrb[0].mxu0 %v1766
    %v2068 = vpop.f32.mrb[0].mxu0
    %v2069 = vadd.f32 0.0, %v2068
    %v2070 = vpop.f32.mrb[0].mxu0
    %v2071 = vpop.f32.mrb[0].mxu0
    %v2072 = vadd.f32 0.0, %v2071
    %v2073 = vpop.f32.mrb[0].mxu0
    %2074 = vdwg.mxu0
    %2075 = vmatprep.subr.bf16.mxu0 0
    %2076 = vmatpush1.bf16.msra.mxu0 %v1978
    %2077 = vmatprep.subr.bf16.mxu0 0
    %2078 = vmatpush1.bf16.msra.mxu0 %v1979
    %2079 = vmatprep.subr.bf16.mxu0 0
    %2080 = vmatpush1.bf16.msra.mxu0 %v1980
    %2081 = vmatprep.subr.bf16.mxu0 0
    %2082 = vmatpush1.bf16.msra.mxu0 %v1981
    %2083 = vmatprep.subr.bf16.mxu0 0
    %2084 = vmatpush1.bf16.msra.mxu0 %v1982
    %2085 = vmatprep.subr.bf16.mxu0 0
    %2086 = vmatpush1.bf16.msra.mxu0 %v1983
    %2087 = vmatprep.subr.bf16.mxu0 0
    %2088 = vmatpush1.bf16.msra.mxu0 %v1984
    %2089 = vmatprep.subr.bf16.mxu0 0
    %2090 = vmatpush1.bf16.msra.mxu0 %v1985
    %2091 = vmatprep.subr.bf16.mxu0 0
    %2092 = vmatpush1.bf16.msra.mxu0 %v1986
    %2093 = vmatprep.subr.bf16.mxu0 0
    %2094 = vmatpush1.bf16.msra.mxu0 %v1987
    %2095 = vmatprep.subr.bf16.mxu0 0
    %2096 = vmatpush1.bf16.msra.mxu0 %v1988
    %2097 = vmatprep.subr.bf16.mxu0 0
    %2098 = vmatpush1.bf16.msra.mxu0 %v1989
    %2099 = vmatprep.subr.bf16.mxu0 0
    %2100 = vmatpush1.bf16.msra.mxu0 %v1990
    %2101 = vmatprep.subr.bf16.mxu0 0
    %2102 = vmatpush1.bf16.msra.mxu0 %v1991
    %2103 = vmatprep.subr.bf16.mxu0 0
    %2104 = vmatpush1.bf16.msra.mxu0 %v1992
    %2105 = vmatprep.subr.bf16.mxu0 0
    %2106 = vmatpush1.bf16.msra.mxu0 %v1993
    %2107 = vmatprep.mubr.bf16.mxu0 %v1765
    %2108 = vmatmul.mubr.bf16.gmra.mrb[0].mxu0 %v1764
    %v2109 = vpop.f32.mrb[0].mxu0
    %v2110 = vadd.f32 %v2061, %v2109
    %v2111 = vpop.f32.mrb[0].mxu0
    %v2112 = vpop.f32.mrb[0].mxu0
    %v2113 = vadd.f32 %v2064, %v2112
    %v2114 = vpop.f32.mrb[0].mxu0
    %2115 = vmatprep.mubr.bf16.mxu0 %v1769
    %2116 = vmatmul.mubr.bf16.gmra.mrb[0].mxu0 %v1768
    %v2117 = vpop.f32.mrb[0].mxu0
    %v2118 = vadd.f32 %v2069, %v2117
    %v2119 = vpop.f32.mrb[0].mxu0
    %v2120 = vpop.f32.mrb[0].mxu0
    %v2121 = vadd.f32 %v2072, %v2120
    %v2122 = vpop.f32.mrb[0].mxu0
    %2123 = vdwg.mxu0
    %v2124 = vld [vmem:[%s8] sm:$0x1]
    %v2125 = vld [vmem:[%s9] sm:$0x1]
    %v2126 = vld [vmem:[%s10] sm:$0x1]
    %v2127 = vadd.f32 %v2110, %v2113
    %v2128 = vadd.f32 %v2127, %v2118
    %v2129 = vadd.f32 %v2128, %v2121
    %v2130 = vrot.slane %v2129, 4
    %v2131 = vadd.f32 %v2129, %v2130
    %v2132 = vrot.slane %v2131, 2
    %v2133 = vadd.f32 %v2131, %v2132
    %v2134 = vrot.slane %v2133, 1
    %v2135 = vadd.f32 %v2133, %v2134
    %v2136 = vmul.f32 %v2110, %v2110
    %v2137 = vmul.f32 %v2113, %v2113
    %v2138 = vmul.f32 %v2118, %v2118
    %v2139 = vmul.f32 %v2121, %v2121
    %v2140 = vadd.f32 %v2136, %v2137
    %v2141 = vadd.f32 %v2140, %v2138
    %v2142 = vadd.f32 %v2141, %v2139
    %v2143 = vrot.slane %v2142, 4
    %v2144 = vadd.f32 %v2142, %v2143
    %v2145 = vrot.slane %v2144, 2
    %v2146 = vadd.f32 %v2144, %v2145
    %v2147 = vrot.slane %v2146, 1
    %v2148 = vadd.f32 %v2146, %v2147
    %2149 = vmatprep.subr.mxu0 0.0
    %2150 = vmatpush1.msra.mxu0 %v396
    %2151 = vmatprep.subr.mxu0 0.0
    %2152 = vmatpush1.msra.mxu0 %v397
    %2153 = vmatprep.subr.mxu0 0.0
    %2154 = vmatpush1.msra.mxu0 %v398
    %2155 = vmatprep.subr.mxu0 0.0
    %2156 = vmatpush1.msra.mxu0 %v399
    %2157 = vmatprep.subr.mxu0 0.0
    %2158 = vmatpush1.msra.mxu0 %v400
    %2159 = vmatprep.subr.mxu0 0.0
    %2160 = vmatpush1.msra.mxu0 %v401
    %2161 = vmatprep.subr.mxu0 0.0
    %2162 = vmatpush1.msra.mxu0 %v402
    %2163 = vmatprep.subr.mxu0 0.0
    %2164 = vmatpush1.msra.mxu0 %v403
    %2165 = vmatprep.subr.mxu0 0.0
    %2166 = vmatpush1.msra.mxu0 %v404
    %2167 = vmatprep.subr.mxu0 0.0
    %2168 = vmatpush1.msra.mxu0 %v405
    %2169 = vmatprep.subr.mxu0 0.0
    %2170 = vmatpush1.msra.mxu0 %v406
    %2171 = vmatprep.subr.mxu0 0.0
    %2172 = vmatpush1.msra.mxu0 %v407
    %2173 = vmatprep.subr.mxu0 0.0
    %2174 = vmatpush1.msra.mxu0 %v408
    %2175 = vmatprep.subr.mxu0 0.0
    %2176 = vmatpush1.msra.mxu0 %v409
    %2177 = vmatprep.subr.mxu0 0.0
    %2178 = vmatpush1.msra.mxu0 %v410
    %2179 = vmatprep.subr.mxu0 0.0
    %2180 = vmatpush1.msra.mxu0 %v411
    %2181 = vmatprep.subr.mxu0 0.0
    %2182 = vmatpush1.msra.mxu0 0.0
    %2183 = vmatprep.subr.mxu0 0.0
    %2184 = vmatpush1.msra.mxu0 0.0
    %2185 = vmatprep.subr.mxu0 0.0
    %2186 = vmatpush1.msra.mxu0 0.0
    %2187 = vmatprep.subr.mxu0 0.0
    %2188 = vmatpush1.msra.mxu0 0.0
    %2189 = vmatprep.subr.mxu0 0.0
    %2190 = vmatpush1.msra.mxu0 0.0
    %2191 = vmatprep.subr.mxu0 0.0
    %2192 = vmatpush1.msra.mxu0 0.0
    %2193 = vmatprep.subr.mxu0 0.0
    %2194 = vmatpush1.msra.mxu0 0.0
    %2195 = vmatprep.subr.mxu0 0.0
    %2196 = vmatpush1.msra.mxu0 0.0
    %2197 = vmatprep.subr.mxu0 0.0
    %2198 = vmatpush1.msra.mxu0 0.0
    %2199 = vmatprep.subr.mxu0 0.0
    %2200 = vmatpush1.msra.mxu0 0.0
    %2201 = vmatprep.subr.mxu0 0.0
    %2202 = vmatpush1.msra.mxu0 0.0
    %2203 = vmatprep.subr.mxu0 0.0
    %2204 = vmatpush1.msra.mxu0 0.0
    %2205 = vmatprep.subr.mxu0 0.0
    %2206 = vmatpush1.msra.mxu0 0.0
    %2207 = vmatprep.subr.mxu0 0.0
    %2208 = vmatpush1.msra.mxu0 0.0
    %2209 = vmatprep.subr.mxu0 0.0
    %2210 = vmatpush1.msra.mxu0 0.0
    %2211 = vmatprep.subr.mxu0 0.0
    %2212 = vmatpush1.msra.mxu0 0.0
    %2213 = vmatprep.mubr.f32.mxu0 0.0
    %2214 = vmatmul.mubr.f32.gmra.mrb[0].mxu0 %v2135
    %v2215 = vpop.f32.mrb[0].mxu0
    %v2216 = vadd.f32 0.0, %v2215
    %v2217 = vpop.f32.mrb[0].mxu0
    %2218 = vdwg.mxu0
    %2219 = vmatprep.subr.mxu0 0.0
    %2220 = vmatpush1.msra.mxu0 %v396
    %2221 = vmatprep.subr.mxu0 0.0
    %2222 = vmatpush1.msra.mxu0 %v397
    %2223 = vmatprep.subr.mxu0 0.0
    %2224 = vmatpush1.msra.mxu0 %v398
    %2225 = vmatprep.subr.mxu0 0.0
    %2226 = vmatpush1.msra.mxu0 %v399
    %2227 = vmatprep.subr.mxu0 0.0
    %2228 = vmatpush1.msra.mxu0 %v400
    %2229 = vmatprep.subr.mxu0 0.0
    %2230 = vmatpush1.msra.mxu0 %v401
    %2231 = vmatprep.subr.mxu0 0.0
    %2232 = vmatpush1.msra.mxu0 %v402
    %2233 = vmatprep.subr.mxu0 0.0
    %2234 = vmatpush1.msra.mxu0 %v403
    %2235 = vmatprep.subr.mxu0 0.0
    %2236 = vmatpush1.msra.mxu0 %v404
    %2237 = vmatprep.subr.mxu0 0.0
    %2238 = vmatpush1.msra.mxu0 %v405
    %2239 = vmatprep.subr.mxu0 0.0
    %2240 = vmatpush1.msra.mxu0 %v406
    %2241 = vmatprep.subr.mxu0 0.0
    %2242 = vmatpush1.msra.mxu0 %v407
    %2243 = vmatprep.subr.mxu0 0.0
    %2244 = vmatpush1.msra.mxu0 %v408
    %2245 = vmatprep.subr.mxu0 0.0
    %2246 = vmatpush1.msra.mxu0 %v409
    %2247 = vmatprep.subr.mxu0 0.0
    %2248 = vmatpush1.msra.mxu0 %v410
    %2249 = vmatprep.subr.mxu0 0.0
    %2250 = vmatpush1.msra.mxu0 %v411
    %2251 = vmatprep.subr.mxu0 0.0
    %2252 = vmatpush1.msra.mxu0 0.0
    %2253 = vmatprep.subr.mxu0 0.0
    %2254 = vmatpush1.msra.mxu0 0.0
    %2255 = vmatprep.subr.mxu0 0.0
    %2256 = vmatpush1.msra.mxu0 0.0
    %2257 = vmatprep.subr.mxu0 0.0
    %2258 = vmatpush1.msra.mxu0 0.0
    %2259 = vmatprep.subr.mxu0 0.0
    %2260 = vmatpush1.msra.mxu0 0.0
    %2261 = vmatprep.subr.mxu0 0.0
    %2262 = vmatpush1.msra.mxu0 0.0
    %2263 = vmatprep.subr.mxu0 0.0
    %2264 = vmatpush1.msra.mxu0 0.0
    %2265 = vmatprep.subr.mxu0 0.0
    %2266 = vmatpush1.msra.mxu0 0.0
    %2267 = vmatprep.subr.mxu0 0.0
    %2268 = vmatpush1.msra.mxu0 0.0
    %2269 = vmatprep.subr.mxu0 0.0
    %2270 = vmatpush1.msra.mxu0 0.0
    %2271 = vmatprep.subr.mxu0 0.0
    %2272 = vmatpush1.msra.mxu0 0.0
    %2273 = vmatprep.subr.mxu0 0.0
    %2274 = vmatpush1.msra.mxu0 0.0
    %2275 = vmatprep.subr.mxu0 0.0
    %2276 = vmatpush1.msra.mxu0 0.0
    %2277 = vmatprep.subr.mxu0 0.0
    %2278 = vmatpush1.msra.mxu0 0.0
    %2279 = vmatprep.subr.mxu0 0.0
    %2280 = vmatpush1.msra.mxu0 0.0
    %2281 = vmatprep.subr.mxu0 0.0
    %2282 = vmatpush1.msra.mxu0 0.0
    %2283 = vmatprep.mubr.f32.mxu0 0.0
    %2284 = vmatmul.mubr.f32.gmra.mrb[0].mxu0 %v2148
    %v2285 = vpop.f32.mrb[0].mxu0
    %v2286 = vadd.f32 0.0, %v2285
    %v2287 = vpop.f32.mrb[0].mxu0
    %2288 = vdwg.mxu0
    %v2289 = vmul.f32 %v2216, 0.001953125
    %v2290 = vmul.f32 %v2286, 0.001953125
    %v2291 = vmul.f32 %v2289, %v2289
    %v2292 = vsub.f32 %v2290, %v2291
    %v2293 = vmul.f32 %v2124, %v2125
    %v2294 = vmul.f32 %v2124, %v2124
    %v2295 = vmul.f32 %v2294, %v2292
    %v2296 = vadd.f32 %v2295, 1e-05
    %v2297 = vrsqrt.pop %v2296
    %v2298 = vmul.f32 %v2293, %v2297
    %v2299 = vmul.f32 %v2289, %v2298
    %v2300 = vsub.f32 %v2126, %v2299
    %vm2301 = vcmask 64512
    %v2303 = vsel %vm2301, %v2298, 0
    %2305 = vmatprep.subr.mxu0 0.0
    %2306 = vmatpush1.msra.mxu0 %v426
    %2307 = vmatprep.subr.mxu0 0.0
    %2308 = vmatpush1.msra.mxu0 0.0
    %2309 = vmatprep.subr.mxu0 0.0
    %2310 = vmatpush1.msra.mxu0 0.0
    %2311 = vmatprep.subr.mxu0 0.0
    %2312 = vmatpush1.msra.mxu0 0.0
    %2313 = vmatprep.subr.mxu0 0.0
    %2314 = vmatpush1.msra.mxu0 0.0
    %2315 = vmatprep.subr.mxu0 0.0
    %2316 = vmatpush1.msra.mxu0 0.0
    %2317 = vmatprep.subr.mxu0 0.0
    %2318 = vmatpush1.msra.mxu0 0.0
    %2319 = vmatprep.subr.mxu0 0.0
    %2320 = vmatpush1.msra.mxu0 0.0
    %2321 = vmatprep.subr.mxu0 0.0
    %2322 = vmatpush1.msra.mxu0 0.0
    %2323 = vmatprep.subr.mxu0 0.0
    %2324 = vmatpush1.msra.mxu0 0.0
    %2325 = vmatprep.subr.mxu0 0.0
    %2326 = vmatpush1.msra.mxu0 0.0
    %2327 = vmatprep.subr.mxu0 0.0
    %2328 = vmatpush1.msra.mxu0 0.0
    %2329 = vmatprep.subr.mxu0 0.0
    %2330 = vmatpush1.msra.mxu0 0.0
    %2331 = vmatprep.subr.mxu0 0.0
    %2332 = vmatpush1.msra.mxu0 0.0
    %2333 = vmatprep.subr.mxu0 0.0
    %2334 = vmatpush1.msra.mxu0 0.0
    %2335 = vmatprep.subr.mxu0 0.0
    %2336 = vmatpush1.msra.mxu0 0.0
    %2337 = vmatprep.subr.mxu0 0.0
    %2338 = vmatpush1.msra.mxu0 0.0
    %2339 = vmatprep.subr.mxu0 0.0
    %2340 = vmatpush1.msra.mxu0 0.0
    %2341 = vmatprep.subr.mxu0 0.0
    %2342 = vmatpush1.msra.mxu0 0.0
    %2343 = vmatprep.subr.mxu0 0.0
    %2344 = vmatpush1.msra.mxu0 0.0
    %2345 = vmatprep.subr.mxu0 0.0
    %2346 = vmatpush1.msra.mxu0 0.0
    %2347 = vmatprep.subr.mxu0 0.0
    %2348 = vmatpush1.msra.mxu0 0.0
    %2349 = vmatprep.subr.mxu0 0.0
    %2350 = vmatpush1.msra.mxu0 0.0
    %2351 = vmatprep.subr.mxu0 0.0
    %2352 = vmatpush1.msra.mxu0 0.0
    %2353 = vmatprep.subr.mxu0 0.0
    %2354 = vmatpush1.msra.mxu0 0.0
    %2355 = vmatprep.subr.mxu0 0.0
    %2356 = vmatpush1.msra.mxu0 0.0
    %2357 = vmatprep.subr.mxu0 0.0
    %2358 = vmatpush1.msra.mxu0 0.0
    %2359 = vmatprep.subr.mxu0 0.0
    %2360 = vmatpush1.msra.mxu0 0.0
    %2361 = vmatprep.subr.mxu0 0.0
    %2362 = vmatpush1.msra.mxu0 0.0
    %2363 = vmatprep.subr.mxu0 0.0
    %2364 = vmatpush1.msra.mxu0 0.0
    %2365 = vmatprep.subr.mxu0 0.0
    %2366 = vmatpush1.msra.mxu0 0.0
    %2367 = vmatprep.subr.mxu0 0.0
    %2368 = vmatpush1.msra.mxu0 0.0
    %2369 = vmatprep.mubr.f32.mxu0 0.0
    %2370 = vmatmul.mubr.f32.gmra.mrb[0].mxu0 %v2303
    %v2371 = vpop.f32.mrb[0].mxu0
    %v2372 = vadd.f32 0.0, %v2371
    %v2373 = vpop.f32.mrb[0].mxu0
    %2374 = vdwg.mxu0
    %v2376 = vsel %vm2301, %v2300, 0
    %2378 = vmatprep.subr.mxu0 0.0
    %2379 = vmatpush1.msra.mxu0 %v426
    %2380 = vmatprep.subr.mxu0 0.0
    %2381 = vmatpush1.msra.mxu0 0.0
    %2382 = vmatprep.subr.mxu0 0.0
    %2383 = vmatpush1.msra.mxu0 0.0
    %2384 = vmatprep.subr.mxu0 0.0
    %2385 = vmatpush1.msra.mxu0 0.0
    %2386 = vmatprep.subr.mxu0 0.0
    %2387 = vmatpush1.msra.mxu0 0.0
    %2388 = vmatprep.subr.mxu0 0.0
    %2389 = vmatpush1.msra.mxu0 0.0
    %2390 = vmatprep.subr.mxu0 0.0
    %2391 = vmatpush1.msra.mxu0 0.0
    %2392 = vmatprep.subr.mxu0 0.0
    %2393 = vmatpush1.msra.mxu0 0.0
    %2394 = vmatprep.subr.mxu0 0.0
    %2395 = vmatpush1.msra.mxu0 0.0
    %2396 = vmatprep.subr.mxu0 0.0
    %2397 = vmatpush1.msra.mxu0 0.0
    %2398 = vmatprep.subr.mxu0 0.0
    %2399 = vmatpush1.msra.mxu0 0.0
    %2400 = vmatprep.subr.mxu0 0.0
    %2401 = vmatpush1.msra.mxu0 0.0
    %2402 = vmatprep.subr.mxu0 0.0
    %2403 = vmatpush1.msra.mxu0 0.0
    %2404 = vmatprep.subr.mxu0 0.0
    %2405 = vmatpush1.msra.mxu0 0.0
    %2406 = vmatprep.subr.mxu0 0.0
    %2407 = vmatpush1.msra.mxu0 0.0
    %2408 = vmatprep.subr.mxu0 0.0
    %2409 = vmatpush1.msra.mxu0 0.0
    %2410 = vmatprep.subr.mxu0 0.0
    %2411 = vmatpush1.msra.mxu0 0.0
    %2412 = vmatprep.subr.mxu0 0.0
    %2413 = vmatpush1.msra.mxu0 0.0
    %2414 = vmatprep.subr.mxu0 0.0
    %2415 = vmatpush1.msra.mxu0 0.0
    %2416 = vmatprep.subr.mxu0 0.0
    %2417 = vmatpush1.msra.mxu0 0.0
    %2418 = vmatprep.subr.mxu0 0.0
    %2419 = vmatpush1.msra.mxu0 0.0
    %2420 = vmatprep.subr.mxu0 0.0
    %2421 = vmatpush1.msra.mxu0 0.0
    %2422 = vmatprep.subr.mxu0 0.0
    %2423 = vmatpush1.msra.mxu0 0.0
    %2424 = vmatprep.subr.mxu0 0.0
    %2425 = vmatpush1.msra.mxu0 0.0
    %2426 = vmatprep.subr.mxu0 0.0
    %2427 = vmatpush1.msra.mxu0 0.0
    %2428 = vmatprep.subr.mxu0 0.0
    %2429 = vmatpush1.msra.mxu0 0.0
    %2430 = vmatprep.subr.mxu0 0.0
    %2431 = vmatpush1.msra.mxu0 0.0
    %2432 = vmatprep.subr.mxu0 0.0
    %2433 = vmatpush1.msra.mxu0 0.0
    %2434 = vmatprep.subr.mxu0 0.0
    %2435 = vmatpush1.msra.mxu0 0.0
    %2436 = vmatprep.subr.mxu0 0.0
    %2437 = vmatpush1.msra.mxu0 0.0
    %2438 = vmatprep.subr.mxu0 0.0
    %2439 = vmatpush1.msra.mxu0 0.0
    %2440 = vmatprep.subr.mxu0 0.0
    %2441 = vmatpush1.msra.mxu0 0.0
    %2442 = vmatprep.mubr.f32.mxu0 0.0
    %2443 = vmatmul.mubr.f32.gmra.mrb[0].mxu0 %v2376
    %v2444 = vpop.f32.mrb[0].mxu0
    %v2445 = vadd.f32 0.0, %v2444
    %v2446 = vpop.f32.mrb[0].mxu0
    %2447 = vdwg.mxu0
    %v2448 = vlaneseq
    %v2449 = vshrl.u32 %v2448, 7
    %v2450 = vsub.s32 0, %v2449
    %v2451 = vrot.slane %v2372, %v2450
    %v2452 = vmul.f32 %v2110, %v2451
    %v2453 = vmul.f32 %v2113, %v2451
    %v2454 = vmul.f32 %v2118, %v2451
    %v2455 = vmul.f32 %v2121, %v2451
    %v2456 = vlaneseq
    %v2457 = vshrl.u32 %v2456, 7
    %v2458 = vsub.s32 0, %v2457
    %v2459 = vrot.slane %v2445, %v2458
    %v2460 = vadd.f32 %v2452, %v2459
    %v2461 = vadd.f32 %v2453, %v2459
    %v2462 = vadd.f32 %v2454, %v2459
    %v2463 = vadd.f32 %v2455, %v2459
    %v2464 = vld [vmem:[%s11] sm:$0x1]
    %v2466 = vlaneseq
    %v2467 = vshrl.u32 %v2466, 7
    %v2468 = vsub.s32 0, %v2467
    %v2469 = vrot.slane %v2464, %v2468
    %v2471 = vadd.f32 %v2460, %v2469
    %v2472 = vadd.f32 %v2461, %v2469
    %v2473 = vadd.f32 %v2462, %v2469
    %v2474 = vadd.f32 %v2463, %v2469
    %v2475 = vld [vmem:[%s12] sm:$0x1]
    %vm2476 = vcmp.gt.f32.partialorder %v2471, 0.0
    %vm2477 = vcmp.gt.f32.partialorder %v2472, 0.0
    %vm2478 = vcmp.gt.f32.partialorder %v2473, 0.0
    %vm2479 = vcmp.gt.f32.partialorder %v2474, 0.0
    %v2481 = vlaneseq
    %v2482 = vshrl.u32 %v2481, 7
    %v2483 = vsub.s32 0, %v2482
    %v2484 = vrot.slane %v2475, %v2483
    %v2486 = vmul.f32 %v2484, %v2471
    %v2487 = vmul.f32 %v2484, %v2472
    %v2488 = vmul.f32 %v2484, %v2473
    %v2489 = vmul.f32 %v2484, %v2474
    %v2490 = vsel %vm2476, %v2471, %v2486
    %v2491 = vsel %vm2477, %v2472, %v2487
    %v2492 = vsel %vm2478, %v2473, %v2488
    %v2493 = vsel %vm2479, %v2474, %v2489
    %v2494 = vld [vmem:[%s13] sm:$0x1]
    %v2496 = vlaneseq
    %v2497 = vshrl.u32 %v2496, 7
    %v2498 = vsub.s32 0, %v2497
    %v2499 = vrot.slane %v2494, %v2498
    %v2501 = vadd.f32 %v2490, %v2499
    %v2502 = vadd.f32 %v2491, %v2499
    %v2503 = vadd.f32 %v2492, %v2499
    %v2504 = vadd.f32 %v2493, %v2499
    %s2505 = sld [smem:[#allocation2 + $0x1]]
    %v2506 = vstv %s2505
    %v2507 = vmul.f32 %v2501, %v2506
    %v2508 = vmul.f32 %v2502, %v2506
    %v2509 = vmul.f32 %v2503, %v2506
    %v2510 = vmul.f32 %v2504, %v2506
    %v2511 = vround.ne.pseudo %v2507
    %v2512 = vround.ne.pseudo %v2508
    %v2513 = vround.ne.pseudo %v2509
    %v2514 = vround.ne.pseudo %v2510
    %v2515 = vmax.f32 %v2511, 0.0
    %v2516 = vmax.f32 %v2512, 0.0
    %v2517 = vmax.f32 %v2513, 0.0
    %v2518 = vmax.f32 %v2514, 0.0
    %v2519 = vmin.f32 %v2515, 15.0
    %v2520 = vmin.f32 %v2516, 15.0
    %v2521 = vmin.f32 %v2517, 15.0
    %v2522 = vmin.f32 %v2518, 15.0
    %v2523 = vpack.c.bf16 %v2520, %v2519
    %v2524 = vpack.c.bf16 %v2522, %v2521
    %vm2525 = vsmask.f32 256
    %v2527 = vshrl.u32 %v2523, 16
    %v2529 = vrot.slane %v2527, 7
    %v2530 = vshll.u32 %v2523, 16
    %v2532 = vor.u32 %v2529, %v2530
    %v2534 = vshrl.u32 %v2524, 16
    %v2536 = vrot.slane %v2534, 7
    %v2537 = vshll.u32 %v2524, 16
    %v2539 = vor.u32 %v2536, %v2537
    %v2540 = vsel %vm2525, %v2529, %v2539
    %vm2543 = vcmask 1040384
    %vm2544 = vmand %vm2543, %vm2525
    %v2545 = vsel %vm2544, 0, %v2532
    %vm2546 = vsmask.f32 7424
    %v2547 = vrot.slane %v2530, 1
    %v2548 = vor.u32 %v2527, %v2547
    %v2549 = vrot.slane %v2537, 1
    %v2550 = vsel %vm2546, %v2548, %v2549
    %v2551 = vor.u32 %v2534, %v2549
    %vm2554 = vcmask 1047552
    %vm2555 = vmand %vm2554, %vm2546
    %v2556 = vsel %vm2555, %v2551, 0
    %vm2557 = vcmp.lt.s32.totalorder %v154, 0
    %v2558 = vsub.s32 0, %v154
    %v2559 = vsel %vm2557, %v2558, %v154
    %v2560 = vshrl.u32 %v2559, 4
    %v2561 = vand.u32 %v2559, 15
    %v2562 = vsub.s32 0, %v2561
    %v2563 = vsel %vm2557, %v2562, %v2561
    %vm2564 = vcmp.lt.s32.totalorder %v155, 0
    %v2565 = vsub.s32 0, %v155
    %v2566 = vsel %vm2564, %v2565, %v155
    %v2567 = vshrl.u32 %v2566, 4
    %v2568 = vand.u32 %v2566, 15
    %v2569 = vsub.s32 0, %v2568
    %v2570 = vsel %vm2564, %v2569, %v2568
    %vm2571 = vcmp.lt.s32.totalorder %v156, 0
    %v2572 = vsub.s32 0, %v156
    %v2573 = vsel %vm2571, %v2572, %v156
    %v2574 = vshrl.u32 %v2573, 4
    %v2575 = vand.u32 %v2573, 15
    %v2576 = vsub.s32 0, %v2575
    %v2577 = vsel %vm2571, %v2576, %v2575
    %vm2578 = vcmp.lt.s32.totalorder %v157, 0
    %v2579 = vsub.s32 0, %v157
    %v2580 = vsel %vm2578, %v2579, %v157
    %v2581 = vshrl.u32 %v2580, 4
    %v2582 = vand.u32 %v2580, 15
    %v2583 = vsub.s32 0, %v2582
    %v2584 = vsel %vm2578, %v2583, %v2582
    %vm2585 = vcmp.ne.s32.totalorder %v2563, 0
    %vm2586 = vcmp.ne.s32.totalorder %v2570, 0
    %vm2587 = vcmp.ne.s32.totalorder %v2577, 0
    %vm2588 = vcmp.ne.s32.totalorder %v2584, 0
    %vm2589 = vcmp.lt.s32.totalorder %v2563, 0
    %vm2590 = vcmp.lt.s32.totalorder %v2570, 0
    %vm2591 = vcmp.lt.s32.totalorder %v2577, 0
    %vm2592 = vcmp.lt.s32.totalorder %v2584, 0
    %vm2593 = vmand %vm2589, %vm2585
    %vm2594 = vmand %vm2590, %vm2586
    %vm2595 = vmand %vm2591, %vm2587
    %vm2596 = vmand %vm2592, %vm2588
    %v2597 = vadd.s32 %v2563, 16
    %v2598 = vadd.s32 %v2570, 16
    %v2599 = vadd.s32 %v2577, 16
    %v2600 = vadd.s32 %v2584, 16
    %v2601 = vsel %vm2593, %v2597, %v2563
    %v2602 = vsel %vm2594, %v2598, %v2570
    %v2603 = vsel %vm2595, %v2599, %v2577
    %v2604 = vsel %vm2596, %v2600, %v2584
    %vm2605 = vcmp.gt.s32.totalorder %v2601, 0
    %vm2606 = vcmp.gt.s32.totalorder %v2602, 0
    %vm2607 = vcmp.gt.s32.totalorder %v2603, 0
    %vm2608 = vcmp.gt.s32.totalorder %v2604, 0
    %v2609 = vsel %vm2605, 1, 0
    %v2610 = vsel %vm2606, 1, 0
    %v2611 = vsel %vm2607, 1, 0
    %v2612 = vsel %vm2608, 1, 0
    %vm2613 = vcmp.eq.s32.totalorder %v2609, 1
    %vm2614 = vcmp.eq.s32.totalorder %v2610, 1
    %vm2615 = vcmp.eq.s32.totalorder %v2611, 1
    %vm2616 = vcmp.eq.s32.totalorder %v2612, 1
    %vm2617 = vmpackc.low %vm2613, %vm2613
    %vm2618 = vmpackc.low %vm2614, %vm2614
    %vm2619 = vmpackc.low %vm2615, %vm2615
    %vm2620 = vmpackc.low %vm2616, %vm2616
    %v2621 = vsel %vm2617, 65537, 0
    %v2622 = vsel %vm2618, 65537, 0
    %v2623 = vsel %vm2619, 65537, 0
    %v2624 = vsel %vm2620, 65537, 0
    %v2625 = vunpack.c.l.b16 %v2621
    %v2626 = vunpack.c.l.b16 %v2622
    %v2627 = vunpack.c.l.b16 %v2623
    %v2628 = vunpack.c.l.b16 %v2624
    %v2629 = vpack.c.b16 %v2626, %v2625
    %v2630 = vpack.c.b16 %v2628, %v2627
    %vm2631 = vcmp.ne.s16.totalorder %v2629, 0
    %vm2632 = vcmp.ne.s16.totalorder %v2630, 0
    %v2633 = vsel %vm2631, %v2545, 0
    %v2634 = vsel %vm2632, %v2540, 0
    %vm2635 = vcmp.lt.s32.totalorder %v2601, 15
    %vm2636 = vcmp.lt.s32.totalorder %v2602, 15
    %vm2637 = vcmp.lt.s32.totalorder %v2603, 15
    %vm2638 = vcmp.lt.s32.totalorder %v2604, 15
    %v2639 = vsel %vm2635, 1, 0
    %v2640 = vsel %vm2636, 1, 0
    %v2641 = vsel %vm2637, 1, 0
    %v2642 = vsel %vm2638, 1, 0
    %vm2643 = vcmp.eq.s32.totalorder %v2639, 1
    %vm2644 = vcmp.eq.s32.totalorder %v2640, 1
    %vm2645 = vcmp.eq.s32.totalorder %v2641, 1
    %vm2646 = vcmp.eq.s32.totalorder %v2642, 1
    %vm2647 = vmpackc.low %vm2643, %vm2643
    %vm2648 = vmpackc.low %vm2644, %vm2644
    %vm2649 = vmpackc.low %vm2645, %vm2645
    %vm2650 = vmpackc.low %vm2646, %vm2646
    %v2651 = vsel %vm2647, 65537, 0
    %v2652 = vsel %vm2648, 65537, 0
    %v2653 = vsel %vm2649, 65537, 0
    %v2654 = vsel %vm2650, 65537, 0
    %v2655 = vunpack.c.l.b16 %v2651
    %v2656 = vunpack.c.l.b16 %v2652
    %v2657 = vunpack.c.l.b16 %v2653
    %v2658 = vunpack.c.l.b16 %v2654
    %v2659 = vpack.c.b16 %v2656, %v2655
    %v2660 = vpack.c.b16 %v2658, %v2657
    %vm2661 = vcmp.ne.s16.totalorder %v2659, 0
    %vm2662 = vcmp.ne.s16.totalorder %v2660, 0
    %v2663 = vsel %vm2661, %v2550, 0
    %v2664 = vsel %vm2662, %v2556, 0
    %v2665 = vld [vmem:[#allocation9] sm:$0xf]
    %v2666 = vld [vmem:[#allocation9 + $0x4] sm:$0xf]
    %v2667 = vld [vmem:[#allocation9 + $0x8] sm:$0xf]
    %v2668 = vld [vmem:[#allocation9 + $0xc] sm:$0xf]
    %v2669 = vld [vmem:[#allocation9 + $0x10] sm:$0xf]
    %v2670 = vld [vmem:[#allocation9 + $0x14] sm:$0xf]
    %v2671 = vld [vmem:[#allocation9 + $0x18] sm:$0xf]
    %v2672 = vld [vmem:[#allocation9 + $0x1c] sm:$0xf]
    %v2673 = vld [vmem:[#allocation9 + $0x20] sm:$0xf]
    %v2674 = vld [vmem:[#allocation9 + $0x24] sm:$0xf]
    %v2675 = vld [vmem:[#allocation9 + $0x28] sm:$0xf]
    %v2676 = vld [vmem:[#allocation9 + $0x2c] sm:$0xf]
    %v2677 = vld [vmem:[#allocation9 + $0x30] sm:$0xf]
    %v2678 = vld [vmem:[#allocation9 + $0x34] sm:$0xf]
    %v2679 = vld [vmem:[#allocation9 + $0x38] sm:$0xf]
    %v2680 = vld [vmem:[#allocation9 + $0x3c] sm:$0xf]
    %v2681 = vld [vmem:[#allocation9 + $0x40] sm:$0xf]
    %v2682 = vld [vmem:[#allocation9 + $0x44] sm:$0xf]
    %v2683 = vld [vmem:[#allocation9 + $0x48] sm:$0xf]
    %v2684 = vld [vmem:[#allocation9 + $0x4c] sm:$0xf]
    %v2685 = vld [vmem:[#allocation9 + $0x50] sm:$0xf]
    %v2686 = vld [vmem:[#allocation9 + $0x54] sm:$0xf]
    %v2687 = vld [vmem:[#allocation9 + $0x58] sm:$0xf]
    %v2688 = vld [vmem:[#allocation9 + $0x5c] sm:$0xf]
    %v2689 = vld [vmem:[#allocation9 + $0x60] sm:$0xf]
    %v2690 = vld [vmem:[#allocation9 + $0x64] sm:$0xf]
    %v2691 = vld [vmem:[#allocation9 + $0x68] sm:$0xf]
    %v2692 = vld [vmem:[#allocation9 + $0x6c] sm:$0xf]
    %v2693 = vld [vmem:[#allocation9 + $0x70] sm:$0xf]
    %v2694 = vld [vmem:[#allocation9 + $0x74] sm:$0xf]
    %v2695 = vld [vmem:[#allocation9 + $0x78] sm:$0xf]
    %v2696 = vld [vmem:[#allocation9 + $0x7c] sm:$0xf]
    %v2697 = vld [vmem:[#allocation9 + $0x80] sm:$0xf]
    %v2698 = vld [vmem:[#allocation9 + $0x84] sm:$0xf]
    %v2699 = vld [vmem:[#allocation9 + $0x88] sm:$0xf]
    %v2700 = vld [vmem:[#allocation9 + $0x8c] sm:$0xf]
    %v2701 = vld [vmem:[#allocation9 + $0x90] sm:$0xf]
    %v2702 = vld [vmem:[#allocation9 + $0x94] sm:$0xf]
    %v2703 = vld [vmem:[#allocation9 + $0x98] sm:$0xf]
    %v2704 = vld [vmem:[#allocation9 + $0x9c] sm:$0xf]
    %v2705 = vld [vmem:[#allocation9 + $0xa0] sm:$0xf]
    %v2706 = vld [vmem:[#allocation9 + $0xa4] sm:$0xf]
    %v2707 = vld [vmem:[#allocation9 + $0xa8] sm:$0xf]
    %v2708 = vld [vmem:[#allocation9 + $0xac] sm:$0xf]
    %v2709 = vld [vmem:[#allocation9 + $0xb0] sm:$0xf]
    %v2710 = vld [vmem:[#allocation9 + $0xb4] sm:$0xf]
    %v2711 = vld [vmem:[#allocation9 + $0xb8] sm:$0xf]
    %v2712 = vld [vmem:[#allocation9 + $0xbc] sm:$0xf]
    %v2761 = vunpack.c.l.b16 %v2665
    %v2762 = vunpack.c.l.b16 %v2666
    %v2763 = vunpack.c.l.b16 %v2667
    %v2764 = vunpack.c.l.b16 %v2668
    %v2765 = vunpack.c.l.b16 %v2669
    %v2766 = vunpack.c.l.b16 %v2670
    %v2767 = vunpack.c.l.b16 %v2671
    %v2768 = vunpack.c.l.b16 %v2672
    %v2769 = vunpack.c.l.b16 %v2673
    %v2770 = vunpack.c.l.b16 %v2674
    %v2771 = vunpack.c.l.b16 %v2675
    %v2772 = vunpack.c.l.b16 %v2676
    %v2773 = vunpack.c.l.b16 %v2677
    %v2774 = vunpack.c.l.b16 %v2678
    %v2775 = vunpack.c.l.b16 %v2679
    %v2776 = vunpack.c.l.b16 %v2680
    %v2777 = vunpack.c.l.b16 %v2681
    %v2778 = vunpack.c.l.b16 %v2682
    %v2779 = vunpack.c.l.b16 %v2683
    %v2780 = vunpack.c.l.b16 %v2684
    %v2781 = vunpack.c.l.b16 %v2685
    %v2782 = vunpack.c.l.b16 %v2686
    %v2783 = vunpack.c.l.b16 %v2687
    %v2784 = vunpack.c.l.b16 %v2688
    %v2785 = vunpack.c.l.b16 %v2689
    %v2786 = vunpack.c.l.b16 %v2690
    %v2787 = vunpack.c.l.b16 %v2691
    %v2788 = vunpack.c.l.b16 %v2692
    %v2789 = vunpack.c.l.b16 %v2693
    %v2790 = vunpack.c.l.b16 %v2694
    %v2791 = vunpack.c.l.b16 %v2695
    %v2792 = vunpack.c.l.b16 %v2696
    %v2793 = vunpack.c.l.b16 %v2697
    %v2794 = vunpack.c.l.b16 %v2698
    %v2795 = vunpack.c.l.b16 %v2699
    %v2796 = vunpack.c.l.b16 %v2700
    %v2797 = vunpack.c.l.b16 %v2701
    %v2798 = vunpack.c.l.b16 %v2702
    %v2799 = vunpack.c.l.b16 %v2703
    %v2800 = vunpack.c.l.b16 %v2704
    %v2801 = vunpack.c.l.b16 %v2705
    %v2802 = vunpack.c.l.b16 %v2706
    %v2803 = vunpack.c.l.b16 %v2707
    %v2804 = vunpack.c.l.b16 %v2708
    %v2805 = vunpack.c.l.b16 %v2709
    %v2806 = vunpack.c.l.b16 %v2710
    %v2807 = vunpack.c.l.b16 %v2711
    %v2808 = vunpack.c.l.b16 %v2712
    %v2809 = vpack.c.b16 %v2762, %v2761
    %v2810 = vpack.c.b16 %v2764, %v2763
    %v2811 = vpack.c.b16 %v2766, %v2765
    %v2812 = vpack.c.b16 %v2768, %v2767
    %v2813 = vpack.c.b16 %v2770, %v2769
    %v2814 = vpack.c.b16 %v2772, %v2771
    %v2815 = vpack.c.b16 %v2774, %v2773
    %v2816 = vpack.c.b16 %v2776, %v2775
    %v2817 = vpack.c.b16 %v2778, %v2777
    %v2818 = vpack.c.b16 %v2780, %v2779
    %v2819 = vpack.c.b16 %v2782, %v2781
    %v2820 = vpack.c.b16 %v2784, %v2783
    %v2821 = vpack.c.b16 %v2786, %v2785
    %v2822 = vpack.c.b16 %v2788, %v2787
    %v2823 = vpack.c.b16 %v2790, %v2789
    %v2824 = vpack.c.b16 %v2792, %v2791
    %v2825 = vpack.c.b16 %v2794, %v2793
    %v2826 = vpack.c.b16 %v2796, %v2795
    %v2827 = vpack.c.b16 %v2798, %v2797
    %v2828 = vpack.c.b16 %v2800, %v2799
    %v2829 = vpack.c.b16 %v2802, %v2801
    %v2830 = vpack.c.b16 %v2804, %v2803
    %v2831 = vpack.c.b16 %v2806, %v2805
    %v2832 = vpack.c.b16 %v2808, %v2807
    %2857 = vmatprep.subr.bf16.mxu0 0
    %2858 = vmatpush1.bf16.msra.mxu0 %v2809
    %2859 = vmatprep.subr.bf16.mxu0 0
    %2860 = vmatpush1.bf16.msra.mxu0 %v2810
    %2861 = vmatprep.subr.bf16.mxu0 0
    %2862 = vmatpush1.bf16.msra.mxu0 %v2811
    %2863 = vmatprep.subr.bf16.mxu0 0
    %2864 = vmatpush1.bf16.msra.mxu0 %v2812
    %2865 = vmatprep.subr.bf16.mxu0 0
    %2866 = vmatpush1.bf16.msra.mxu0 %v2813
    %2867 = vmatprep.subr.bf16.mxu0 0
    %2868 = vmatpush1.bf16.msra.mxu0 %v2814
    %2869 = vmatprep.subr.bf16.mxu0 0
    %2870 = vmatpush1.bf16.msra.mxu0 %v2815
    %2871 = vmatprep.subr.bf16.mxu0 0
    %2872 = vmatpush1.bf16.msra.mxu0 %v2816
    %2873 = vmatprep.subr.bf16.mxu0 0
    %2874 = vmatpush1.bf16.msra.mxu0 %v2817
    %2875 = vmatprep.subr.bf16.mxu0 0
    %2876 = vmatpush1.bf16.msra.mxu0 %v2818
    %2877 = vmatprep.subr.bf16.mxu0 0
    %2878 = vmatpush1.bf16.msra.mxu0 %v2819
    %2879 = vmatprep.subr.bf16.mxu0 0
    %2880 = vmatpush1.bf16.msra.mxu0 %v2820
    %2881 = vmatprep.subr.bf16.mxu0 0
    %2882 = vmatpush1.bf16.msra.mxu0 %v2821
    %2883 = vmatprep.subr.bf16.mxu0 0
    %2884 = vmatpush1.bf16.msra.mxu0 %v2822
    %2885 = vmatprep.subr.bf16.mxu0 0
    %2886 = vmatpush1.bf16.msra.mxu0 %v2823
    %2887 = vmatprep.subr.bf16.mxu0 0
    %2888 = vmatpush1.bf16.msra.mxu0 %v2824
    %2889 = vmatprep.mubr.bf16.mxu0 %v2523
    %2890 = vmatmul.mubr.bf16.gmra.mrb[0].mxu0 %v2633
    %v2891 = vpop.f32.mrb[0].mxu0
    %v2892 = vadd.f32 0.0, %v2891
    %v2893 = vpop.f32.mrb[0].mxu0
    %v2894 = vpop.f32.mrb[0].mxu0
    %v2895 = vadd.f32 0.0, %v2894
    %v2896 = vpop.f32.mrb[0].mxu0
    %2897 = vmatprep.mubr.bf16.mxu0 %v2524
    %2898 = vmatmul.mubr.bf16.gmra.mrb[0].mxu0 %v2634
    %v2899 = vpop.f32.mrb[0].mxu0
    %v2900 = vadd.f32 0.0, %v2899
    %v2901 = vpop.f32.mrb[0].mxu0
    %v2902 = vpop.f32.mrb[0].mxu0
    %v2903 = vadd.f32 0.0, %v2902
    %v2904 = vpop.f32.mrb[0].mxu0
    %2905 = vdwg.mxu0
    %2906 = vmatprep.subr.bf16.mxu0 0
    %2907 = vmatpush1.bf16.msra.mxu0 %v2825
    %2908 = vmatprep.subr.bf16.mxu0 0
    %2909 = vmatpush1.bf16.msra.mxu0 %v2826
    %2910 = vmatprep.subr.bf16.mxu0 0
    %2911 = vmatpush1.bf16.msra.mxu0 %v2827
    %2912 = vmatprep.subr.bf16.mxu0 0
    %2913 = vmatpush1.bf16.msra.mxu0 %v2828
    %2914 = vmatprep.subr.bf16.mxu0 0
    %2915 = vmatpush1.bf16.msra.mxu0 %v2829
    %2916 = vmatprep.subr.bf16.mxu0 0
    %2917 = vmatpush1.bf16.msra.mxu0 %v2830
    %2918 = vmatprep.subr.bf16.mxu0 0
    %2919 = vmatpush1.bf16.msra.mxu0 %v2831
    %2920 = vmatprep.subr.bf16.mxu0 0
    %2921 = vmatpush1.bf16.msra.mxu0 %v2832
    %2922 = vmatprep.subr.bf16.mxu0 0
    %2923 = vmatpush1.bf16.msra.mxu0 0
    %2924 = vmatprep.subr.bf16.mxu0 0
    %2925 = vmatpush1.bf16.msra.mxu0 0
    %2926 = vmatprep.subr.bf16.mxu0 0
    %2927 = vmatpush1.bf16.msra.mxu0 0
    %2928 = vmatprep.subr.bf16.mxu0 0
    %2929 = vmatpush1.bf16.msra.mxu0 0
    %2930 = vmatprep.subr.bf16.mxu0 0
    %2931 = vmatpush1.bf16.msra.mxu0 0
    %2932 = vmatprep.subr.bf16.mxu0 0
    %2933 = vmatpush1.bf16.msra.mxu0 0
    %2934 = vmatprep.subr.bf16.mxu0 0
    %2935 = vmatpush1.bf16.msra.mxu0 0
    %2936 = vmatprep.subr.bf16.mxu0 0
    %2937 = vmatpush1.bf16.msra.mxu0 0
    %2938 = vmatprep.mubr.bf16.mxu0 0
    %2939 = vmatmul.mubr.bf16.gmra.mrb[0].mxu0 %v2663
    %v2940 = vpop.f32.mrb[0].mxu0
    %v2941 = vadd.f32 %v2892, %v2940
    %v2942 = vpop.f32.mrb[0].mxu0
    %v2943 = vpop.f32.mrb[0].mxu0
    %v2944 = vadd.f32 %v2895, %v2943
    %v2945 = vpop.f32.mrb[0].mxu0
    %2946 = vmatprep.mubr.bf16.mxu0 0
    %2947 = vmatmul.mubr.bf16.gmra.mrb[0].mxu0 %v2664
    %v2948 = vpop.f32.mrb[0].mxu0
    %v2949 = vadd.f32 %v2900, %v2948
    %v2950 = vpop.f32.mrb[0].mxu0
    %v2951 = vpop.f32.mrb[0].mxu0
    %v2952 = vadd.f32 %v2903, %v2951
    %v2953 = vpop.f32.mrb[0].mxu0
    %2954 = vdwg.mxu0
    %v2955 = vld [vmem:[%s14] sm:$0x1]
    %v2956 = vld [vmem:[%s15] sm:$0x1]
    %v2957 = vld [vmem:[%s16] sm:$0x1]
    %v2958 = vadd.f32 %v2941, %v2944
    %v2959 = vadd.f32 %v2958, %v2949
    %v2960 = vadd.f32 %v2959, %v2952
    %v2961 = vrot.slane %v2960, 4
    %v2962 = vadd.f32 %v2960, %v2961
    %v2963 = vrot.slane %v2962, 2
    %v2964 = vadd.f32 %v2962, %v2963
    %v2965 = vrot.slane %v2964, 1
    %v2966 = vadd.f32 %v2964, %v2965
    %v2967 = vmul.f32 %v2941, %v2941
    %v2968 = vmul.f32 %v2944, %v2944
    %v2969 = vmul.f32 %v2949, %v2949
    %v2970 = vmul.f32 %v2952, %v2952
    %v2971 = vadd.f32 %v2967, %v2968
    %v2972 = vadd.f32 %v2971, %v2969
    %v2973 = vadd.f32 %v2972, %v2970
    %v2974 = vrot.slane %v2973, 4
    %v2975 = vadd.f32 %v2973, %v2974
    %v2976 = vrot.slane %v2975, 2
    %v2977 = vadd.f32 %v2975, %v2976
    %v2978 = vrot.slane %v2977, 1
    %v2979 = vadd.f32 %v2977, %v2978
    %2980 = vmatprep.subr.mxu0 0.0
    %2981 = vmatpush1.msra.mxu0 %v396
    %2982 = vmatprep.subr.mxu0 0.0
    %2983 = vmatpush1.msra.mxu0 %v397
    %2984 = vmatprep.subr.mxu0 0.0
    %2985 = vmatpush1.msra.mxu0 %v398
    %2986 = vmatprep.subr.mxu0 0.0
    %2987 = vmatpush1.msra.mxu0 %v399
    %2988 = vmatprep.subr.mxu0 0.0
    %2989 = vmatpush1.msra.mxu0 %v400
    %2990 = vmatprep.subr.mxu0 0.0
    %2991 = vmatpush1.msra.mxu0 %v401
    %2992 = vmatprep.subr.mxu0 0.0
    %2993 = vmatpush1.msra.mxu0 %v402
    %2994 = vmatprep.subr.mxu0 0.0
    %2995 = vmatpush1.msra.mxu0 %v403
    %2996 = vmatprep.subr.mxu0 0.0
    %2997 = vmatpush1.msra.mxu0 %v404
    %2998 = vmatprep.subr.mxu0 0.0
    %2999 = vmatpush1.msra.mxu0 %v405
    %3000 = vmatprep.subr.mxu0 0.0
    %3001 = vmatpush1.msra.mxu0 %v406
    %3002 = vmatprep.subr.mxu0 0.0
    %3003 = vmatpush1.msra.mxu0 %v407
    %3004 = vmatprep.subr.mxu0 0.0
    %3005 = vmatpush1.msra.mxu0 %v408
    %3006 = vmatprep.subr.mxu0 0.0
    %3007 = vmatpush1.msra.mxu0 %v409
    %3008 = vmatprep.subr.mxu0 0.0
    %3009 = vmatpush1.msra.mxu0 %v410
    %3010 = vmatprep.subr.mxu0 0.0
    %3011 = vmatpush1.msra.mxu0 %v411
    %3012 = vmatprep.subr.mxu0 0.0
    %3013 = vmatpush1.msra.mxu0 0.0
    %3014 = vmatprep.subr.mxu0 0.0
    %3015 = vmatpush1.msra.mxu0 0.0
    %3016 = vmatprep.subr.mxu0 0.0
    %3017 = vmatpush1.msra.mxu0 0.0
    %3018 = vmatprep.subr.mxu0 0.0
    %3019 = vmatpush1.msra.mxu0 0.0
    %3020 = vmatprep.subr.mxu0 0.0
    %3021 = vmatpush1.msra.mxu0 0.0
    %3022 = vmatprep.subr.mxu0 0.0
    %3023 = vmatpush1.msra.mxu0 0.0
    %3024 = vmatprep.subr.mxu0 0.0
    %3025 = vmatpush1.msra.mxu0 0.0
    %3026 = vmatprep.subr.mxu0 0.0
    %3027 = vmatpush1.msra.mxu0 0.0
    %3028 = vmatprep.subr.mxu0 0.0
    %3029 = vmatpush1.msra.mxu0 0.0
    %3030 = vmatprep.subr.mxu0 0.0
    %3031 = vmatpush1.msra.mxu0 0.0
    %3032 = vmatprep.subr.mxu0 0.0
    %3033 = vmatpush1.msra.mxu0 0.0
    %3034 = vmatprep.subr.mxu0 0.0
    %3035 = vmatpush1.msra.mxu0 0.0
    %3036 = vmatprep.subr.mxu0 0.0
    %3037 = vmatpush1.msra.mxu0 0.0
    %3038 = vmatprep.subr.mxu0 0.0
    %3039 = vmatpush1.msra.mxu0 0.0
    %3040 = vmatprep.subr.mxu0 0.0
    %3041 = vmatpush1.msra.mxu0 0.0
    %3042 = vmatprep.subr.mxu0 0.0
    %3043 = vmatpush1.msra.mxu0 0.0
    %3044 = vmatprep.mubr.f32.mxu0 0.0
    %3045 = vmatmul.mubr.f32.gmra.mrb[0].mxu0 %v2966
    %v3046 = vpop.f32.mrb[0].mxu0
    %v3047 = vadd.f32 0.0, %v3046
    %v3048 = vpop.f32.mrb[0].mxu0
    %3049 = vdwg.mxu0
    %3050 = vmatprep.subr.mxu0 0.0
    %3051 = vmatpush1.msra.mxu0 %v396
    %3052 = vmatprep.subr.mxu0 0.0
    %3053 = vmatpush1.msra.mxu0 %v397
    %3054 = vmatprep.subr.mxu0 0.0
    %3055 = vmatpush1.msra.mxu0 %v398
    %3056 = vmatprep.subr.mxu0 0.0
    %3057 = vmatpush1.msra.mxu0 %v399
    %3058 = vmatprep.subr.mxu0 0.0
    %3059 = vmatpush1.msra.mxu0 %v400
    %3060 = vmatprep.subr.mxu0 0.0
    %3061 = vmatpush1.msra.mxu0 %v401
    %3062 = vmatprep.subr.mxu0 0.0
    %3063 = vmatpush1.msra.mxu0 %v402
    %3064 = vmatprep.subr.mxu0 0.0
    %3065 = vmatpush1.msra.mxu0 %v403
    %3066 = vmatprep.subr.mxu0 0.0
    %3067 = vmatpush1.msra.mxu0 %v404
    %3068 = vmatprep.subr.mxu0 0.0
    %3069 = vmatpush1.msra.mxu0 %v405
    %3070 = vmatprep.subr.mxu0 0.0
    %3071 = vmatpush1.msra.mxu0 %v406
    %3072 = vmatprep.subr.mxu0 0.0
    %3073 = vmatpush1.msra.mxu0 %v407
    %3074 = vmatprep.subr.mxu0 0.0
    %3075 = vmatpush1.msra.mxu0 %v408
    %3076 = vmatprep.subr.mxu0 0.0
    %3077 = vmatpush1.msra.mxu0 %v409
    %3078 = vmatprep.subr.mxu0 0.0
    %3079 = vmatpush1.msra.mxu0 %v410
    %3080 = vmatprep.subr.mxu0 0.0
    %3081 = vmatpush1.msra.mxu0 %v411
    %3082 = vmatprep.subr.mxu0 0.0
    %3083 = vmatpush1.msra.mxu0 0.0
    %3084 = vmatprep.subr.mxu0 0.0
    %3085 = vmatpush1.msra.mxu0 0.0
    %3086 = vmatprep.subr.mxu0 0.0
    %3087 = vmatpush1.msra.mxu0 0.0
    %3088 = vmatprep.subr.mxu0 0.0
    %3089 = vmatpush1.msra.mxu0 0.0
    %3090 = vmatprep.subr.mxu0 0.0
    %3091 = vmatpush1.msra.mxu0 0.0
    %3092 = vmatprep.subr.mxu0 0.0
    %3093 = vmatpush1.msra.mxu0 0.0
    %3094 = vmatprep.subr.mxu0 0.0
    %3095 = vmatpush1.msra.mxu0 0.0
    %3096 = vmatprep.subr.mxu0 0.0
    %3097 = vmatpush1.msra.mxu0 0.0
    %3098 = vmatprep.subr.mxu0 0.0
    %3099 = vmatpush1.msra.mxu0 0.0
    %3100 = vmatprep.subr.mxu0 0.0
    %3101 = vmatpush1.msra.mxu0 0.0
    %3102 = vmatprep.subr.mxu0 0.0
    %3103 = vmatpush1.msra.mxu0 0.0
    %3104 = vmatprep.subr.mxu0 0.0
    %3105 = vmatpush1.msra.mxu0 0.0
    %3106 = vmatprep.subr.mxu0 0.0
    %3107 = vmatpush1.msra.mxu0 0.0
    %3108 = vmatprep.subr.mxu0 0.0
    %3109 = vmatpush1.msra.mxu0 0.0
    %3110 = vmatprep.subr.mxu0 0.0
    %3111 = vmatpush1.msra.mxu0 0.0
    %3112 = vmatprep.subr.mxu0 0.0
    %3113 = vmatpush1.msra.mxu0 0.0
    %3114 = vmatprep.mubr.f32.mxu0 0.0
    %3115 = vmatmul.mubr.f32.gmra.mrb[0].mxu0 %v2979
    %v3116 = vpop.f32.mrb[0].mxu0
    %v3117 = vadd.f32 0.0, %v3116
    %v3118 = vpop.f32.mrb[0].mxu0
    %3119 = vdwg.mxu0
    %v3120 = vmul.f32 %v3047, 0.001953125
    %v3121 = vmul.f32 %v3117, 0.001953125
    %v3122 = vmul.f32 %v3120, %v3120
    %v3123 = vsub.f32 %v3121, %v3122
    %v3124 = vmul.f32 %v2955, %v2956
    %v3125 = vmul.f32 %v2955, %v2955
    %v3126 = vmul.f32 %v3125, %v3123
    %v3127 = vadd.f32 %v3126, 1e-05
    %v3128 = vrsqrt.pop %v3127
    %v3129 = vmul.f32 %v3124, %v3128
    %v3130 = vmul.f32 %v3120, %v3129
    %v3131 = vsub.f32 %v2957, %v3130
    %v3133 = vsel %vm2301, %v3129, 0
    %3135 = vmatprep.subr.mxu0 0.0
    %3136 = vmatpush1.msra.mxu0 %v426
    %3137 = vmatprep.subr.mxu0 0.0
    %3138 = vmatpush1.msra.mxu0 0.0
    %3139 = vmatprep.subr.mxu0 0.0
    %3140 = vmatpush1.msra.mxu0 0.0
    %3141 = vmatprep.subr.mxu0 0.0
    %3142 = vmatpush1.msra.mxu0 0.0
    %3143 = vmatprep.subr.mxu0 0.0
    %3144 = vmatpush1.msra.mxu0 0.0
    %3145 = vmatprep.subr.mxu0 0.0
    %3146 = vmatpush1.msra.mxu0 0.0
    %3147 = vmatprep.subr.mxu0 0.0
    %3148 = vmatpush1.msra.mxu0 0.0
    %3149 = vmatprep.subr.mxu0 0.0
    %3150 = vmatpush1.msra.mxu0 0.0
    %3151 = vmatprep.subr.mxu0 0.0
    %3152 = vmatpush1.msra.mxu0 0.0
    %3153 = vmatprep.subr.mxu0 0.0
    %3154 = vmatpush1.msra.mxu0 0.0
    %3155 = vmatprep.subr.mxu0 0.0
    %3156 = vmatpush1.msra.mxu0 0.0
    %3157 = vmatprep.subr.mxu0 0.0
    %3158 = vmatpush1.msra.mxu0 0.0
    %3159 = vmatprep.subr.mxu0 0.0
    %3160 = vmatpush1.msra.mxu0 0.0
    %3161 = vmatprep.subr.mxu0 0.0
    %3162 = vmatpush1.msra.mxu0 0.0
    %3163 = vmatprep.subr.mxu0 0.0
    %3164 = vmatpush1.msra.mxu0 0.0
    %3165 = vmatprep.subr.mxu0 0.0
    %3166 = vmatpush1.msra.mxu0 0.0
    %3167 = vmatprep.subr.mxu0 0.0
    %3168 = vmatpush1.msra.mxu0 0.0
    %3169 = vmatprep.subr.mxu0 0.0
    %3170 = vmatpush1.msra.mxu0 0.0
    %3171 = vmatprep.subr.mxu0 0.0
    %3172 = vmatpush1.msra.mxu0 0.0
    %3173 = vmatprep.subr.mxu0 0.0
    %3174 = vmatpush1.msra.mxu0 0.0
    %3175 = vmatprep.subr.mxu0 0.0
    %3176 = vmatpush1.msra.mxu0 0.0
    %3177 = vmatprep.subr.mxu0 0.0
    %3178 = vmatpush1.msra.mxu0 0.0
    %3179 = vmatprep.subr.mxu0 0.0
    %3180 = vmatpush1.msra.mxu0 0.0
    %3181 = vmatprep.subr.mxu0 0.0
    %3182 = vmatpush1.msra.mxu0 0.0
    %3183 = vmatprep.subr.mxu0 0.0
    %3184 = vmatpush1.msra.mxu0 0.0
    %3185 = vmatprep.subr.mxu0 0.0
    %3186 = vmatpush1.msra.mxu0 0.0
    %3187 = vmatprep.subr.mxu0 0.0
    %3188 = vmatpush1.msra.mxu0 0.0
    %3189 = vmatprep.subr.mxu0 0.0
    %3190 = vmatpush1.msra.mxu0 0.0
    %3191 = vmatprep.subr.mxu0 0.0
    %3192 = vmatpush1.msra.mxu0 0.0
    %3193 = vmatprep.subr.mxu0 0.0
    %3194 = vmatpush1.msra.mxu0 0.0
    %3195 = vmatprep.subr.mxu0 0.0
    %3196 = vmatpush1.msra.mxu0 0.0
    %3197 = vmatprep.subr.mxu0 0.0
    %3198 = vmatpush1.msra.mxu0 0.0
    %3199 = vmatprep.mubr.f32.mxu0 0.0
    %3200 = vmatmul.mubr.f32.gmra.mrb[0].mxu0 %v3133
    %v3201 = vpop.f32.mrb[0].mxu0
    %v3202 = vadd.f32 0.0, %v3201
    %v3203 = vpop.f32.mrb[0].mxu0
    %3204 = vdwg.mxu0
    %v3206 = vsel %vm2301, %v3131, 0
    %3208 = vmatprep.subr.mxu0 0.0
    %3209 = vmatpush1.msra.mxu0 %v426
    %3210 = vmatprep.subr.mxu0 0.0
    %3211 = vmatpush1.msra.mxu0 0.0
    %3212 = vmatprep.subr.mxu0 0.0
    %3213 = vmatpush1.msra.mxu0 0.0
    %3214 = vmatprep.subr.mxu0 0.0
    %3215 = vmatpush1.msra.mxu0 0.0
    %3216 = vmatprep.subr.mxu0 0.0
    %3217 = vmatpush1.msra.mxu0 0.0
    %3218 = vmatprep.subr.mxu0 0.0
    %3219 = vmatpush1.msra.mxu0 0.0
    %3220 = vmatprep.subr.mxu0 0.0
    %3221 = vmatpush1.msra.mxu0 0.0
    %3222 = vmatprep.subr.mxu0 0.0
    %3223 = vmatpush1.msra.mxu0 0.0
    %3224 = vmatprep.subr.mxu0 0.0
    %3225 = vmatpush1.msra.mxu0 0.0
    %3226 = vmatprep.subr.mxu0 0.0
    %3227 = vmatpush1.msra.mxu0 0.0
    %3228 = vmatprep.subr.mxu0 0.0
    %3229 = vmatpush1.msra.mxu0 0.0
    %3230 = vmatprep.subr.mxu0 0.0
    %3231 = vmatpush1.msra.mxu0 0.0
    %3232 = vmatprep.subr.mxu0 0.0
    %3233 = vmatpush1.msra.mxu0 0.0
    %3234 = vmatprep.subr.mxu0 0.0
    %3235 = vmatpush1.msra.mxu0 0.0
    %3236 = vmatprep.subr.mxu0 0.0
    %3237 = vmatpush1.msra.mxu0 0.0
    %3238 = vmatprep.subr.mxu0 0.0
    %3239 = vmatpush1.msra.mxu0 0.0
    %3240 = vmatprep.subr.mxu0 0.0
    %3241 = vmatpush1.msra.mxu0 0.0
    %3242 = vmatprep.subr.mxu0 0.0
    %3243 = vmatpush1.msra.mxu0 0.0
    %3244 = vmatprep.subr.mxu0 0.0
    %3245 = vmatpush1.msra.mxu0 0.0
    %3246 = vmatprep.subr.mxu0 0.0
    %3247 = vmatpush1.msra.mxu0 0.0
    %3248 = vmatprep.subr.mxu0 0.0
    %3249 = vmatpush1.msra.mxu0 0.0
    %3250 = vmatprep.subr.mxu0 0.0
    %3251 = vmatpush1.msra.mxu0 0.0
    %3252 = vmatprep.subr.mxu0 0.0
    %3253 = vmatpush1.msra.mxu0 0.0
    %3254 = vmatprep.subr.mxu0 0.0
    %3255 = vmatpush1.msra.mxu0 0.0
    %3256 = vmatprep.subr.mxu0 0.0
    %3257 = vmatpush1.msra.mxu0 0.0
    %3258 = vmatprep.subr.mxu0 0.0
    %3259 = vmatpush1.msra.mxu0 0.0
    %3260 = vmatprep.subr.mxu0 0.0
    %3261 = vmatpush1.msra.mxu0 0.0
    %3262 = vmatprep.subr.mxu0 0.0
    %3263 = vmatpush1.msra.mxu0 0.0
    %3264 = vmatprep.subr.mxu0 0.0
    %3265 = vmatpush1.msra.mxu0 0.0
    %3266 = vmatprep.subr.mxu0 0.0
    %3267 = vmatpush1.msra.mxu0 0.0
    %3268 = vmatprep.subr.mxu0 0.0
    %3269 = vmatpush1.msra.mxu0 0.0
    %3270 = vmatprep.subr.mxu0 0.0
    %3271 = vmatpush1.msra.mxu0 0.0
    %3272 = vmatprep.mubr.f32.mxu0 0.0
    %3273 = vmatmul.mubr.f32.gmra.mrb[0].mxu0 %v3206
    %v3274 = vpop.f32.mrb[0].mxu0
    %v3275 = vadd.f32 0.0, %v3274
    %v3276 = vpop.f32.mrb[0].mxu0
    %3277 = vdwg.mxu0
    %v3278 = vlaneseq
    %v3279 = vshrl.u32 %v3278, 7
    %v3280 = vsub.s32 0, %v3279
    %v3281 = vrot.slane %v3202, %v3280
    %v3282 = vmul.f32 %v2941, %v3281
    %v3283 = vmul.f32 %v2944, %v3281
    %v3284 = vmul.f32 %v2949, %v3281
    %v3285 = vmul.f32 %v2952, %v3281
    %v3286 = vlaneseq
    %v3287 = vshrl.u32 %v3286, 7
    %v3288 = vsub.s32 0, %v3287
    %v3289 = vrot.slane %v3275, %v3288
    %v3290 = vadd.f32 %v3282, %v3289
    %v3291 = vadd.f32 %v3283, %v3289
    %v3292 = vadd.f32 %v3284, %v3289
    %v3293 = vadd.f32 %v3285, %v3289
    %v3294 = vld [vmem:[%s17] sm:$0x1]
    %v3296 = vlaneseq
    %v3297 = vshrl.u32 %v3296, 7
    %v3298 = vsub.s32 0, %v3297
    %v3299 = vrot.slane %v3294, %v3298
    %v3301 = vadd.f32 %v3290, %v3299
    %v3302 = vadd.f32 %v3291, %v3299
    %v3303 = vadd.f32 %v3292, %v3299
    %v3304 = vadd.f32 %v3293, %v3299
    %v3305 = vld [vmem:[%s18] sm:$0x1]
    %vm3306 = vcmp.gt.f32.partialorder %v3301, 0.0
    %vm3307 = vcmp.gt.f32.partialorder %v3302, 0.0
    %vm3308 = vcmp.gt.f32.partialorder %v3303, 0.0
    %vm3309 = vcmp.gt.f32.partialorder %v3304, 0.0
    %v3311 = vlaneseq
    %v3312 = vshrl.u32 %v3311, 7
    %v3313 = vsub.s32 0, %v3312
    %v3314 = vrot.slane %v3305, %v3313
    %v3316 = vmul.f32 %v3314, %v3301
    %v3317 = vmul.f32 %v3314, %v3302
    %v3318 = vmul.f32 %v3314, %v3303
    %v3319 = vmul.f32 %v3314, %v3304
    %v3320 = vsel %vm3306, %v3301, %v3316
    %v3321 = vsel %vm3307, %v3302, %v3317
    %v3322 = vsel %vm3308, %v3303, %v3318
    %v3323 = vsel %vm3309, %v3304, %v3319
    %v3324 = vld [vmem:[%s19] sm:$0x1]
    %v3326 = vlaneseq
    %v3327 = vshrl.u32 %v3326, 7
    %v3328 = vsub.s32 0, %v3327
    %v3329 = vrot.slane %v3324, %v3328
    %v3331 = vadd.f32 %v3320, %v3329
    %v3332 = vadd.f32 %v3321, %v3329
    %v3333 = vadd.f32 %v3322, %v3329
    %v3334 = vadd.f32 %v3323, %v3329
    %s3335 = sld [smem:[#allocation2 + $0x2]]
    %v3336 = vstv %s3335
    %v3337 = vmul.f32 %v3331, %v3336
    %v3338 = vmul.f32 %v3332, %v3336
    %v3339 = vmul.f32 %v3333, %v3336
    %v3340 = vmul.f32 %v3334, %v3336
    %v3341 = vround.ne.pseudo %v3337
    %v3342 = vround.ne.pseudo %v3338
    %v3343 = vround.ne.pseudo %v3339
    %v3344 = vround.ne.pseudo %v3340
    %v3345 = vmax.f32 %v3341, 0.0
    %v3346 = vmax.f32 %v3342, 0.0
    %v3347 = vmax.f32 %v3343, 0.0
    %v3348 = vmax.f32 %v3344, 0.0
    %v3349 = vmin.f32 %v3345, 15.0
    %v3350 = vmin.f32 %v3346, 15.0
    %v3351 = vmin.f32 %v3347, 15.0
    %v3352 = vmin.f32 %v3348, 15.0
    %v3353 = vpack.c.bf16 %v3350, %v3349
    %v3354 = vpack.c.bf16 %v3352, %v3351
    %v3355 = vld [vmem:[#allocation10] sm:$0xff]
    %v3356 = vld [vmem:[#allocation10 + $0x8] sm:$0xff]
    %v3357 = vld [vmem:[#allocation10 + $0x10] sm:$0xff]
    %v3358 = vld [vmem:[#allocation10 + $0x18] sm:$0xff]
    %v3359 = vld [vmem:[#allocation10 + $0x20] sm:$0xff]
    %v3360 = vld [vmem:[#allocation10 + $0x28] sm:$0xff]
    %v3361 = vld [vmem:[#allocation10 + $0x30] sm:$0xff]
    %v3362 = vld [vmem:[#allocation10 + $0x38] sm:$0xff]
    %v3363 = vld [vmem:[#allocation10 + $0x40] sm:$0xff]
    %v3364 = vld [vmem:[#allocation10 + $0x48] sm:$0xff]
    %v3365 = vld [vmem:[#allocation10 + $0x50] sm:$0xff]
    %v3366 = vld [vmem:[#allocation10 + $0x58] sm:$0xff]
    %v3367 = vld [vmem:[#allocation10 + $0x60] sm:$0xff]
    %v3368 = vld [vmem:[#allocation10 + $0x68] sm:$0xff]
    %v3369 = vld [vmem:[#allocation10 + $0x70] sm:$0xff]
    %v3370 = vld [vmem:[#allocation10 + $0x78] sm:$0xff]
    %v3371 = vld [vmem:[#allocation10 + $0x80] sm:$0xff]
    %v3372 = vld [vmem:[#allocation10 + $0x88] sm:$0xff]
    %v3373 = vld [vmem:[#allocation10 + $0x90] sm:$0xff]
    %v3374 = vld [vmem:[#allocation10 + $0x98] sm:$0xff]
    %v3375 = vld [vmem:[#allocation10 + $0xa0] sm:$0xff]
    %v3376 = vld [vmem:[#allocation10 + $0xa8] sm:$0xff]
    %v3377 = vld [vmem:[#allocation10 + $0xb0] sm:$0xff]
    %v3378 = vld [vmem:[#allocation10 + $0xb8] sm:$0xff]
    %v3379 = vld [vmem:[#allocation10 + $0xc0] sm:$0xff]
    %v3380 = vld [vmem:[#allocation10 + $0xc8] sm:$0xff]
    %v3381 = vld [vmem:[#allocation10 + $0xd0] sm:$0xff]
    %v3382 = vld [vmem:[#allocation10 + $0xd8] sm:$0xff]
    %v3383 = vld [vmem:[#allocation10 + $0xe0] sm:$0xff]
    %v3384 = vld [vmem:[#allocation10 + $0xe8] sm:$0xff]
    %v3385 = vld [vmem:[#allocation10 + $0xf0] sm:$0xff]
    %v3386 = vld [vmem:[#allocation10 + $0xf8] sm:$0xff]
    %v3419 = vunpack.c.l.b16 %v3355
    %v3420 = vunpack.c.h.b16 %v3355
    %v3421 = vunpack.c.l.b16 %v3356
    %v3422 = vunpack.c.h.b16 %v3356
    %v3423 = vunpack.c.l.b16 %v3357
    %v3424 = vunpack.c.h.b16 %v3357
    %v3425 = vunpack.c.l.b16 %v3358
    %v3426 = vunpack.c.h.b16 %v3358
    %v3427 = vunpack.c.l.b16 %v3359
    %v3428 = vunpack.c.h.b16 %v3359
    %v3429 = vunpack.c.l.b16 %v3360
    %v3430 = vunpack.c.h.b16 %v3360
    %v3431 = vunpack.c.l.b16 %v3361
    %v3432 = vunpack.c.h.b16 %v3361
    %v3433 = vunpack.c.l.b16 %v3362
    %v3434 = vunpack.c.h.b16 %v3362
    %v3435 = vunpack.c.l.b16 %v3363
    %v3436 = vunpack.c.h.b16 %v3363
    %v3437 = vunpack.c.l.b16 %v3364
    %v3438 = vunpack.c.h.b16 %v3364
    %v3439 = vunpack.c.l.b16 %v3365
    %v3440 = vunpack.c.h.b16 %v3365
    %v3441 = vunpack.c.l.b16 %v3366
    %v3442 = vunpack.c.h.b16 %v3366
    %v3443 = vunpack.c.l.b16 %v3367
    %v3444 = vunpack.c.h.b16 %v3367
    %v3445 = vunpack.c.l.b16 %v3368
    %v3446 = vunpack.c.h.b16 %v3368
    %v3447 = vunpack.c.l.b16 %v3369
    %v3448 = vunpack.c.h.b16 %v3369
    %v3449 = vunpack.c.l.b16 %v3370
    %v3450 = vunpack.c.h.b16 %v3370
    %v3451 = vunpack.c.l.b16 %v3371
    %v3452 = vunpack.c.h.b16 %v3371
    %v3453 = vunpack.c.l.b16 %v3372
    %v3454 = vunpack.c.h.b16 %v3372
    %v3455 = vunpack.c.l.b16 %v3373
    %v3456 = vunpack.c.h.b16 %v3373
    %v3457 = vunpack.c.l.b16 %v3374
    %v3458 = vunpack.c.h.b16 %v3374
    %v3459 = vunpack.c.l.b16 %v3375
    %v3460 = vunpack.c.h.b16 %v3375
    %v3461 = vunpack.c.l.b16 %v3376
    %v3462 = vunpack.c.h.b16 %v3376
    %v3463 = vunpack.c.l.b16 %v3377
    %v3464 = vunpack.c.h.b16 %v3377
    %v3465 = vunpack.c.l.b16 %v3378
    %v3466 = vunpack.c.h.b16 %v3378
    %v3467 = vunpack.c.l.b16 %v3379
    %v3468 = vunpack.c.h.b16 %v3379
    %v3469 = vunpack.c.l.b16 %v3380
    %v3470 = vunpack.c.h.b16 %v3380
    %v3471 = vunpack.c.l.b16 %v3381
    %v3472 = vunpack.c.h.b16 %v3381
    %v3473 = vunpack.c.l.b16 %v3382
    %v3474 = vunpack.c.h.b16 %v3382
    %v3475 = vunpack.c.l.b16 %v3383
    %v3476 = vunpack.c.h.b16 %v3383
    %v3477 = vunpack.c.l.b16 %v3384
    %v3478 = vunpack.c.h.b16 %v3384
    %v3479 = vunpack.c.l.b16 %v3385
    %v3480 = vunpack.c.h.b16 %v3385
    %v3481 = vunpack.c.l.b16 %v3386
    %v3482 = vunpack.c.h.b16 %v3386
    %v3483 = vpack.c.b16 %v3423, %v3419
    %v3484 = vpack.c.b16 %v3424, %v3420
    %v3485 = vpack.c.b16 %v3425, %v3421
    %v3486 = vpack.c.b16 %v3426, %v3422
    %v3487 = vpack.c.b16 %v3431, %v3427
    %v3488 = vpack.c.b16 %v3432, %v3428
    %v3489 = vpack.c.b16 %v3433, %v3429
    %v3490 = vpack.c.b16 %v3434, %v3430
    %v3491 = vpack.c.b16 %v3439, %v3435
    %v3492 = vpack.c.b16 %v3440, %v3436
    %v3493 = vpack.c.b16 %v3441, %v3437
    %v3494 = vpack.c.b16 %v3442, %v3438
    %v3495 = vpack.c.b16 %v3447, %v3443
    %v3496 = vpack.c.b16 %v3448, %v3444
    %v3497 = vpack.c.b16 %v3449, %v3445
    %v3498 = vpack.c.b16 %v3450, %v3446
    %v3499 = vpack.c.b16 %v3455, %v3451
    %v3500 = vpack.c.b16 %v3456, %v3452
    %v3501 = vpack.c.b16 %v3457, %v3453
    %v3502 = vpack.c.b16 %v3458, %v3454
    %v3503 = vpack.c.b16 %v3463, %v3459
    %v3504 = vpack.c.b16 %v3464, %v3460
    %v3505 = vpack.c.b16 %v3465, %v3461
    %v3506 = vpack.c.b16 %v3466, %v3462
    %v3507 = vpack.c.b16 %v3471, %v3467
    %v3508 = vpack.c.b16 %v3472, %v3468
    %v3509 = vpack.c.b16 %v3473, %v3469
    %v3510 = vpack.c.b16 %v3474, %v3470
    %v3511 = vpack.c.b16 %v3479, %v3475
    %v3512 = vpack.c.b16 %v3480, %v3476
    %v3513 = vpack.c.b16 %v3481, %v3477
    %v3514 = vpack.c.b16 %v3482, %v3478
    %3547 = vmatprep.subr.bf16.mxu0 %v3484
    %3548 = vmatpush1.bf16.msra.mxu0 %v3483
    %3549 = vmatprep.subr.bf16.mxu0 %v3488
    %3550 = vmatpush1.bf16.msra.mxu0 %v3487
    %3551 = vmatprep.subr.bf16.mxu0 %v3492
    %3552 = vmatpush1.bf16.msra.mxu0 %v3491
    %3553 = vmatprep.subr.bf16.mxu0 %v3496
    %3554 = vmatpush1.bf16.msra.mxu0 %v3495
    %3555 = vmatprep.subr.bf16.mxu0 %v3500
    %3556 = vmatpush1.bf16.msra.mxu0 %v3499
    %3557 = vmatprep.subr.bf16.mxu0 %v3504
    %3558 = vmatpush1.bf16.msra.mxu0 %v3503
    %3559 = vmatprep.subr.bf16.mxu0 %v3508
    %3560 = vmatpush1.bf16.msra.mxu0 %v3507
    %3561 = vmatprep.subr.bf16.mxu0 %v3512
    %3562 = vmatpush1.bf16.msra.mxu0 %v3511
    %3563 = vmatprep.subr.bf16.mxu0 0
    %3564 = vmatpush1.bf16.msra.mxu0 0
    %3565 = vmatprep.subr.bf16.mxu0 0
    %3566 = vmatpush1.bf16.msra.mxu0 0
    %3567 = vmatprep.subr.bf16.mxu0 0
    %3568 = vmatpush1.bf16.msra.mxu0 0
    %3569 = vmatprep.subr.bf16.mxu0 0
    %3570 = vmatpush1.bf16.msra.mxu0 0
    %3571 = vmatprep.subr.bf16.mxu0 0
    %3572 = vmatpush1.bf16.msra.mxu0 0
    %3573 = vmatprep.subr.bf16.mxu0 0
    %3574 = vmatpush1.bf16.msra.mxu0 0
    %3575 = vmatprep.subr.bf16.mxu0 0
    %3576 = vmatpush1.bf16.msra.mxu0 0
    %3577 = vmatprep.subr.bf16.mxu0 0
    %3578 = vmatpush1.bf16.msra.mxu0 0
    %3579 = vmatprep.mubr.bf16.mxu0 0
    %3580 = vmatmul.mubr.bf16.gmra.mrb[0].mxu0 %v3353
    %v3581 = vpop.f32.mrb[0].mxu0
    %v3582 = vadd.f32 0.0, %v3581
    %v3583 = vpop.f32.mrb[0].mxu0
    %v3584 = vadd.f32 0.0, %v3583
    %v3585 = vpop.f32.mrb[0].mxu0
    %v3586 = vadd.f32 0.0, %v3585
    %v3587 = vpop.f32.mrb[0].mxu0
    %v3588 = vadd.f32 0.0, %v3587
    %3589 = vmatprep.mubr.bf16.mxu0 0
    %3590 = vmatmul.mubr.bf16.gmra.mrb[0].mxu0 %v3354
    %v3591 = vpop.f32.mrb[0].mxu0
    %v3592 = vadd.f32 0.0, %v3591
    %v3593 = vpop.f32.mrb[0].mxu0
    %v3594 = vadd.f32 0.0, %v3593
    %v3595 = vpop.f32.mrb[0].mxu0
    %v3596 = vadd.f32 0.0, %v3595
    %v3597 = vpop.f32.mrb[0].mxu0
    %v3598 = vadd.f32 0.0, %v3597
    %3599 = vdwg.mxu0
    %3600 = vmatprep.subr.bf16.mxu0 %v3486
    %3601 = vmatpush1.bf16.msra.mxu0 %v3485
    %3602 = vmatprep.subr.bf16.mxu0 %v3490
    %3603 = vmatpush1.bf16.msra.mxu0 %v3489
    %3604 = vmatprep.subr.bf16.mxu0 %v3494
    %3605 = vmatpush1.bf16.msra.mxu0 %v3493
    %3606 = vmatprep.subr.bf16.mxu0 %v3498
    %3607 = vmatpush1.bf16.msra.mxu0 %v3497
    %3608 = vmatprep.subr.bf16.mxu0 %v3502
    %3609 = vmatpush1.bf16.msra.mxu0 %v3501
    %3610 = vmatprep.subr.bf16.mxu0 %v3506
    %3611 = vmatpush1.bf16.msra.mxu0 %v3505
    %3612 = vmatprep.subr.bf16.mxu0 %v3510
    %3613 = vmatpush1.bf16.msra.mxu0 %v3509
    %3614 = vmatprep.subr.bf16.mxu0 %v3514
    %3615 = vmatpush1.bf16.msra.mxu0 %v3513
    %3616 = vmatprep.subr.bf16.mxu0 0
    %3617 = vmatpush1.bf16.msra.mxu0 0
    %3618 = vmatprep.subr.bf16.mxu0 0
    %3619 = vmatpush1.bf16.msra.mxu0 0
    %3620 = vmatprep.subr.bf16.mxu0 0
    %3621 = vmatpush1.bf16.msra.mxu0 0
    %3622 = vmatprep.subr.bf16.mxu0 0
    %3623 = vmatpush1.bf16.msra.mxu0 0
    %3624 = vmatprep.subr.bf16.mxu0 0
    %3625 = vmatpush1.bf16.msra.mxu0 0
    %3626 = vmatprep.subr.bf16.mxu0 0
    %3627 = vmatpush1.bf16.msra.mxu0 0
    %3628 = vmatprep.subr.bf16.mxu0 0
    %3629 = vmatpush1.bf16.msra.mxu0 0
    %3630 = vmatprep.subr.bf16.mxu0 0
    %3631 = vmatpush1.bf16.msra.mxu0 0
    %3632 = vmatprep.mubr.bf16.mxu0 0
    %3633 = vmatmul.mubr.bf16.gmra.mrb[0].mxu0 %v3353
    %v3634 = vpop.f32.mrb[0].mxu0
    %v3635 = vadd.f32 0.0, %v3634
    %v3636 = vpop.f32.mrb[0].mxu0
    %v3637 = vadd.f32 0.0, %v3636
    %v3638 = vpop.f32.mrb[0].mxu0
    %v3639 = vadd.f32 0.0, %v3638
    %v3640 = vpop.f32.mrb[0].mxu0
    %v3641 = vadd.f32 0.0, %v3640
    %3642 = vmatprep.mubr.bf16.mxu0 0
    %3643 = vmatmul.mubr.bf16.gmra.mrb[0].mxu0 %v3354
    %v3644 = vpop.f32.mrb[0].mxu0
    %v3645 = vadd.f32 0.0, %v3644
    %v3646 = vpop.f32.mrb[0].mxu0
    %v3647 = vadd.f32 0.0, %v3646
    %v3648 = vpop.f32.mrb[0].mxu0
    %v3649 = vadd.f32 0.0, %v3648
    %v3650 = vpop.f32.mrb[0].mxu0
    %v3651 = vadd.f32 0.0, %v3650
    %3652 = vdwg.mxu0
    %v3653 = vld [vmem:[%s20] sm:$0x1]
    %v3654 = vld [vmem:[%s21] sm:$0x1]
    %v3655 = vld [vmem:[%s22] sm:$0x1]
    %v3656 = vadd.f32 %v3582, %v3586
    %v3657 = vadd.f32 %v3656, %v3592
    %v3658 = vadd.f32 %v3657, %v3596
    %v3659 = vrot.slane %v3658, 4
    %v3660 = vadd.f32 %v3658, %v3659
    %v3661 = vrot.slane %v3660, 2
    %v3662 = vadd.f32 %v3660, %v3661
    %v3663 = vrot.slane %v3662, 1
    %v3664 = vadd.f32 %v3662, %v3663
    %v3665 = vadd.f32 %v3584, %v3588
    %v3666 = vadd.f32 %v3665, %v3594
    %v3667 = vadd.f32 %v3666, %v3598
    %v3668 = vrot.slane %v3667, 4
    %v3669 = vadd.f32 %v3667, %v3668
    %v3670 = vrot.slane %v3669, 2
    %v3671 = vadd.f32 %v3669, %v3670
    %v3672 = vrot.slane %v3671, 1
    %v3673 = vadd.f32 %v3671, %v3672
    %v3674 = vadd.f32 %v3635, %v3639
    %v3675 = vadd.f32 %v3674, %v3645
    %v3676 = vadd.f32 %v3675, %v3649
    %v3677 = vrot.slane %v3676, 4
    %v3678 = vadd.f32 %v3676, %v3677
    %v3679 = vrot.slane %v3678, 2
    %v3680 = vadd.f32 %v3678, %v3679
    %v3681 = vrot.slane %v3680, 1
    %v3682 = vadd.f32 %v3680, %v3681
    %v3683 = vadd.f32 %v3637, %v3641
    %v3684 = vadd.f32 %v3683, %v3647
    %v3685 = vadd.f32 %v3684, %v3651
    %v3686 = vrot.slane %v3685, 4
    %v3687 = vadd.f32 %v3685, %v3686
    %v3688 = vrot.slane %v3687, 2
    %v3689 = vadd.f32 %v3687, %v3688
    %v3690 = vrot.slane %v3689, 1
    %v3691 = vadd.f32 %v3689, %v3690
    %v3692 = vmul.f32 %v3582, %v3582
    %v3693 = vmul.f32 %v3584, %v3584
    %v3694 = vmul.f32 %v3635, %v3635
    %v3695 = vmul.f32 %v3637, %v3637
    %v3696 = vmul.f32 %v3586, %v3586
    %v3697 = vmul.f32 %v3588, %v3588
    %v3698 = vmul.f32 %v3639, %v3639
    %v3699 = vmul.f32 %v3641, %v3641
    %v3700 = vmul.f32 %v3592, %v3592
    %v3701 = vmul.f32 %v3594, %v3594
    %v3702 = vmul.f32 %v3645, %v3645
    %v3703 = vmul.f32 %v3647, %v3647
    %v3704 = vmul.f32 %v3596, %v3596
    %v3705 = vmul.f32 %v3598, %v3598
    %v3706 = vmul.f32 %v3649, %v3649
    %v3707 = vmul.f32 %v3651, %v3651
    %v3708 = vadd.f32 %v3692, %v3696
    %v3709 = vadd.f32 %v3708, %v3700
    %v3710 = vadd.f32 %v3709, %v3704
    %v3711 = vrot.slane %v3710, 4
    %v3712 = vadd.f32 %v3710, %v3711
    %v3713 = vrot.slane %v3712, 2
    %v3714 = vadd.f32 %v3712, %v3713
    %v3715 = vrot.slane %v3714, 1
    %v3716 = vadd.f32 %v3714, %v3715
    %v3717 = vadd.f32 %v3693, %v3697
    %v3718 = vadd.f32 %v3717, %v3701
    %v3719 = vadd.f32 %v3718, %v3705
    %v3720 = vrot.slane %v3719, 4
    %v3721 = vadd.f32 %v3719, %v3720
    %v3722 = vrot.slane %v3721, 2
    %v3723 = vadd.f32 %v3721, %v3722
    %v3724 = vrot.slane %v3723, 1
    %v3725 = vadd.f32 %v3723, %v3724
    %v3726 = vadd.f32 %v3694, %v3698
    %v3727 = vadd.f32 %v3726, %v3702
    %v3728 = vadd.f32 %v3727, %v3706
    %v3729 = vrot.slane %v3728, 4
    %v3730 = vadd.f32 %v3728, %v3729
    %v3731 = vrot.slane %v3730, 2
    %v3732 = vadd.f32 %v3730, %v3731
    %v3733 = vrot.slane %v3732, 1
    %v3734 = vadd.f32 %v3732, %v3733
    %v3735 = vadd.f32 %v3695, %v3699
    %v3736 = vadd.f32 %v3735, %v3703
    %v3737 = vadd.f32 %v3736, %v3707
    %v3738 = vrot.slane %v3737, 4
    %v3739 = vadd.f32 %v3737, %v3738
    %v3740 = vrot.slane %v3739, 2
    %v3741 = vadd.f32 %v3739, %v3740
    %v3742 = vrot.slane %v3741, 1
    %v3743 = vadd.f32 %v3741, %v3742
    %3744 = vmatprep.subr.mxu0 0.0
    %3745 = vmatpush1.msra.mxu0 %v1371
    %3746 = vmatprep.subr.mxu0 0.0
    %3747 = vmatpush1.msra.mxu0 %v1372
    %3748 = vmatprep.subr.mxu0 0.0
    %3749 = vmatpush1.msra.mxu0 %v1373
    %3750 = vmatprep.subr.mxu0 0.0
    %3751 = vmatpush1.msra.mxu0 %v1374
    %3752 = vmatprep.subr.mxu0 0.0
    %3753 = vmatpush1.msra.mxu0 %v1375
    %3754 = vmatprep.subr.mxu0 0.0
    %3755 = vmatpush1.msra.mxu0 %v1376
    %3756 = vmatprep.subr.mxu0 0.0
    %3757 = vmatpush1.msra.mxu0 %v1377
    %3758 = vmatprep.subr.mxu0 0.0
    %3759 = vmatpush1.msra.mxu0 %v1378
    %3760 = vmatprep.subr.mxu0 0.0
    %3761 = vmatpush1.msra.mxu0 %v1379
    %3762 = vmatprep.subr.mxu0 0.0
    %3763 = vmatpush1.msra.mxu0 %v1380
    %3764 = vmatprep.subr.mxu0 0.0
    %3765 = vmatpush1.msra.mxu0 %v1381
    %3766 = vmatprep.subr.mxu0 0.0
    %3767 = vmatpush1.msra.mxu0 %v1382
    %3768 = vmatprep.subr.mxu0 0.0
    %3769 = vmatpush1.msra.mxu0 %v1383
    %3770 = vmatprep.subr.mxu0 0.0
    %3771 = vmatpush1.msra.mxu0 %v1384
    %3772 = vmatprep.subr.mxu0 0.0
    %3773 = vmatpush1.msra.mxu0 %v1385
    %3774 = vmatprep.subr.mxu0 0.0
    %3775 = vmatpush1.msra.mxu0 %v1386
    %3776 = vmatprep.subr.mxu0 0.0
    %3777 = vmatpush1.msra.mxu0 %v1387
    %3778 = vmatprep.subr.mxu0 0.0
    %3779 = vmatpush1.msra.mxu0 %v1388
    %3780 = vmatprep.subr.mxu0 0.0
    %3781 = vmatpush1.msra.mxu0 %v1389
    %3782 = vmatprep.subr.mxu0 0.0
    %3783 = vmatpush1.msra.mxu0 %v1390
    %3784 = vmatprep.subr.mxu0 0.0
    %3785 = vmatpush1.msra.mxu0 %v1391
    %3786 = vmatprep.subr.mxu0 0.0
    %3787 = vmatpush1.msra.mxu0 %v1392
    %3788 = vmatprep.subr.mxu0 0.0
    %3789 = vmatpush1.msra.mxu0 %v1393
    %3790 = vmatprep.subr.mxu0 0.0
    %3791 = vmatpush1.msra.mxu0 %v1394
    %3792 = vmatprep.subr.mxu0 0.0
    %3793 = vmatpush1.msra.mxu0 %v1395
    %3794 = vmatprep.subr.mxu0 0.0
    %3795 = vmatpush1.msra.mxu0 %v1396
    %3796 = vmatprep.subr.mxu0 0.0
    %3797 = vmatpush1.msra.mxu0 %v1397
    %3798 = vmatprep.subr.mxu0 0.0
    %3799 = vmatpush1.msra.mxu0 %v1398
    %3800 = vmatprep.subr.mxu0 0.0
    %3801 = vmatpush1.msra.mxu0 %v1399
    %3802 = vmatprep.subr.mxu0 0.0
    %3803 = vmatpush1.msra.mxu0 %v1400
    %3804 = vmatprep.subr.mxu0 0.0
    %3805 = vmatpush1.msra.mxu0 %v1401
    %3806 = vmatprep.subr.mxu0 0.0
    %3807 = vmatpush1.msra.mxu0 %v1402
    %3808 = vmatprep.mubr.f32.mxu0 %v3673
    %3809 = vmatmul.mubr.f32.gmra.mrb[0].mxu0 %v3664
    %v3810 = vpop.f32.mrb[0].mxu0
    %v3811 = vadd.f32 0.0, %v3810
    %v3812 = vpop.f32.mrb[0].mxu0
    %3813 = vdwg.mxu0
    %3814 = vmatprep.subr.mxu0 0.0
    %3815 = vmatpush1.msra.mxu0 %v1403
    %3816 = vmatprep.subr.mxu0 0.0
    %3817 = vmatpush1.msra.mxu0 %v1404
    %3818 = vmatprep.subr.mxu0 0.0
    %3819 = vmatpush1.msra.mxu0 %v1405
    %3820 = vmatprep.subr.mxu0 0.0
    %3821 = vmatpush1.msra.mxu0 %v1406
    %3822 = vmatprep.subr.mxu0 0.0
    %3823 = vmatpush1.msra.mxu0 %v1407
    %3824 = vmatprep.subr.mxu0 0.0
    %3825 = vmatpush1.msra.mxu0 %v1408
    %3826 = vmatprep.subr.mxu0 0.0
    %3827 = vmatpush1.msra.mxu0 %v1409
    %3828 = vmatprep.subr.mxu0 0.0
    %3829 = vmatpush1.msra.mxu0 %v1410
    %3830 = vmatprep.subr.mxu0 0.0
    %3831 = vmatpush1.msra.mxu0 %v1411
    %3832 = vmatprep.subr.mxu0 0.0
    %3833 = vmatpush1.msra.mxu0 %v1412
    %3834 = vmatprep.subr.mxu0 0.0
    %3835 = vmatpush1.msra.mxu0 %v1413
    %3836 = vmatprep.subr.mxu0 0.0
    %3837 = vmatpush1.msra.mxu0 %v1414
    %3838 = vmatprep.subr.mxu0 0.0
    %3839 = vmatpush1.msra.mxu0 %v1415
    %3840 = vmatprep.subr.mxu0 0.0
    %3841 = vmatpush1.msra.mxu0 %v1416
    %3842 = vmatprep.subr.mxu0 0.0
    %3843 = vmatpush1.msra.mxu0 %v1417
    %3844 = vmatprep.subr.mxu0 0.0
    %3845 = vmatpush1.msra.mxu0 %v1418
    %3846 = vmatprep.subr.mxu0 0.0
    %3847 = vmatpush1.msra.mxu0 %v1419
    %3848 = vmatprep.subr.mxu0 0.0
    %3849 = vmatpush1.msra.mxu0 %v1420
    %3850 = vmatprep.subr.mxu0 0.0
    %3851 = vmatpush1.msra.mxu0 %v1421
    %3852 = vmatprep.subr.mxu0 0.0
    %3853 = vmatpush1.msra.mxu0 %v1422
    %3854 = vmatprep.subr.mxu0 0.0
    %3855 = vmatpush1.msra.mxu0 %v1423
    %3856 = vmatprep.subr.mxu0 0.0
    %3857 = vmatpush1.msra.mxu0 %v1424
    %3858 = vmatprep.subr.mxu0 0.0
    %3859 = vmatpush1.msra.mxu0 %v1425
    %3860 = vmatprep.subr.mxu0 0.0
    %3861 = vmatpush1.msra.mxu0 %v1426
    %3862 = vmatprep.subr.mxu0 0.0
    %3863 = vmatpush1.msra.mxu0 %v1427
    %3864 = vmatprep.subr.mxu0 0.0
    %3865 = vmatpush1.msra.mxu0 %v1428
    %3866 = vmatprep.subr.mxu0 0.0
    %3867 = vmatpush1.msra.mxu0 %v1429
    %3868 = vmatprep.subr.mxu0 0.0
    %3869 = vmatpush1.msra.mxu0 %v1430
    %3870 = vmatprep.subr.mxu0 0.0
    %3871 = vmatpush1.msra.mxu0 %v1431
    %3872 = vmatprep.subr.mxu0 0.0
    %3873 = vmatpush1.msra.mxu0 %v1432
    %3874 = vmatprep.subr.mxu0 0.0
    %3875 = vmatpush1.msra.mxu0 %v1433
    %3876 = vmatprep.subr.mxu0 0.0
    %3877 = vmatpush1.msra.mxu0 %v1434
    %3878 = vmatprep.mubr.f32.mxu0 %v3691
    %3879 = vmatmul.mubr.f32.gmra.mrb[0].mxu0 %v3682
    %v3880 = vpop.f32.mrb[0].mxu0
    %v3881 = vadd.f32 %v3811, %v3880
    %v3882 = vpop.f32.mrb[0].mxu0
    %3883 = vdwg.mxu0
    %3884 = vmatprep.subr.mxu0 0.0
    %3885 = vmatpush1.msra.mxu0 %v1371
    %3886 = vmatprep.subr.mxu0 0.0
    %3887 = vmatpush1.msra.mxu0 %v1372
    %3888 = vmatprep.subr.mxu0 0.0
    %3889 = vmatpush1.msra.mxu0 %v1373
    %3890 = vmatprep.subr.mxu0 0.0
    %3891 = vmatpush1.msra.mxu0 %v1374
    %3892 = vmatprep.subr.mxu0 0.0
    %3893 = vmatpush1.msra.mxu0 %v1375
    %3894 = vmatprep.subr.mxu0 0.0
    %3895 = vmatpush1.msra.mxu0 %v1376
    %3896 = vmatprep.subr.mxu0 0.0
    %3897 = vmatpush1.msra.mxu0 %v1377
    %3898 = vmatprep.subr.mxu0 0.0
    %3899 = vmatpush1.msra.mxu0 %v1378
    %3900 = vmatprep.subr.mxu0 0.0
    %3901 = vmatpush1.msra.mxu0 %v1379
    %3902 = vmatprep.subr.mxu0 0.0
    %3903 = vmatpush1.msra.mxu0 %v1380
    %3904 = vmatprep.subr.mxu0 0.0
    %3905 = vmatpush1.msra.mxu0 %v1381
    %3906 = vmatprep.subr.mxu0 0.0
    %3907 = vmatpush1.msra.mxu0 %v1382
    %3908 = vmatprep.subr.mxu0 0.0
    %3909 = vmatpush1.msra.mxu0 %v1383
    %3910 = vmatprep.subr.mxu0 0.0
    %3911 = vmatpush1.msra.mxu0 %v1384
    %3912 = vmatprep.subr.mxu0 0.0
    %3913 = vmatpush1.msra.mxu0 %v1385
    %3914 = vmatprep.subr.mxu0 0.0
    %3915 = vmatpush1.msra.mxu0 %v1386
    %3916 = vmatprep.subr.mxu0 0.0
    %3917 = vmatpush1.msra.mxu0 %v1387
    %3918 = vmatprep.subr.mxu0 0.0
    %3919 = vmatpush1.msra.mxu0 %v1388
    %3920 = vmatprep.subr.mxu0 0.0
    %3921 = vmatpush1.msra.mxu0 %v1389
    %3922 = vmatprep.subr.mxu0 0.0
    %3923 = vmatpush1.msra.mxu0 %v1390
    %3924 = vmatprep.subr.mxu0 0.0
    %3925 = vmatpush1.msra.mxu0 %v1391
    %3926 = vmatprep.subr.mxu0 0.0
    %3927 = vmatpush1.msra.mxu0 %v1392
    %3928 = vmatprep.subr.mxu0 0.0
    %3929 = vmatpush1.msra.mxu0 %v1393
    %3930 = vmatprep.subr.mxu0 0.0
    %3931 = vmatpush1.msra.mxu0 %v1394
    %3932 = vmatprep.subr.mxu0 0.0
    %3933 = vmatpush1.msra.mxu0 %v1395
    %3934 = vmatprep.subr.mxu0 0.0
    %3935 = vmatpush1.msra.mxu0 %v1396
    %3936 = vmatprep.subr.mxu0 0.0
    %3937 = vmatpush1.msra.mxu0 %v1397
    %3938 = vmatprep.subr.mxu0 0.0
    %3939 = vmatpush1.msra.mxu0 %v1398
    %3940 = vmatprep.subr.mxu0 0.0
    %3941 = vmatpush1.msra.mxu0 %v1399
    %3942 = vmatprep.subr.mxu0 0.0
    %3943 = vmatpush1.msra.mxu0 %v1400
    %3944 = vmatprep.subr.mxu0 0.0
    %3945 = vmatpush1.msra.mxu0 %v1401
    %3946 = vmatprep.subr.mxu0 0.0
    %3947 = vmatpush1.msra.mxu0 %v1402
    %3948 = vmatprep.mubr.f32.mxu0 %v3725
    %3949 = vmatmul.mubr.f32.gmra.mrb[0].mxu0 %v3716
    %v3950 = vpop.f32.mrb[0].mxu0
    %v3951 = vadd.f32 0.0, %v3950
    %v3952 = vpop.f32.mrb[0].mxu0
    %3953 = vdwg.mxu0
    %3954 = vmatprep.subr.mxu0 0.0
    %3955 = vmatpush1.msra.mxu0 %v1403
    %3956 = vmatprep.subr.mxu0 0.0
    %3957 = vmatpush1.msra.mxu0 %v1404
    %3958 = vmatprep.subr.mxu0 0.0
    %3959 = vmatpush1.msra.mxu0 %v1405
    %3960 = vmatprep.subr.mxu0 0.0
    %3961 = vmatpush1.msra.mxu0 %v1406
    %3962 = vmatprep.subr.mxu0 0.0
    %3963 = vmatpush1.msra.mxu0 %v1407
    %3964 = vmatprep.subr.mxu0 0.0
    %3965 = vmatpush1.msra.mxu0 %v1408
    %3966 = vmatprep.subr.mxu0 0.0
    %3967 = vmatpush1.msra.mxu0 %v1409
    %3968 = vmatprep.subr.mxu0 0.0
    %3969 = vmatpush1.msra.mxu0 %v1410
    %3970 = vmatprep.subr.mxu0 0.0
    %3971 = vmatpush1.msra.mxu0 %v1411
    %3972 = vmatprep.subr.mxu0 0.0
    %3973 = vmatpush1.msra.mxu0 %v1412
    %3974 = vmatprep.subr.mxu0 0.0
    %3975 = vmatpush1.msra.mxu0 %v1413
    %3976 = vmatprep.subr.mxu0 0.0
    %3977 = vmatpush1.msra.mxu0 %v1414
    %3978 = vmatprep.subr.mxu0 0.0
    %3979 = vmatpush1.msra.mxu0 %v1415
    %3980 = vmatprep.subr.mxu0 0.0
    %3981 = vmatpush1.msra.mxu0 %v1416
    %3982 = vmatprep.subr.mxu0 0.0
    %3983 = vmatpush1.msra.mxu0 %v1417
    %3984 = vmatprep.subr.mxu0 0.0
    %3985 = vmatpush1.msra.mxu0 %v1418
    %3986 = vmatprep.subr.mxu0 0.0
    %3987 = vmatpush1.msra.mxu0 %v1419
    %3988 = vmatprep.subr.mxu0 0.0
    %3989 = vmatpush1.msra.mxu0 %v1420
    %3990 = vmatprep.subr.mxu0 0.0
    %3991 = vmatpush1.msra.mxu0 %v1421
    %3992 = vmatprep.subr.mxu0 0.0
    %3993 = vmatpush1.msra.mxu0 %v1422
    %3994 = vmatprep.subr.mxu0 0.0
    %3995 = vmatpush1.msra.mxu0 %v1423
    %3996 = vmatprep.subr.mxu0 0.0
    %3997 = vmatpush1.msra.mxu0 %v1424
    %3998 = vmatprep.subr.mxu0 0.0
    %3999 = vmatpush1.msra.mxu0 %v1425
    %4000 = vmatprep.subr.mxu0 0.0
    %4001 = vmatpush1.msra.mxu0 %v1426
    %4002 = vmatprep.subr.mxu0 0.0
    %4003 = vmatpush1.msra.mxu0 %v1427
    %4004 = vmatprep.subr.mxu0 0.0
    %4005 = vmatpush1.msra.mxu0 %v1428
    %4006 = vmatprep.subr.mxu0 0.0
    %4007 = vmatpush1.msra.mxu0 %v1429
    %4008 = vmatprep.subr.mxu0 0.0
    %4009 = vmatpush1.msra.mxu0 %v1430
    %4010 = vmatprep.subr.mxu0 0.0
    %4011 = vmatpush1.msra.mxu0 %v1431
    %4012 = vmatprep.subr.mxu0 0.0
    %4013 = vmatpush1.msra.mxu0 %v1432
    %4014 = vmatprep.subr.mxu0 0.0
    %4015 = vmatpush1.msra.mxu0 %v1433
    %4016 = vmatprep.subr.mxu0 0.0
    %4017 = vmatpush1.msra.mxu0 %v1434
    %4018 = vmatprep.mubr.f32.mxu0 %v3743
    %4019 = vmatmul.mubr.f32.gmra.mrb[0].mxu0 %v3734
    %v4020 = vpop.f32.mrb[0].mxu0
    %v4021 = vadd.f32 %v3951, %v4020
    %v4022 = vpop.f32.mrb[0].mxu0
    %4023 = vdwg.mxu0
    %v4024 = vmul.f32 %v3881, 0.001953125
    %v4025 = vmul.f32 %v4021, 0.001953125
    %v4026 = vmul.f32 %v4024, %v4024
    %v4027 = vsub.f32 %v4025, %v4026
    %v4028 = vmul.f32 %v3653, %v3654
    %v4029 = vmul.f32 %v3653, %v3653
    %v4030 = vmul.f32 %v4029, %v4027
    %v4031 = vadd.f32 %v4030, 1e-05
    %v4032 = vrsqrt.pop %v4031
    %v4033 = vmul.f32 %v4028, %v4032
    %v4034 = vmul.f32 %v4024, %v4033
    %v4035 = vsub.f32 %v3655, %v4034
    %vm4036 = vcmask 261120
    %v4038 = vsel %vm4036, %v4033, 0
    %4040 = vmatprep.subr.mxu0 %v1519
    %4041 = vmatpush1.msra.mxu0 %v1518
    %4042 = vmatprep.subr.mxu0 %v1523
    %4043 = vmatpush1.msra.mxu0 %v1522
    %4044 = vmatprep.subr.mxu0 %v1527
    %4045 = vmatpush1.msra.mxu0 %v1526
    %4046 = vmatprep.subr.mxu0 %v1531
    %4047 = vmatpush1.msra.mxu0 %v1530
    %4048 = vmatprep.subr.mxu0 0.0
    %4049 = vmatpush1.msra.mxu0 0.0
    %4050 = vmatprep.subr.mxu0 0.0
    %4051 = vmatpush1.msra.mxu0 0.0
    %4052 = vmatprep.subr.mxu0 0.0
    %4053 = vmatpush1.msra.mxu0 0.0
    %4054 = vmatprep.subr.mxu0 0.0
    %4055 = vmatpush1.msra.mxu0 0.0
    %4056 = vmatprep.subr.mxu0 0.0
    %4057 = vmatpush1.msra.mxu0 0.0
    %4058 = vmatprep.subr.mxu0 0.0
    %4059 = vmatpush1.msra.mxu0 0.0
    %4060 = vmatprep.subr.mxu0 0.0
    %4061 = vmatpush1.msra.mxu0 0.0
    %4062 = vmatprep.subr.mxu0 0.0
    %4063 = vmatpush1.msra.mxu0 0.0
    %4064 = vmatprep.subr.mxu0 0.0
    %4065 = vmatpush1.msra.mxu0 0.0
    %4066 = vmatprep.subr.mxu0 0.0
    %4067 = vmatpush1.msra.mxu0 0.0
    %4068 = vmatprep.subr.mxu0 0.0
    %4069 = vmatpush1.msra.mxu0 0.0
    %4070 = vmatprep.subr.mxu0 0.0
    %4071 = vmatpush1.msra.mxu0 0.0
    %4072 = vmatprep.subr.mxu0 0.0
    %4073 = vmatpush1.msra.mxu0 0.0
    %4074 = vmatprep.subr.mxu0 0.0
    %4075 = vmatpush1.msra.mxu0 0.0
    %4076 = vmatprep.subr.mxu0 0.0
    %4077 = vmatpush1.msra.mxu0 0.0
    %4078 = vmatprep.subr.mxu0 0.0
    %4079 = vmatpush1.msra.mxu0 0.0
    %4080 = vmatprep.subr.mxu0 0.0
    %4081 = vmatpush1.msra.mxu0 0.0
    %4082 = vmatprep.subr.mxu0 0.0
    %4083 = vmatpush1.msra.mxu0 0.0
    %4084 = vmatprep.subr.mxu0 0.0
    %4085 = vmatpush1.msra.mxu0 0.0
    %4086 = vmatprep.subr.mxu0 0.0
    %4087 = vmatpush1.msra.mxu0 0.0
    %4088 = vmatprep.subr.mxu0 0.0
    %4089 = vmatpush1.msra.mxu0 0.0
    %4090 = vmatprep.subr.mxu0 0.0
    %4091 = vmatpush1.msra.mxu0 0.0
    %4092 = vmatprep.subr.mxu0 0.0
    %4093 = vmatpush1.msra.mxu0 0.0
    %4094 = vmatprep.subr.mxu0 0.0
    %4095 = vmatpush1.msra.mxu0 0.0
    %4096 = vmatprep.subr.mxu0 0.0
    %4097 = vmatpush1.msra.mxu0 0.0
    %4098 = vmatprep.subr.mxu0 0.0
    %4099 = vmatpush1.msra.mxu0 0.0
    %4100 = vmatprep.subr.mxu0 0.0
    %4101 = vmatpush1.msra.mxu0 0.0
    %4102 = vmatprep.subr.mxu0 0.0
    %4103 = vmatpush1.msra.mxu0 0.0
    %4104 = vmatprep.mubr.f32.mxu0 0.0
    %4105 = vmatmul.mubr.f32.gmra.mrb[0].mxu0 %v4038
    %v4106 = vpop.f32.mrb[0].mxu0
    %v4107 = vadd.f32 0.0, %v4106
    %v4108 = vpop.f32.mrb[0].mxu0
    %v4109 = vadd.f32 0.0, %v4108
    %4110 = vdwg.mxu0
    %4111 = vmatprep.subr.mxu0 %v1521
    %4112 = vmatpush1.msra.mxu0 %v1520
    %4113 = vmatprep.subr.mxu0 %v1525
    %4114 = vmatpush1.msra.mxu0 %v1524
    %4115 = vmatprep.subr.mxu0 %v1529
    %4116 = vmatpush1.msra.mxu0 %v1528
    %4117 = vmatprep.subr.mxu0 %v1533
    %4118 = vmatpush1.msra.mxu0 %v1532
    %4119 = vmatprep.subr.mxu0 0.0
    %4120 = vmatpush1.msra.mxu0 0.0
    %4121 = vmatprep.subr.mxu0 0.0
    %4122 = vmatpush1.msra.mxu0 0.0
    %4123 = vmatprep.subr.mxu0 0.0
    %4124 = vmatpush1.msra.mxu0 0.0
    %4125 = vmatprep.subr.mxu0 0.0
    %4126 = vmatpush1.msra.mxu0 0.0
    %4127 = vmatprep.subr.mxu0 0.0
    %4128 = vmatpush1.msra.mxu0 0.0
    %4129 = vmatprep.subr.mxu0 0.0
    %4130 = vmatpush1.msra.mxu0 0.0
    %4131 = vmatprep.subr.mxu0 0.0
    %4132 = vmatpush1.msra.mxu0 0.0
    %4133 = vmatprep.subr.mxu0 0.0
    %4134 = vmatpush1.msra.mxu0 0.0
    %4135 = vmatprep.subr.mxu0 0.0
    %4136 = vmatpush1.msra.mxu0 0.0
    %4137 = vmatprep.subr.mxu0 0.0
    %4138 = vmatpush1.msra.mxu0 0.0
    %4139 = vmatprep.subr.mxu0 0.0
    %4140 = vmatpush1.msra.mxu0 0.0
    %4141 = vmatprep.subr.mxu0 0.0
    %4142 = vmatpush1.msra.mxu0 0.0
    %4143 = vmatprep.subr.mxu0 0.0
    %4144 = vmatpush1.msra.mxu0 0.0
    %4145 = vmatprep.subr.mxu0 0.0
    %4146 = vmatpush1.msra.mxu0 0.0
    %4147 = vmatprep.subr.mxu0 0.0
    %4148 = vmatpush1.msra.mxu0 0.0
    %4149 = vmatprep.subr.mxu0 0.0
    %4150 = vmatpush1.msra.mxu0 0.0
    %4151 = vmatprep.subr.mxu0 0.0
    %4152 = vmatpush1.msra.mxu0 0.0
    %4153 = vmatprep.subr.mxu0 0.0
    %4154 = vmatpush1.msra.mxu0 0.0
    %4155 = vmatprep.subr.mxu0 0.0
    %4156 = vmatpush1.msra.mxu0 0.0
    %4157 = vmatprep.subr.mxu0 0.0
    %4158 = vmatpush1.msra.mxu0 0.0
    %4159 = vmatprep.subr.mxu0 0.0
    %4160 = vmatpush1.msra.mxu0 0.0
    %4161 = vmatprep.subr.mxu0 0.0
    %4162 = vmatpush1.msra.mxu0 0.0
    %4163 = vmatprep.subr.mxu0 0.0
    %4164 = vmatpush1.msra.mxu0 0.0
    %4165 = vmatprep.subr.mxu0 0.0
    %4166 = vmatpush1.msra.mxu0 0.0
    %4167 = vmatprep.subr.mxu0 0.0
    %4168 = vmatpush1.msra.mxu0 0.0
    %4169 = vmatprep.subr.mxu0 0.0
    %4170 = vmatpush1.msra.mxu0 0.0
    %4171 = vmatprep.subr.mxu0 0.0
    %4172 = vmatpush1.msra.mxu0 0.0
    %4173 = vmatprep.subr.mxu0 0.0
    %4174 = vmatpush1.msra.mxu0 0.0
    %4175 = vmatprep.mubr.f32.mxu0 0.0
    %4176 = vmatmul.mubr.f32.gmra.mrb[0].mxu0 %v4038
    %v4177 = vpop.f32.mrb[0].mxu0
    %v4178 = vadd.f32 0.0, %v4177
    %v4179 = vpop.f32.mrb[0].mxu0
    %v4180 = vadd.f32 0.0, %v4179
    %4181 = vdwg.mxu0
    %v4183 = vsel %vm4036, %v4035, 0
    %4185 = vmatprep.subr.mxu0 %v1519
    %4186 = vmatpush1.msra.mxu0 %v1518
    %4187 = vmatprep.subr.mxu0 %v1523
    %4188 = vmatpush1.msra.mxu0 %v1522
    %4189 = vmatprep.subr.mxu0 %v1527
    %4190 = vmatpush1.msra.mxu0 %v1526
    %4191 = vmatprep.subr.mxu0 %v1531
    %4192 = vmatpush1.msra.mxu0 %v1530
    %4193 = vmatprep.subr.mxu0 0.0
    %4194 = vmatpush1.msra.mxu0 0.0
    %4195 = vmatprep.subr.mxu0 0.0
    %4196 = vmatpush1.msra.mxu0 0.0
    %4197 = vmatprep.subr.mxu0 0.0
    %4198 = vmatpush1.msra.mxu0 0.0
    %4199 = vmatprep.subr.mxu0 0.0
    %4200 = vmatpush1.msra.mxu0 0.0
    %4201 = vmatprep.subr.mxu0 0.0
    %4202 = vmatpush1.msra.mxu0 0.0
    %4203 = vmatprep.subr.mxu0 0.0
    %4204 = vmatpush1.msra.mxu0 0.0
    %4205 = vmatprep.subr.mxu0 0.0
    %4206 = vmatpush1.msra.mxu0 0.0
    %4207 = vmatprep.subr.mxu0 0.0
    %4208 = vmatpush1.msra.mxu0 0.0
    %4209 = vmatprep.subr.mxu0 0.0
    %4210 = vmatpush1.msra.mxu0 0.0
    %4211 = vmatprep.subr.mxu0 0.0
    %4212 = vmatpush1.msra.mxu0 0.0
    %4213 = vmatprep.subr.mxu0 0.0
    %4214 = vmatpush1.msra.mxu0 0.0
    %4215 = vmatprep.subr.mxu0 0.0
    %4216 = vmatpush1.msra.mxu0 0.0
    %4217 = vmatprep.subr.mxu0 0.0
    %4218 = vmatpush1.msra.mxu0 0.0
    %4219 = vmatprep.subr.mxu0 0.0
    %4220 = vmatpush1.msra.mxu0 0.0
    %4221 = vmatprep.subr.mxu0 0.0
    %4222 = vmatpush1.msra.mxu0 0.0
    %4223 = vmatprep.subr.mxu0 0.0
    %4224 = vmatpush1.msra.mxu0 0.0
    %4225 = vmatprep.subr.mxu0 0.0
    %4226 = vmatpush1.msra.mxu0 0.0
    %4227 = vmatprep.subr.mxu0 0.0
    %4228 = vmatpush1.msra.mxu0 0.0
    %4229 = vmatprep.subr.mxu0 0.0
    %4230 = vmatpush1.msra.mxu0 0.0
    %4231 = vmatprep.subr.mxu0 0.0
    %4232 = vmatpush1.msra.mxu0 0.0
    %4233 = vmatprep.subr.mxu0 0.0
    %4234 = vmatpush1.msra.mxu0 0.0
    %4235 = vmatprep.subr.mxu0 0.0
    %4236 = vmatpush1.msra.mxu0 0.0
    %4237 = vmatprep.subr.mxu0 0.0
    %4238 = vmatpush1.msra.mxu0 0.0
    %4239 = vmatprep.subr.mxu0 0.0
    %4240 = vmatpush1.msra.mxu0 0.0
    %4241 = vmatprep.subr.mxu0 0.0
    %4242 = vmatpush1.msra.mxu0 0.0
    %4243 = vmatprep.subr.mxu0 0.0
    %4244 = vmatpush1.msra.mxu0 0.0
    %4245 = vmatprep.subr.mxu0 0.0
    %4246 = vmatpush1.msra.mxu0 0.0
    %4247 = vmatprep.subr.mxu0 0.0
    %4248 = vmatpush1.msra.mxu0 0.0
    %4249 = vmatprep.mubr.f32.mxu0 0.0
    %4250 = vmatmul.mubr.f32.gmra.mrb[0].mxu0 %v4183
    %v4251 = vpop.f32.mrb[0].mxu0
    %v4252 = vadd.f32 0.0, %v4251
    %v4253 = vpop.f32.mrb[0].mxu0
    %v4254 = vadd.f32 0.0, %v4253
    %4255 = vdwg.mxu0
    %4256 = vmatprep.subr.mxu0 %v1521
    %4257 = vmatpush1.msra.mxu0 %v1520
    %4258 = vmatprep.subr.mxu0 %v1525
    %4259 = vmatpush1.msra.mxu0 %v1524
    %4260 = vmatprep.subr.mxu0 %v1529
    %4261 = vmatpush1.msra.mxu0 %v1528
    %4262 = vmatprep.subr.mxu0 %v1533
    %4263 = vmatpush1.msra.mxu0 %v1532
    %4264 = vmatprep.subr.mxu0 0.0
    %4265 = vmatpush1.msra.mxu0 0.0
    %4266 = vmatprep.subr.mxu0 0.0
    %4267 = vmatpush1.msra.mxu0 0.0
    %4268 = vmatprep.subr.mxu0 0.0
    %4269 = vmatpush1.msra.mxu0 0.0
    %4270 = vmatprep.subr.mxu0 0.0
    %4271 = vmatpush1.msra.mxu0 0.0
    %4272 = vmatprep.subr.mxu0 0.0
    %4273 = vmatpush1.msra.mxu0 0.0
    %4274 = vmatprep.subr.mxu0 0.0
    %4275 = vmatpush1.msra.mxu0 0.0
    %4276 = vmatprep.subr.mxu0 0.0
    %4277 = vmatpush1.msra.mxu0 0.0
    %4278 = vmatprep.subr.mxu0 0.0
    %4279 = vmatpush1.msra.mxu0 0.0
    %4280 = vmatprep.subr.mxu0 0.0
    %4281 = vmatpush1.msra.mxu0 0.0
    %4282 = vmatprep.subr.mxu0 0.0
    %4283 = vmatpush1.msra.mxu0 0.0
    %4284 = vmatprep.subr.mxu0 0.0
    %4285 = vmatpush1.msra.mxu0 0.0
    %4286 = vmatprep.subr.mxu0 0.0
    %4287 = vmatpush1.msra.mxu0 0.0
    %4288 = vmatprep.subr.mxu0 0.0
    %4289 = vmatpush1.msra.mxu0 0.0
    %4290 = vmatprep.subr.mxu0 0.0
    %4291 = vmatpush1.msra.mxu0 0.0
    %4292 = vmatprep.subr.mxu0 0.0
    %4293 = vmatpush1.msra.mxu0 0.0
    %4294 = vmatprep.subr.mxu0 0.0
    %4295 = vmatpush1.msra.mxu0 0.0
    %4296 = vmatprep.subr.mxu0 0.0
    %4297 = vmatpush1.msra.mxu0 0.0
    %4298 = vmatprep.subr.mxu0 0.0
    %4299 = vmatpush1.msra.mxu0 0.0
    %4300 = vmatprep.subr.mxu0 0.0
    %4301 = vmatpush1.msra.mxu0 0.0
    %4302 = vmatprep.subr.mxu0 0.0
    %4303 = vmatpush1.msra.mxu0 0.0
    %4304 = vmatprep.subr.mxu0 0.0
    %4305 = vmatpush1.msra.mxu0 0.0
    %4306 = vmatprep.subr.mxu0 0.0
    %4307 = vmatpush1.msra.mxu0 0.0
    %4308 = vmatprep.subr.mxu0 0.0
    %4309 = vmatpush1.msra.mxu0 0.0
    %4310 = vmatprep.subr.mxu0 0.0
    %4311 = vmatpush1.msra.mxu0 0.0
    %4312 = vmatprep.subr.mxu0 0.0
    %4313 = vmatpush1.msra.mxu0 0.0
    %4314 = vmatprep.subr.mxu0 0.0
    %4315 = vmatpush1.msra.mxu0 0.0
    %4316 = vmatprep.subr.mxu0 0.0
    %4317 = vmatpush1.msra.mxu0 0.0
    %4318 = vmatprep.subr.mxu0 0.0
    %4319 = vmatpush1.msra.mxu0 0.0
    %4320 = vmatprep.mubr.f32.mxu0 0.0
    %4321 = vmatmul.mubr.f32.gmra.mrb[0].mxu0 %v4183
    %v4322 = vpop.f32.mrb[0].mxu0
    %v4323 = vadd.f32 0.0, %v4322
    %v4324 = vpop.f32.mrb[0].mxu0
    %v4325 = vadd.f32 0.0, %v4324
    %4326 = vdwg.mxu0
    %v4327 = vlaneseq
    %v4328 = vshrl.u32 %v4327, 7
    %v4329 = vsub.s32 0, %v4328
    %v4330 = vrot.slane %v4107, %v4329
    %v4331 = vlaneseq
    %v4332 = vshrl.u32 %v4331, 7
    %v4333 = vsub.s32 0, %v4332
    %v4334 = vrot.slane %v4109, %v4333
    %v4335 = vlaneseq
    %v4336 = vshrl.u32 %v4335, 7
    %v4337 = vsub.s32 0, %v4336
    %v4338 = vrot.slane %v4178, %v4337
    %v4339 = vlaneseq
    %v4340 = vshrl.u32 %v4339, 7
    %v4341 = vsub.s32 0, %v4340
    %v4342 = vrot.slane %v4180, %v4341
    %v4343 = vmul.f32 %v3582, %v4330
    %v4344 = vmul.f32 %v3584, %v4334
    %v4345 = vmul.f32 %v3635, %v4338
    %v4346 = vmul.f32 %v3637, %v4342
    %v4347 = vmul.f32 %v3586, %v4330
    %v4348 = vmul.f32 %v3588, %v4334
    %v4349 = vmul.f32 %v3639, %v4338
    %v4350 = vmul.f32 %v3641, %v4342
    %v4351 = vmul.f32 %v3592, %v4330
    %v4352 = vmul.f32 %v3594, %v4334
    %v4353 = vmul.f32 %v3645, %v4338
    %v4354 = vmul.f32 %v3647, %v4342
    %v4355 = vmul.f32 %v3596, %v4330
    %v4356 = vmul.f32 %v3598, %v4334
    %v4357 = vmul.f32 %v3649, %v4338
    %v4358 = vmul.f32 %v3651, %v4342
    %v4359 = vlaneseq
    %v4360 = vshrl.u32 %v4359, 7
    %v4361 = vsub.s32 0, %v4360
    %v4362 = vrot.slane %v4252, %v4361
    %v4363 = vlaneseq
    %v4364 = vshrl.u32 %v4363, 7
    %v4365 = vsub.s32 0, %v4364
    %v4366 = vrot.slane %v4254, %v4365
    %v4367 = vlaneseq
    %v4368 = vshrl.u32 %v4367, 7
    %v4369 = vsub.s32 0, %v4368
    %v4370 = vrot.slane %v4323, %v4369
    %v4371 = vlaneseq
    %v4372 = vshrl.u32 %v4371, 7
    %v4373 = vsub.s32 0, %v4372
    %v4374 = vrot.slane %v4325, %v4373
    %v4375 = vadd.f32 %v4343, %v4362
    %v4376 = vadd.f32 %v4344, %v4366
    %v4377 = vadd.f32 %v4345, %v4370
    %v4378 = vadd.f32 %v4346, %v4374
    %v4379 = vadd.f32 %v4347, %v4362
    %v4380 = vadd.f32 %v4348, %v4366
    %v4381 = vadd.f32 %v4349, %v4370
    %v4382 = vadd.f32 %v4350, %v4374
    %v4383 = vadd.f32 %v4351, %v4362
    %v4384 = vadd.f32 %v4352, %v4366
    %v4385 = vadd.f32 %v4353, %v4370
    %v4386 = vadd.f32 %v4354, %v4374
    %v4387 = vadd.f32 %v4355, %v4362
    %v4388 = vadd.f32 %v4356, %v4366
    %v4389 = vadd.f32 %v4357, %v4370
    %v4390 = vadd.f32 %v4358, %v4374
    %v4391 = vadd.f32 %v4375, %v1534
    %v4392 = vadd.f32 %v4376, %v1535
    %v4393 = vadd.f32 %v4377, %v1536
    %v4394 = vadd.f32 %v4378, %v1537
    %v4395 = vadd.f32 %v4379, %v1538
    %v4396 = vadd.f32 %v4380, %v1539
    %v4397 = vadd.f32 %v4381, %v1540
    %v4398 = vadd.f32 %v4382, %v1541
    %v4399 = vadd.f32 %v4383, %v1542
    %v4400 = vadd.f32 %v4384, %v1543
    %v4401 = vadd.f32 %v4385, %v1544
    %v4402 = vadd.f32 %v4386, %v1545
    %v4403 = vadd.f32 %v4387, %v1546
    %v4404 = vadd.f32 %v4388, %v1547
    %v4405 = vadd.f32 %v4389, %v1548
    %v4406 = vadd.f32 %v4390, %v1549
    %v4407 = vld [vmem:[%s23] sm:$0xf]
    %v4409 = vlaneseq
    %v4410 = vshrl.u32 %v4409, 7
    %v4411 = vsub.s32 0, %v4410
    %v4412 = vrot.slane %v4407, %v4411
    %v4413 = vlaneseq
    %v4414 = vshrl.u32 %v4413, 7
    %v4415 = vsub.s32 1, %v4414
    %v4416 = vrot.slane %v4407, %v4415
    %v4417 = vlaneseq
    %v4418 = vshrl.u32 %v4417, 7
    %v4419 = vsub.s32 2, %v4418
    %v4420 = vrot.slane %v4407, %v4419
    %v4421 = vlaneseq
    %v4422 = vshrl.u32 %v4421, 7
    %v4423 = vsub.s32 3, %v4422
    %v4424 = vrot.slane %v4407, %v4423
    %v4429 = vadd.f32 %v4391, %v4412
    %v4430 = vadd.f32 %v4392, %v4416
    %v4431 = vadd.f32 %v4393, %v4420
    %v4432 = vadd.f32 %v4394, %v4424
    %v4433 = vadd.f32 %v4395, %v4412
    %v4434 = vadd.f32 %v4396, %v4416
    %v4435 = vadd.f32 %v4397, %v4420
    %v4436 = vadd.f32 %v4398, %v4424
    %v4437 = vadd.f32 %v4399, %v4412
    %v4438 = vadd.f32 %v4400, %v4416
    %v4439 = vadd.f32 %v4401, %v4420
    %v4440 = vadd.f32 %v4402, %v4424
    %v4441 = vadd.f32 %v4403, %v4412
    %v4442 = vadd.f32 %v4404, %v4416
    %v4443 = vadd.f32 %v4405, %v4420
    %v4444 = vadd.f32 %v4406, %v4424
    %v4445 = vld [vmem:[%s24] sm:$0xf]
    %vm4446 = vcmp.gt.f32.partialorder %v4429, 0.0
    %vm4447 = vcmp.gt.f32.partialorder %v4430, 0.0
    %vm4448 = vcmp.gt.f32.partialorder %v4431, 0.0
    %vm4449 = vcmp.gt.f32.partialorder %v4432, 0.0
    %vm4450 = vcmp.gt.f32.partialorder %v4433, 0.0
    %vm4451 = vcmp.gt.f32.partialorder %v4434, 0.0
    %vm4452 = vcmp.gt.f32.partialorder %v4435, 0.0
    %vm4453 = vcmp.gt.f32.partialorder %v4436, 0.0
    %vm4454 = vcmp.gt.f32.partialorder %v4437, 0.0
    %vm4455 = vcmp.gt.f32.partialorder %v4438, 0.0
    %vm4456 = vcmp.gt.f32.partialorder %v4439, 0.0
    %vm4457 = vcmp.gt.f32.partialorder %v4440, 0.0
    %vm4458 = vcmp.gt.f32.partialorder %v4441, 0.0
    %vm4459 = vcmp.gt.f32.partialorder %v4442, 0.0
    %vm4460 = vcmp.gt.f32.partialorder %v4443, 0.0
    %vm4461 = vcmp.gt.f32.partialorder %v4444, 0.0
    %v4463 = vlaneseq
    %v4464 = vshrl.u32 %v4463, 7
    %v4465 = vsub.s32 0, %v4464
    %v4466 = vrot.slane %v4445, %v4465
    %v4467 = vlaneseq
    %v4468 = vshrl.u32 %v4467, 7
    %v4469 = vsub.s32 1, %v4468
    %v4470 = vrot.slane %v4445, %v4469
    %v4471 = vlaneseq
    %v4472 = vshrl.u32 %v4471, 7
    %v4473 = vsub.s32 2, %v4472
    %v4474 = vrot.slane %v4445, %v4473
    %v4475 = vlaneseq
    %v4476 = vshrl.u32 %v4475, 7
    %v4477 = vsub.s32 3, %v4476
    %v4478 = vrot.slane %v4445, %v4477
    %v4483 = vmul.f32 %v4466, %v4429
    %v4484 = vmul.f32 %v4470, %v4430
    %v4485 = vmul.f32 %v4474, %v4431
    %v4486 = vmul.f32 %v4478, %v4432
    %v4487 = vmul.f32 %v4466, %v4433
    %v4488 = vmul.f32 %v4470, %v4434
    %v4489 = vmul.f32 %v4474, %v4435
    %v4490 = vmul.f32 %v4478, %v4436
    %v4491 = vmul.f32 %v4466, %v4437
    %v4492 = vmul.f32 %v4470, %v4438
    %v4493 = vmul.f32 %v4474, %v4439
    %v4494 = vmul.f32 %v4478, %v4440
    %v4495 = vmul.f32 %v4466, %v4441
    %v4496 = vmul.f32 %v4470, %v4442
    %v4497 = vmul.f32 %v4474, %v4443
    %v4498 = vmul.f32 %v4478, %v4444
    %v4499 = vsel %vm4446, %v4429, %v4483
    %v4500 = vsel %vm4447, %v4430, %v4484
    %v4501 = vsel %vm4448, %v4431, %v4485
    %v4502 = vsel %vm4449, %v4432, %v4486
    %v4503 = vsel %vm4450, %v4433, %v4487
    %v4504 = vsel %vm4451, %v4434, %v4488
    %v4505 = vsel %vm4452, %v4435, %v4489
    %v4506 = vsel %vm4453, %v4436, %v4490
    %v4507 = vsel %vm4454, %v4437, %v4491
    %v4508 = vsel %vm4455, %v4438, %v4492
    %v4509 = vsel %vm4456, %v4439, %v4493
    %v4510 = vsel %vm4457, %v4440, %v4494
    %v4511 = vsel %vm4458, %v4441, %v4495
    %v4512 = vsel %vm4459, %v4442, %v4496
    %v4513 = vsel %vm4460, %v4443, %v4497
    %v4514 = vsel %vm4461, %v4444, %v4498
    %v4515 = vld [vmem:[%s25] sm:$0xf]
    %v4517 = vlaneseq
    %v4518 = vshrl.u32 %v4517, 7
    %v4519 = vsub.s32 0, %v4518
    %v4520 = vrot.slane %v4515, %v4519
    %v4521 = vlaneseq
    %v4522 = vshrl.u32 %v4521, 7
    %v4523 = vsub.s32 1, %v4522
    %v4524 = vrot.slane %v4515, %v4523
    %v4525 = vlaneseq
    %v4526 = vshrl.u32 %v4525, 7
    %v4527 = vsub.s32 2, %v4526
    %v4528 = vrot.slane %v4515, %v4527
    %v4529 = vlaneseq
    %v4530 = vshrl.u32 %v4529, 7
    %v4531 = vsub.s32 3, %v4530
    %v4532 = vrot.slane %v4515, %v4531
    %v4537 = vadd.f32 %v4499, %v4520
    %v4538 = vadd.f32 %v4500, %v4524
    %v4539 = vadd.f32 %v4501, %v4528
    %v4540 = vadd.f32 %v4502, %v4532
    %v4541 = vadd.f32 %v4503, %v4520
    %v4542 = vadd.f32 %v4504, %v4524
    %v4543 = vadd.f32 %v4505, %v4528
    %v4544 = vadd.f32 %v4506, %v4532
    %v4545 = vadd.f32 %v4507, %v4520
    %v4546 = vadd.f32 %v4508, %v4524
    %v4547 = vadd.f32 %v4509, %v4528
    %v4548 = vadd.f32 %v4510, %v4532
    %v4549 = vadd.f32 %v4511, %v4520
    %v4550 = vadd.f32 %v4512, %v4524
    %v4551 = vadd.f32 %v4513, %v4528
    %v4552 = vadd.f32 %v4514, %v4532
    %4553 = vst [vmem:[#allocation12] sm:$0xff] %v4537
    %4554 = vst [vmem:[#allocation12 + $0x8] sm:$0xff] %v4538
    %4555 = vst [vmem:[#allocation12 + $0x10] sm:$0xff] %v4539
    %4556 = vst [vmem:[#allocation12 + $0x18] sm:$0xff] %v4540
    %4557 = vst [vmem:[#allocation12 + $0x20] sm:$0xff] %v4541
    %4558 = vst [vmem:[#allocation12 + $0x28] sm:$0xff] %v4542
    %4559 = vst [vmem:[#allocation12 + $0x30] sm:$0xff] %v4543
    %4560 = vst [vmem:[#allocation12 + $0x38] sm:$0xff] %v4544
    %4561 = vst [vmem:[#allocation12 + $0x40] sm:$0xff] %v4545
    %4562 = vst [vmem:[#allocation12 + $0x48] sm:$0xff] %v4546
    %4563 = vst [vmem:[#allocation12 + $0x50] sm:$0xff] %v4547
    %4564 = vst [vmem:[#allocation12 + $0x58] sm:$0xff] %v4548
    %4565 = vst [vmem:[#allocation12 + $0x60] sm:$0xff] %v4549
    %4566 = vst [vmem:[#allocation12 + $0x68] sm:$0xff] %v4550
    %4567 = vst [vmem:[#allocation12 + $0x70] sm:$0xff] %v4551
    %4568 = vst [vmem:[#allocation12 + $0x78] sm:$0xff] %v4552
    // Predicated region
    $region126: #{tpu_custom_call.1} parent=1 // pred_check
      _
    $region127: #{tpu_custom_call.1} parent=1 // pred_check_branch
      %4570 = sbr.rel (0) target = $region129
    $region128: #{tpu_custom_call.1} parent=1 // pred_region
      %s4572 = ssub.s32 2048, 2048
      %4573 = vsyncadd [#allocation4], %s4572
      %s4574 = sshll.u32 [#allocation12], 4
      %s4575 = int_to_ptr.vmem [resolvable:$true] %s4574
      %4580 = dma.vmem_to_hbm [thread:$0]  %s4575, 2048, %s26, [#allocation4], 512, 512, 32
    $region129: #{tpu_custom_call.1} parent=1 // pred_fallthru
      _
    // Predicated region
    $region130: #{tpu_custom_call.1} parent=1 // pred_check
      _
    $region131: #{tpu_custom_call.1} parent=1 // pred_check_branch
      %4582 = sbr.rel (0) target = $region133
    $region132: #{tpu_custom_call.1} parent=1 // pred_region
      %4583 = dma.done [#allocation4], 2048
    $region133: #{tpu_custom_call.1} parent=1 // pred_fallthru
      _
    %4584 = vsyncpa [#allocation3], 1
    %4585 = vsyncpa [#allocation8], 1
    %4586 = vsyncpa [#allocation11], 1
    %4587 = vsyncpa [#allocation4], 1
    %4588 = vsyncpa [#allocation5], 1

</llo_original>
